<compile_context>
chip_gen: v7x
topology: tpu7x:2x2x1
jax: 0.10.0
libtpu: 0.0.40
codegen_flags: <defaults>
</compile_context>

<pallas_src>
import functools

import jax
import jax.numpy as jnp
from jax.experimental import pallas as pl
from jax.experimental.pallas import tpu as pltpu


# ----------------------------- kernel ---------------------------------------


def _elu(x):
    return jnp.where(x > 0.0, x, jnp.exp(jnp.minimum(x, 0.0)) - 1.0)


def _attend(s_dst_col, s_src_row, neg_mask, hh_bf):
    """Masked softmax over sources, normalization folded AFTER the PV matmul.

    s_dst_col: (T, 1) f32, s_src_row: (1, T) f32, neg_mask: (T, T) f32 additive
    mask (0 on edges, -1e30 elsewhere), hh_bf: (T, F) bf16 transformed feats.
    Returns softmax(e) @ hh as (T, F) f32.
    """
    e = s_dst_col + s_src_row                     # (T, T) raw logits
    e = jnp.maximum(e, 0.2 * e)                   # LeakyReLU(0.2): mul + max
    e = e + neg_mask                              # mask non-edges
    m = jnp.max(e, axis=-1, keepdims=True)
    p = jnp.exp(e - m)
    denom = jnp.maximum(jnp.sum(p, axis=-1, keepdims=True), 1e-20)
    out = jnp.dot(p.astype(jnp.bfloat16), hh_bf, preferred_element_type=jnp.float32)
    # Scale the (T, F) output rows, not the (T, T) score matrix.
    return out * pl.reciprocal(denom, approx=True)


def _jet_gat_kernel(x_ref, adj_ref, w1_ref, a1_ref, b1_ref,
                    w2_ref, a2_ref, b2_ref,
                    pool_ref, wlin_ref, blin_ref,
                    o_ref, *, heads, hidden):
    """Fused JetGAT forward for one block of graphs (T nodes, G graphs).

    x:    (T, F_pad)             bf16  node features (K padded to 8)
    adj:  (T, T)                 int8  dense adjacency block, self-loops included
    w1:   (F_pad, heads*hidden)  bf16
    a1:   (heads*hidden, 2*heads) bf16 block-diag attn proj (cols [0:H]=src, [H:2H]=dst)
    b1:   (1, heads*hidden)      f32
    w2:   (heads*hidden, hidden) bf16
    a2:   (hidden, 2)            bf16  (col 0 = src, col 1 = dst)
    b2:   (1, hidden)            f32
    pool: (G, T)                 bf16  normalized graph-membership block
    wlin: (hidden, 2)            bf16
    blin: (1, 2)                 f32
    out:  (G, 2)                 f32
    """
    f32, bf16 = jnp.float32, jnp.bfloat16
    hd = heads * hidden

    # Additive attention mask for this block, built once from int8 and shared
    # by both layers / all heads: 0 on edges, -1e30 on non-edges.
    neg_mask = (adj_ref[...].astype(f32) - 1.0) * 1e30                      # (T, T)

    # ---------------- layer 1: GATConv(F_in -> hidden, heads) + ELU ----------
    hh1 = jnp.dot(x_ref[...], w1_ref[...], preferred_element_type=f32)      # (T, H*D)
    hh1_bf = hh1.astype(bf16)
    s1 = jnp.dot(hh1_bf, a1_ref[...], preferred_element_type=f32)           # (T, 2H)
    s1_t = jnp.transpose(s1)                                                # (2H, T)

    lane = jax.lax.broadcasted_iota(jnp.int32, (1, hd), 1)
    h1 = None
    for h in range(heads):  # static tiny head count -> unrolled at trace time
        head_sel = jnp.logical_and(lane >= h * hidden, lane < (h + 1) * hidden)
        hh_h = jnp.where(head_sel, hh1_bf, jnp.zeros_like(hh1_bf))          # (T, H*D)
        contrib = _attend(s1[:, heads + h:heads + h + 1],                   # dst col
                          s1_t[h:h + 1, :],                                 # src row
                          neg_mask, hh_h)                                   # (T, H*D)
        h1 = contrib if h1 is None else h1 + contrib                        # head concat
    h1 = _elu(h1 + b1_ref[...])                                             # (T, H*D)

    # ---------------- layer 2: GATConv(H*D -> hidden, 1 head) + ELU ----------
    hh2 = jnp.dot(h1.astype(bf16), w2_ref[...], preferred_element_type=f32)  # (T, D)
    hh2_bf = hh2.astype(bf16)
    s2 = jnp.dot(hh2_bf, a2_ref[...], preferred_element_type=f32)            # (T, 2)
    s2_t = jnp.transpose(s2)                                                 # (2, T)
    h2 = _elu(_attend(s2[:, 1:2], s2_t[0:1, :], neg_mask, hh2_bf)
              + b2_ref[...])                                                 # (T, D)

    # ---------------- global mean pool (matmul) + Linear ----------------------
    pooled = jnp.dot(pool_ref[...], h2.astype(bf16),
                     preferred_element_type=f32)                             # (G, D)
    o_ref[...] = (jnp.dot(pooled.astype(bf16), wlin_ref[...],
                          preferred_element_type=f32) + blin_ref[...])       # (G, 2)


# ----------------------------- wrapper ---------------------------------------


def jet_gat_forward(x, adj_i8, batch, params, *, hidden_dim, heads,
                    nodes_per_block, graphs_per_block):
    """Full JetGAT forward.

    `adj_i8` is an int8 dense adjacency (self-loops included).  Graphs must be
    laid out block-contiguously: block i owns graphs [i*G, (i+1)*G) and nodes
    [i*T, (i+1)*T), so adjacency and pool matrices are block-diagonal and each
    grid step only touches its diagonal block.
    """
    n, f_in = x.shape
    f_pad = ((f_in + 7) // 8) * 8  # pad K=6 contraction dim to a sublane multiple
    assert n % nodes_per_block == 0
    num_blocks = n // nodes_per_block
    n_graphs = int(batch.max()) + 1
    assert n_graphs == num_blocks * graphs_per_block

    hd = heads * hidden_dim

    # bf16 MXU operands (softmax / bias / activation math stays f32 in-kernel).
    x_p = jnp.zeros((n, f_pad), jnp.bfloat16).at[:, :f_in].set(x.astype(jnp.bfloat16))
    w1 = (jnp.zeros((f_pad, hd), jnp.float32)
          .at[:f_in, :].set(params["w1"]).astype(jnp.bfloat16))

    # Block-diagonal attention projection: cols [0:H] give src scores, [H:2H] dst.
    a1 = jnp.zeros((hd, 2 * heads), jnp.float32)
    for h in range(heads):
        a1 = a1.at[h * hidden_dim:(h + 1) * hidden_dim, h].set(params["a1_src"][h])
        a1 = a1.at[h * hidden_dim:(h + 1) * hidden_dim, heads + h].set(params["a1_dst"][h])
    a1 = a1.astype(jnp.bfloat16)

    a2 = jnp.stack([params["a2_src"][0], params["a2_dst"][0]], axis=1).astype(jnp.bfloat16)
    w2 = params["w2"].astype(jnp.bfloat16)
    wlin = params["w_lin"].astype(jnp.bfloat16)

    # Normalized graph-membership matrix so mean-pool is a single matmul.
    one_hot = (batch[None, :] == jnp.arange(n_graphs)[:, None]).astype(jnp.float32)
    pool_mat = (one_hot / jnp.sum(one_hot, axis=1, keepdims=True)).astype(jnp.bfloat16)

    tn, gb = nodes_per_block, graphs_per_block
    const2 = lambda i: (0, 0)  # weights: same block every step -> stay resident
    in_specs = [
        pl.BlockSpec((tn, f_pad), lambda i: (i, 0)),             # x node block
        pl.BlockSpec((tn, tn), lambda i: (i, i)),                # adj diagonal block
        pl.BlockSpec((f_pad, hd), const2),                       # w1
        pl.BlockSpec((hd, 2 * heads), const2),                   # a1
        pl.BlockSpec((1, hd), const2),                           # b1
        pl.BlockSpec((hd, hidden_dim), const2),                  # w2
        pl.BlockSpec((hidden_dim, 2), const2),                   # a2
        pl.BlockSpec((1, hidden_dim), const2),                   # b2
        pl.BlockSpec((gb, tn), lambda i: (i, i)),                # pool diagonal block
        pl.BlockSpec((hidden_dim, 2), const2),                   # w_lin
        pl.BlockSpec((1, 2), const2),                            # b_lin
    ]
    out_spec = pl.BlockSpec((gb, 2), lambda i: (i, 0))

    args = (x_p, adj_i8, w1, a1, params["b1"], w2, a2, params["b2"],
            pool_mat, wlin, params["b_lin"])

    # Advisory cost hint for the XLA scheduler.
    flops_blk = 2 * (tn * f_pad * hd + tn * hd * 2 * heads
                     + heads * tn * tn * hd + tn * hd * hidden_dim
                     + tn * hidden_dim * 2 + tn * tn * hidden_dim
                     + gb * tn * hidden_dim + gb * hidden_dim * 2)
    trans_blk = (heads + 1) * tn * tn + tn * (hd + hidden_dim)
    bytes_acc = (sum(int(a.size) * a.dtype.itemsize for a in args)
                 + n_graphs * 2 * 4)

    kernel = functools.partial(_jet_gat_kernel, heads=heads, hidden=hidden_dim)
    return pl.pallas_call(
        kernel,
        grid=(num_blocks,),
        in_specs=in_specs,
        out_specs=out_spec,
        out_shape=jax.ShapeDtypeStruct((n_graphs, 2), jnp.float32),
        compiler_params=pltpu.CompilerParams(
            dimension_semantics=("parallel",),           # megacore sharding on v7x
            vmem_limit_bytes=32 * 1024 * 1024),
        cost_estimate=pl.CostEstimate(
            flops=int(flops_blk * num_blocks),
            transcendentals=int(trans_blk * num_blocks),
            bytes_accessed=int(bytes_acc)),
    )(*args)


# ----------------------------- setup / main -----------------------------------


def init_params(key, input_dim, hidden_dim, heads):
    ks = jax.random.split(key, 8)

    def glorot(k, shape):
        fan_in, fan_out = shape[0], shape[-1]
        lim = (6.0 / (fan_in + fan_out)) ** 0.5
        return jax.random.uniform(k, shape, jnp.float32, -lim, lim)

    return {
        # gat1: in=input_dim, out=hidden_dim, heads=heads, concat=True
        "w1": glorot(ks[0], (input_dim, heads * hidden_dim)),
        "a1_src": glorot(ks[1], (heads, hidden_dim)),
        "a1_dst": glorot(ks[2], (heads, hidden_dim)),
        "b1": jnp.zeros((1, heads * hidden_dim), jnp.float32),
        # gat2: in=heads*hidden_dim, out=hidden_dim, heads=1
        "w2": glorot(ks[3], (heads * hidden_dim, hidden_dim)),
        "a2_src": glorot(ks[4], (1, hidden_dim)),
        "a2_dst": glorot(ks[5], (1, hidden_dim)),
        "b2": jnp.zeros((1, hidden_dim), jnp.float32),
        # lin: hidden_dim -> 2
        "w_lin": glorot(ks[6], (hidden_dim, 2)),
        "b_lin": jnp.zeros((1, 2), jnp.float32),
    }


def build_dense_adj(edge_index, num_nodes):
    """int8 adj[dst, src] = 1 for every edge src->dst, plus self-loops (PyG default)."""
    src, dst = edge_index[0], edge_index[1]
    adj = jnp.zeros((num_nodes, num_nodes), jnp.int8)
    adj = adj.at[dst, src].set(1)
    adj = jnp.maximum(adj, jnp.eye(num_nodes, dtype=jnp.int8))
    return adj


if __name__ == "__main__":
    INPUT_DIM = 6
    HIDDEN_DIM = 64            # PyTorch module default; heads*hidden = 128 lanes
    HEADS = 2
    NODES_PER_GRAPH = 8
    GRAPHS_PER_BLOCK = 16      # 16 graphs x 8 nodes = 128-node MXU-aligned tile
    NUM_BLOCKS = 2             # 2 parallel grid steps (both v7x TensorCores busy)
    N_GRAPHS = GRAPHS_PER_BLOCK * NUM_BLOCKS          # 32 graphs
    N = NODES_PER_GRAPH * N_GRAPHS                    # 256 nodes

    key = jax.random.PRNGKey(0)
    k_x, k_p = jax.random.split(key)

    # Node features (N, 6) float32.
    x = jax.random.normal(k_x, (N, INPUT_DIM), jnp.float32)

    # Independent 8-node bidirectional ring graphs, laid out block-contiguously.
    srcs, dsts = [], []
    for g in range(N_GRAPHS):
        base = g * NODES_PER_GRAPH
        for i in range(NODES_PER_GRAPH):
            a = base + i
            b = base + (i + 1) % NODES_PER_GRAPH
            srcs += [a, b]
            dsts += [b, a]
    edge_index = jnp.array([srcs, dsts], dtype=jnp.int32)      # (2, E)
    batch = jnp.repeat(jnp.arange(N_GRAPHS, dtype=jnp.int32), NODES_PER_GRAPH)

    adj = build_dense_adj(edge_index, N)
    params = init_params(k_p, INPUT_DIM, HIDDEN_DIM, HEADS)

    out = jet_gat_forward(
        x, adj, batch, params,
        hidden_dim=HIDDEN_DIM, heads=HEADS,
        nodes_per_block=GRAPHS_PER_BLOCK * NODES_PER_GRAPH,
        graphs_per_block=GRAPHS_PER_BLOCK)
    jax.block_until_ready(out)
    assert out.shape == (N_GRAPHS, 2) and out.dtype == jnp.float32
    assert bool(jnp.all(jnp.isfinite(out)))
    print("KERNEL_OK")
</pallas_src>

<mosaic_0001>
module attributes {stable_mosaic.version = 11 : i64} {
  func.func @_jet_gat_kernel(%arg0: i32, %arg1: memref<128x8xbf16, #tpu.memory_space<vmem>>, %arg2: memref<128x128xi8, #tpu.memory_space<vmem>>, %arg3: memref<8x128xbf16, #tpu.memory_space<vmem>>, %arg4: memref<128x4xbf16, #tpu.memory_space<vmem>>, %arg5: memref<1x128xf32, #tpu.memory_space<vmem>>, %arg6: memref<128x64xbf16, #tpu.memory_space<vmem>>, %arg7: memref<64x2xbf16, #tpu.memory_space<vmem>>, %arg8: memref<1x64xf32, #tpu.memory_space<vmem>>, %arg9: memref<16x128xbf16, #tpu.memory_space<vmem>>, %arg10: memref<64x2xbf16, #tpu.memory_space<vmem>>, %arg11: memref<1x2xf32, #tpu.memory_space<vmem>>, %arg12: memref<16x2xf32, #tpu.memory_space<vmem>>) attributes {dimension_semantics = [#tpu.dimension_semantics<parallel>], iteration_bounds = array<i64: 2>, scalar_prefetch = 0 : i64, scratch_operands = 0 : i64, tpu.core_type = #tpu.core_type<tc>, window_params = [{transform_indices = @transform_0, window_bounds = array<i64: 128, 8>}, {transform_indices = @transform_1, window_bounds = array<i64: 128, 128>}, {pipeline_mode = #tpu.pipeline_mode<synchronous>, transform_indices = @transform_2, window_bounds = array<i64: 8, 128>}, {pipeline_mode = #tpu.pipeline_mode<synchronous>, transform_indices = @transform_3, window_bounds = array<i64: 128, 4>}, {pipeline_mode = #tpu.pipeline_mode<synchronous>, transform_indices = @transform_4, window_bounds = array<i64: 1, 128>}, {pipeline_mode = #tpu.pipeline_mode<synchronous>, transform_indices = @transform_5, window_bounds = array<i64: 128, 64>}, {pipeline_mode = #tpu.pipeline_mode<synchronous>, transform_indices = @transform_6, window_bounds = array<i64: 64, 2>}, {pipeline_mode = #tpu.pipeline_mode<synchronous>, transform_indices = @transform_7, window_bounds = array<i64: 1, 64>}, {transform_indices = @transform_8, window_bounds = array<i64: 16, 128>}, {pipeline_mode = #tpu.pipeline_mode<synchronous>, transform_indices = @transform_9, window_bounds = array<i64: 64, 2>}, {pipeline_mode = #tpu.pipeline_mode<synchronous>, transform_indices = @transform_10, window_bounds = array<i64: 1, 2>}, {transform_indices = @transform_11, window_bounds = array<i64: 16, 2>}]} {
    %c0 = arith.constant 0 : index
    %c0_0 = arith.constant 0 : index
    %0 = vector.load %arg2[%c0, %c0_0] : memref<128x128xi8, #tpu.memory_space<vmem>>, vector<128x128xi8>
    %1 = arith.sitofp %0 : vector<128x128xi8> to vector<128x128xf32>
    %cst = arith.constant 1.000000e+00 : f32
    %2 = vector.broadcast %cst : f32 to vector<128x128xf32>
    %3 = arith.subf %1, %2 : vector<128x128xf32>
    %cst_1 = arith.constant 1.000000e+30 : f32
    %4 = vector.broadcast %cst_1 : f32 to vector<128x128xf32>
    %5 = arith.mulf %3, %4 : vector<128x128xf32>
    %c0_2 = arith.constant 0 : index
    %c0_3 = arith.constant 0 : index
    %6 = vector.load %arg1[%c0_2, %c0_3] : memref<128x8xbf16, #tpu.memory_space<vmem>>, vector<128x8xbf16>
    %c0_4 = arith.constant 0 : index
    %c0_5 = arith.constant 0 : index
    %7 = vector.load %arg3[%c0_4, %c0_5] : memref<8x128xbf16, #tpu.memory_space<vmem>>, vector<8x128xbf16>
    %cst_6 = arith.constant dense<0.000000e+00> : vector<128x128xf32>
    %8 = tpu.matmul %6, %7, %cst_6 {dimension_numbers = #tpu.dot_dimension_numbers<[1], [0], [0], [1], [0, 0, 1, 1], [], []>} : vector<128x8xbf16>, vector<8x128xbf16>, vector<128x128xf32> -> vector<128x128xf32>
    %9 = arith.truncf %8 : vector<128x128xf32> to vector<128x128xbf16>
    %c0_7 = arith.constant 0 : index
    %c0_8 = arith.constant 0 : index
    %10 = vector.load %arg4[%c0_7, %c0_8] : memref<128x4xbf16, #tpu.memory_space<vmem>>, vector<128x4xbf16>
    %cst_9 = arith.constant dense<0.000000e+00> : vector<128x4xf32>
    %11 = tpu.matmul %9, %10, %cst_9 {dimension_numbers = #tpu.dot_dimension_numbers<[1], [0], [0], [1], [0, 0, 1, 1], [], []>} : vector<128x128xbf16>, vector<128x4xbf16>, vector<128x4xf32> -> vector<128x4xf32>
    %12 = tpu.transpose %11, [1, 0] : vector<128x4xf32> -> vector<4x128xf32>
    %13 = tpu.iota {dimensions = array<i32: 1>} : vector<1x128xi32>
    %c0_i32 = arith.constant 0 : i32
    %14 = vector.broadcast %c0_i32 : i32 to vector<1x128xi32>
    %15 = arith.cmpi sge, %13, %14 : vector<1x128xi32>
    %c64_i32 = arith.constant 64 : i32
    %16 = vector.broadcast %c64_i32 : i32 to vector<1x128xi32>
    %17 = arith.cmpi slt, %13, %16 : vector<1x128xi32>
    %18 = arith.andi %15, %17 : vector<1x128xi1>
    %cst_10 = arith.constant 0.000000e+00 : bf16
    %19 = vector.broadcast %cst_10 : bf16 to vector<128x128xbf16>
    %20 = vector.shape_cast %18 : vector<1x128xi1> to vector<1x128xi1>
    %21 = vector.broadcast %20 : vector<1x128xi1> to vector<128x128xi1>
    %22 = arith.select %21, %9, %19 : vector<128x128xi1>, vector<128x128xbf16>
    %23 = vector.extract_strided_slice %11 {offsets = [0, 2], sizes = [128, 1], strides = [1, 1]} : vector<128x4xf32> to vector<128x1xf32>
    %24 = vector.extract_strided_slice %12 {offsets = [0, 0], sizes = [1, 128], strides = [1, 1]} : vector<4x128xf32> to vector<1x128xf32>
    %25 = vector.broadcast %23 : vector<128x1xf32> to vector<128x128xf32>
    %26 = vector.broadcast %24 : vector<1x128xf32> to vector<128x128xf32>
    %27 = arith.addf %25, %26 : vector<128x128xf32>
    %cst_11 = arith.constant 2.000000e-01 : f32
    %28 = vector.broadcast %cst_11 : f32 to vector<128x128xf32>
    %29 = arith.mulf %28, %27 : vector<128x128xf32>
    %30 = arith.maximumf %27, %29 : vector<128x128xf32>
    %31 = arith.addf %30, %5 : vector<128x128xf32>
    %cst_12 = arith.constant dense<0xFF800000> : vector<128xf32>
    %32 = vector.multi_reduction <maximumf>, %31, %cst_12 [1] : vector<128x128xf32> to vector<128xf32>
    %33 = vector.shape_cast %32 : vector<128xf32> to vector<128x1xf32>
    %34 = vector.broadcast %33 : vector<128x1xf32> to vector<128x128xf32>
    %35 = arith.subf %31, %34 : vector<128x128xf32>
    %36 = math.exp %35 : vector<128x128xf32>
    %cst_13 = arith.constant dense<0.000000e+00> : vector<128xf32>
    %37 = vector.multi_reduction <add>, %36, %cst_13 [1] : vector<128x128xf32> to vector<128xf32>
    %38 = vector.shape_cast %37 : vector<128xf32> to vector<128x1xf32>
    %cst_14 = arith.constant 9.99999968E-21 : f32
    %39 = vector.broadcast %cst_14 : f32 to vector<128x1xf32>
    %40 = arith.maximumf %38, %39 : vector<128x1xf32>
    %41 = arith.truncf %36 : vector<128x128xf32> to vector<128x128xbf16>
    %cst_15 = arith.constant dense<0.000000e+00> : vector<128x128xf32>
    %42 = tpu.matmul %41, %22, %cst_15 {dimension_numbers = #tpu.dot_dimension_numbers<[1], [0], [0], [1], [0, 0, 1, 1], [], []>} : vector<128x128xbf16>, vector<128x128xbf16>, vector<128x128xf32> -> vector<128x128xf32>
    %43 = tpu.reciprocal %40 {approx = true} : vector<128x1xf32> -> vector<128x1xf32>
    %44 = vector.broadcast %43 : vector<128x1xf32> to vector<128x128xf32>
    %45 = arith.mulf %42, %44 : vector<128x128xf32>
    %c64_i32_16 = arith.constant 64 : i32
    %46 = vector.broadcast %c64_i32_16 : i32 to vector<1x128xi32>
    %47 = arith.cmpi sge, %13, %46 : vector<1x128xi32>
    %c128_i32 = arith.constant 128 : i32
    %48 = vector.broadcast %c128_i32 : i32 to vector<1x128xi32>
    %49 = arith.cmpi slt, %13, %48 : vector<1x128xi32>
    %50 = arith.andi %47, %49 : vector<1x128xi1>
    %cst_17 = arith.constant 0.000000e+00 : bf16
    %51 = vector.broadcast %cst_17 : bf16 to vector<128x128xbf16>
    %52 = vector.shape_cast %50 : vector<1x128xi1> to vector<1x128xi1>
    %53 = vector.broadcast %52 : vector<1x128xi1> to vector<128x128xi1>
    %54 = arith.select %53, %9, %51 : vector<128x128xi1>, vector<128x128xbf16>
    %55 = vector.extract_strided_slice %11 {offsets = [0, 3], sizes = [128, 1], strides = [1, 1]} : vector<128x4xf32> to vector<128x1xf32>
    %56 = vector.extract_strided_slice %12 {offsets = [1, 0], sizes = [1, 128], strides = [1, 1]} : vector<4x128xf32> to vector<1x128xf32>
    %57 = vector.broadcast %55 : vector<128x1xf32> to vector<128x128xf32>
    %58 = vector.broadcast %56 : vector<1x128xf32> to vector<128x128xf32>
    %59 = arith.addf %57, %58 : vector<128x128xf32>
    %cst_18 = arith.constant 2.000000e-01 : f32
    %60 = vector.broadcast %cst_18 : f32 to vector<128x128xf32>
    %61 = arith.mulf %60, %59 : vector<128x128xf32>
    %62 = arith.maximumf %59, %61 : vector<128x128xf32>
    %63 = arith.addf %62, %5 : vector<128x128xf32>
    %cst_19 = arith.constant dense<0xFF800000> : vector<128xf32>
    %64 = vector.multi_reduction <maximumf>, %63, %cst_19 [1] : vector<128x128xf32> to vector<128xf32>
    %65 = vector.shape_cast %64 : vector<128xf32> to vector<128x1xf32>
    %66 = vector.broadcast %65 : vector<128x1xf32> to vector<128x128xf32>
    %67 = arith.subf %63, %66 : vector<128x128xf32>
    %68 = math.exp %67 : vector<128x128xf32>
    %cst_20 = arith.constant dense<0.000000e+00> : vector<128xf32>
    %69 = vector.multi_reduction <add>, %68, %cst_20 [1] : vector<128x128xf32> to vector<128xf32>
    %70 = vector.shape_cast %69 : vector<128xf32> to vector<128x1xf32>
    %cst_21 = arith.constant 9.99999968E-21 : f32
    %71 = vector.broadcast %cst_21 : f32 to vector<128x1xf32>
    %72 = arith.maximumf %70, %71 : vector<128x1xf32>
    %73 = arith.truncf %68 : vector<128x128xf32> to vector<128x128xbf16>
    %cst_22 = arith.constant dense<0.000000e+00> : vector<128x128xf32>
    %74 = tpu.matmul %73, %54, %cst_22 {dimension_numbers = #tpu.dot_dimension_numbers<[1], [0], [0], [1], [0, 0, 1, 1], [], []>} : vector<128x128xbf16>, vector<128x128xbf16>, vector<128x128xf32> -> vector<128x128xf32>
    %75 = tpu.reciprocal %72 {approx = true} : vector<128x1xf32> -> vector<128x1xf32>
    %76 = vector.broadcast %75 : vector<128x1xf32> to vector<128x128xf32>
    %77 = arith.mulf %74, %76 : vector<128x128xf32>
    %78 = arith.addf %45, %77 : vector<128x128xf32>
    %c0_23 = arith.constant 0 : index
    %c0_24 = arith.constant 0 : index
    %79 = vector.load %arg5[%c0_23, %c0_24] : memref<1x128xf32, #tpu.memory_space<vmem>>, vector<1x128xf32>
    %80 = vector.broadcast %79 : vector<1x128xf32> to vector<128x128xf32>
    %81 = arith.addf %78, %80 : vector<128x128xf32>
    %cst_25 = arith.constant 0.000000e+00 : f32
    %82 = vector.broadcast %cst_25 : f32 to vector<128x128xf32>
    %83 = arith.cmpf ogt, %81, %82 : vector<128x128xf32>
    %cst_26 = arith.constant 0.000000e+00 : f32
    %84 = vector.broadcast %cst_26 : f32 to vector<128x128xf32>
    %85 = arith.minimumf %81, %84 : vector<128x128xf32>
    %86 = math.exp %85 : vector<128x128xf32>
    %cst_27 = arith.constant 1.000000e+00 : f32
    %87 = vector.broadcast %cst_27 : f32 to vector<128x128xf32>
    %88 = arith.subf %86, %87 : vector<128x128xf32>
    %89 = arith.select %83, %81, %88 : vector<128x128xi1>, vector<128x128xf32>
    %90 = arith.truncf %89 : vector<128x128xf32> to vector<128x128xbf16>
    %c0_28 = arith.constant 0 : index
    %c0_29 = arith.constant 0 : index
    %91 = vector.load %arg6[%c0_28, %c0_29] : memref<128x64xbf16, #tpu.memory_space<vmem>>, vector<128x64xbf16>
    %cst_30 = arith.constant dense<0.000000e+00> : vector<128x64xf32>
    %92 = tpu.matmul %90, %91, %cst_30 {dimension_numbers = #tpu.dot_dimension_numbers<[1], [0], [0], [1], [0, 0, 1, 1], [], []>} : vector<128x128xbf16>, vector<128x64xbf16>, vector<128x64xf32> -> vector<128x64xf32>
    %93 = arith.truncf %92 : vector<128x64xf32> to vector<128x64xbf16>
    %c0_31 = arith.constant 0 : index
    %c0_32 = arith.constant 0 : index
    %94 = vector.load %arg7[%c0_31, %c0_32] : memref<64x2xbf16, #tpu.memory_space<vmem>>, vector<64x2xbf16>
    %cst_33 = arith.constant dense<0.000000e+00> : vector<128x2xf32>
    %95 = tpu.matmul %93, %94, %cst_33 {dimension_numbers = #tpu.dot_dimension_numbers<[1], [0], [0], [1], [0, 0, 1, 1], [], []>} : vector<128x64xbf16>, vector<64x2xbf16>, vector<128x2xf32> -> vector<128x2xf32>
    %96 = tpu.transpose %95, [1, 0] : vector<128x2xf32> -> vector<2x128xf32>
    %97 = vector.extract_strided_slice %95 {offsets = [0, 1], sizes = [128, 1], strides = [1, 1]} : vector<128x2xf32> to vector<128x1xf32>
    %98 = vector.extract_strided_slice %96 {offsets = [0, 0], sizes = [1, 128], strides = [1, 1]} : vector<2x128xf32> to vector<1x128xf32>
    %99 = vector.broadcast %97 : vector<128x1xf32> to vector<128x128xf32>
    %100 = vector.broadcast %98 : vector<1x128xf32> to vector<128x128xf32>
    %101 = arith.addf %99, %100 : vector<128x128xf32>
    %cst_34 = arith.constant 2.000000e-01 : f32
    %102 = vector.broadcast %cst_34 : f32 to vector<128x128xf32>
    %103 = arith.mulf %102, %101 : vector<128x128xf32>
    %104 = arith.maximumf %101, %103 : vector<128x128xf32>
    %105 = arith.addf %104, %5 : vector<128x128xf32>
    %cst_35 = arith.constant dense<0xFF800000> : vector<128xf32>
    %106 = vector.multi_reduction <maximumf>, %105, %cst_35 [1] : vector<128x128xf32> to vector<128xf32>
    %107 = vector.shape_cast %106 : vector<128xf32> to vector<128x1xf32>
    %108 = vector.broadcast %107 : vector<128x1xf32> to vector<128x128xf32>
    %109 = arith.subf %105, %108 : vector<128x128xf32>
    %110 = math.exp %109 : vector<128x128xf32>
    %cst_36 = arith.constant dense<0.000000e+00> : vector<128xf32>
    %111 = vector.multi_reduction <add>, %110, %cst_36 [1] : vector<128x128xf32> to vector<128xf32>
    %112 = vector.shape_cast %111 : vector<128xf32> to vector<128x1xf32>
    %cst_37 = arith.constant 9.99999968E-21 : f32
    %113 = vector.broadcast %cst_37 : f32 to vector<128x1xf32>
    %114 = arith.maximumf %112, %113 : vector<128x1xf32>
    %115 = arith.truncf %110 : vector<128x128xf32> to vector<128x128xbf16>
    %cst_38 = arith.constant dense<0.000000e+00> : vector<128x64xf32>
    %116 = tpu.matmul %115, %93, %cst_38 {dimension_numbers = #tpu.dot_dimension_numbers<[1], [0], [0], [1], [0, 0, 1, 1], [], []>} : vector<128x128xbf16>, vector<128x64xbf16>, vector<128x64xf32> -> vector<128x64xf32>
    %117 = tpu.reciprocal %114 {approx = true} : vector<128x1xf32> -> vector<128x1xf32>
    %118 = vector.broadcast %117 : vector<128x1xf32> to vector<128x64xf32>
    %119 = arith.mulf %116, %118 : vector<128x64xf32>
    %c0_39 = arith.constant 0 : index
    %c0_40 = arith.constant 0 : index
    %120 = vector.load %arg8[%c0_39, %c0_40] : memref<1x64xf32, #tpu.memory_space<vmem>>, vector<1x64xf32>
    %121 = vector.broadcast %120 : vector<1x64xf32> to vector<128x64xf32>
    %122 = arith.addf %119, %121 : vector<128x64xf32>
    %cst_41 = arith.constant 0.000000e+00 : f32
    %123 = vector.broadcast %cst_41 : f32 to vector<128x64xf32>
    %124 = arith.cmpf ogt, %122, %123 : vector<128x64xf32>
    %cst_42 = arith.constant 0.000000e+00 : f32
    %125 = vector.broadcast %cst_42 : f32 to vector<128x64xf32>
    %126 = arith.minimumf %122, %125 : vector<128x64xf32>
    %127 = math.exp %126 : vector<128x64xf32>
    %cst_43 = arith.constant 1.000000e+00 : f32
    %128 = vector.broadcast %cst_43 : f32 to vector<128x64xf32>
    %129 = arith.subf %127, %128 : vector<128x64xf32>
    %130 = arith.select %124, %122, %129 : vector<128x64xi1>, vector<128x64xf32>
    %c0_44 = arith.constant 0 : index
    %c0_45 = arith.constant 0 : index
    %131 = vector.load %arg9[%c0_44, %c0_45] : memref<16x128xbf16, #tpu.memory_space<vmem>>, vector<16x128xbf16>
    %132 = arith.truncf %130 : vector<128x64xf32> to vector<128x64xbf16>
    %cst_46 = arith.constant dense<0.000000e+00> : vector<16x64xf32>
    %133 = tpu.matmul %131, %132, %cst_46 {dimension_numbers = #tpu.dot_dimension_numbers<[1], [0], [0], [1], [0, 0, 1, 1], [], []>} : vector<16x128xbf16>, vector<128x64xbf16>, vector<16x64xf32> -> vector<16x64xf32>
    %134 = arith.truncf %133 : vector<16x64xf32> to vector<16x64xbf16>
    %c0_47 = arith.constant 0 : index
    %c0_48 = arith.constant 0 : index
    %135 = vector.load %arg10[%c0_47, %c0_48] : memref<64x2xbf16, #tpu.memory_space<vmem>>, vector<64x2xbf16>
    %cst_49 = arith.constant dense<0.000000e+00> : vector<16x2xf32>
    %136 = tpu.matmul %134, %135, %cst_49 {dimension_numbers = #tpu.dot_dimension_numbers<[1], [0], [0], [1], [0, 0, 1, 1], [], []>} : vector<16x64xbf16>, vector<64x2xbf16>, vector<16x2xf32> -> vector<16x2xf32>
    %c0_50 = arith.constant 0 : index
    %c0_51 = arith.constant 0 : index
    %137 = vector.load %arg11[%c0_50, %c0_51] : memref<1x2xf32, #tpu.memory_space<vmem>>, vector<1x2xf32>
    %138 = vector.broadcast %137 : vector<1x2xf32> to vector<16x2xf32>
    %139 = arith.addf %136, %138 : vector<16x2xf32>
    %c0_52 = arith.constant 0 : index
    %c0_53 = arith.constant 0 : index
    %140 = vector.load %arg12[%c0_52, %c0_53] : memref<16x2xf32, #tpu.memory_space<vmem>>, vector<16x2xf32>
    tpu.vector_store %arg12[%c0_52, %c0_53], %139 {strides = array<i32>} : memref<16x2xf32, #tpu.memory_space<vmem>>, vector<16x2xf32>,
    return
  }
  func.func @transform_0(%arg0: i32) -> (i32, i32) {
    %c0_i32 = arith.constant 0 : i32
    %c0_i32_0 = arith.constant 0 : i32
    return %arg0, %c0_i32 : i32, i32
  }
  func.func @transform_1(%arg0: i32) -> (i32, i32) {
    %c0_i32 = arith.constant 0 : i32
    return %arg0, %arg0 : i32, i32
  }
  func.func @transform_2(%arg0: i32) -> (i32, i32) {
    %c0_i32 = arith.constant 0 : i32
    %c0_i32_0 = arith.constant 0 : i32
    %c0_i32_1 = arith.constant 0 : i32
    return %c0_i32, %c0_i32_0 : i32, i32
  }
  func.func @transform_3(%arg0: i32) -> (i32, i32) {
    %c0_i32 = arith.constant 0 : i32
    %c0_i32_0 = arith.constant 0 : i32
    %c0_i32_1 = arith.constant 0 : i32
    return %c0_i32, %c0_i32_0 : i32, i32
  }
  func.func @transform_4(%arg0: i32) -> (i32, i32) {
    %c0_i32 = arith.constant 0 : i32
    %c0_i32_0 = arith.constant 0 : i32
    %c0_i32_1 = arith.constant 0 : i32
    return %c0_i32, %c0_i32_0 : i32, i32
  }
  func.func @transform_5(%arg0: i32) -> (i32, i32) {
    %c0_i32 = arith.constant 0 : i32
    %c0_i32_0 = arith.constant 0 : i32
    %c0_i32_1 = arith.constant 0 : i32
    return %c0_i32, %c0_i32_0 : i32, i32
  }
  func.func @transform_6(%arg0: i32) -> (i32, i32) {
    %c0_i32 = arith.constant 0 : i32
    %c0_i32_0 = arith.constant 0 : i32
    %c0_i32_1 = arith.constant 0 : i32
    return %c0_i32, %c0_i32_0 : i32, i32
  }
  func.func @transform_7(%arg0: i32) -> (i32, i32) {
    %c0_i32 = arith.constant 0 : i32
    %c0_i32_0 = arith.constant 0 : i32
    %c0_i32_1 = arith.constant 0 : i32
    return %c0_i32, %c0_i32_0 : i32, i32
  }
  func.func @transform_8(%arg0: i32) -> (i32, i32) {
    %c0_i32 = arith.constant 0 : i32
    return %arg0, %arg0 : i32, i32
  }
  func.func @transform_9(%arg0: i32) -> (i32, i32) {
    %c0_i32 = arith.constant 0 : i32
    %c0_i32_0 = arith.constant 0 : i32
    %c0_i32_1 = arith.constant 0 : i32
    return %c0_i32, %c0_i32_0 : i32, i32
  }
  func.func @transform_10(%arg0: i32) -> (i32, i32) {
    %c0_i32 = arith.constant 0 : i32
    %c0_i32_0 = arith.constant 0 : i32
    %c0_i32_1 = arith.constant 0 : i32
    return %c0_i32, %c0_i32_0 : i32, i32
  }
  func.func @transform_11(%arg0: i32) -> (i32, i32) {
    %c0_i32 = arith.constant 0 : i32
    %c0_i32_0 = arith.constant 0 : i32
    return %arg0, %c0_i32 : i32, i32
  }
}

</mosaic_0001>

<llo_original>
// kernel: tpu_custom_call.1
$region0: #{tpu_custom_call.1}
  #allocation0 [shape = 'u32[]', space=smem, size = 0x4, offset = 0x4, fixed_abs, tag = 'smem constant byte address 0x4 - core index']
  #allocation1 [shape = 'u32[144,128]{1,0:T(1,128)}', space=vmem, size = 0x12000, scoped, tag = 'internal scratch']
  %s0 = inlined_call_operand.vmem [shape: bf16[256,8], index: 0, kind: input, shape index: {}]
  %s1 = inlined_call_operand.vmem [shape: s8[256,256], index: 1, kind: input, shape index: {}]
  %s2 = inlined_call_operand.vmem [shape: bf16[8,128], index: 2, kind: input, shape index: {}]
  %s3 = inlined_call_operand.vmem [shape: bf16[128,4], index: 3, kind: input, shape index: {}]
  %s4 = inlined_call_operand.vmem [shape: f32[1,128], index: 4, kind: input, shape index: {}]
  %s5 = inlined_call_operand.vmem [shape: bf16[128,64], index: 5, kind: input, shape index: {}]
  %s6 = inlined_call_operand.vmem [shape: bf16[64,2], index: 6, kind: input, shape index: {}]
  %s7 = inlined_call_operand.vmem [shape: f32[1,64], index: 7, kind: input, shape index: {}]
  %s8 = inlined_call_operand.vmem [shape: bf16[32,256], index: 8, kind: input, shape index: {}]
  %s9 = inlined_call_operand.vmem [shape: bf16[64,2], index: 9, kind: input, shape index: {}]
  %s10 = inlined_call_operand.vmem [shape: f32[1,2], index: 10, kind: input, shape index: {}]
  %s11 = inlined_call_operand.vmem [shape: f32[32,2], index: 11, kind: output, shape index: {}]
  %s12 = sld [smem:[#allocation0]]
  $region156: #{tpu_custom_call.1} parent=0
    _
  %s14 = ssub.s32 1, %s12
  %s15 = scalar_select 0, %s14, %s12
  $region1: #{tpu_custom_call.1} parent=0
    #allocation2 [shape = 'u8[32768]{0}', space=vmem, size = 0x8000, scoped, tag = 'input window, operand 1']
    #allocation3 [shape = 'u8[8192]{0}', space=vmem, size = 0x2000, scoped, tag = 'input window, operand 8']
    loop: start=0, step=1, limit=4
    $region2: #{tpu_custom_call.1} parent=1 // loop_pre_header
      _
    $region3: #{tpu_custom_call.1} parent=1 // loop_header
      %s17 = sphi 0, %s21
      %p18 = scmp.ge.s32.totalorder %s17, 4
      %s27 = sphi 0, %s29
      %s30 = sphi 0, %s27
      %s31 = sphi 0, %s30
      %s47 = sphi 0, %s31
      %s55 = sphi 0, %s57
      %s58 = sphi 0, %s55
      %s59 = sphi 0, %s58
      %s75 = sphi 0, %s59
      %s79 = sphi 0, %s79
      %s81 = sphi 0, %s79
      %s82 = sphi 0, %s81
      %s96 = sphi 0, %s82
      %s100 = sphi 0, %s100
      %s102 = sphi 0, %s100
      %s103 = sphi 0, %s102
      %s117 = sphi 0, %s103
      %s121 = sphi 0, %s121
      %s123 = sphi 0, %s121
      %s124 = sphi 0, %s123
      %s138 = sphi 0, %s124
      %s142 = sphi 0, %s142
      %s144 = sphi 0, %s142
      %s145 = sphi 0, %s144
      %s159 = sphi 0, %s145
      %s163 = sphi 0, %s163
      %s165 = sphi 0, %s163
      %s166 = sphi 0, %s165
      %s180 = sphi 0, %s166
      %s184 = sphi 0, %s184
      %s186 = sphi 0, %s184
      %s187 = sphi 0, %s186
      %s201 = sphi 0, %s187
      %s209 = sphi 0, %s211
      %s212 = sphi 0, %s209
      %s213 = sphi 0, %s212
      %s229 = sphi 0, %s213
      %s233 = sphi 0, %s233
      %s235 = sphi 0, %s233
      %s236 = sphi 0, %s235
      %s250 = sphi 0, %s236
      %s254 = sphi 0, %s254
      %s256 = sphi 0, %s254
      %s257 = sphi 0, %s256
      %s271 = sphi 0, %s257
      %s277 = sphi 0, %s279
      %s280 = sphi 0, %s277
      %s281 = sphi 0, %s280
      %s297 = sphi 0, %s281
    $region4: #{tpu_custom_call.1} parent=1 // loop_header_branch
      %20 = sbr.rel (%p18) target = $region8
    $region5: #{tpu_custom_call.1} parent=1 // loop_body
      %s22 = ssub.s32 %s17, 1
      %s23 = ssub.s32 %s17, 2
      %s24 = sadd.s32 %s17, 1
      %s25 = ssub.s32 %s17, %s24
      %p26 = scmp.eq.s32.totalorder %s25, 0
      %s28 = sadd.s32 %s27, 1
      %s29 = scalar_select %p26, %s27, %s28
      %p32 = pneg %p26
      %p33 = scmp.eq.s32.totalorder %s17, 1
      %p34 = por %p32, %p33
      %p35 = scmp.ne.s32.totalorder %s27, %s30
      %p36 = scmp.eq.s32.totalorder %s17, 0
      %p37 = por %p35, %p36
      %p38 = scmp.ne.s32.totalorder %s27, %s30
      %p39 = scmp.eq.s32.totalorder %s22, 1
      %p40 = por %p38, %p39
      %p41 = scmp.ne.s32.totalorder %s30, %s31
      %p42 = scmp.eq.s32.totalorder %s22, 0
      %p43 = por %p41, %p42
      %p44 = scmp.ne.s32.totalorder %s30, %s31
      %p45 = scmp.eq.s32.totalorder %s23, 1
      %p46 = por %p44, %p45
      %p48 = scmp.ne.s32.totalorder %s31, %s47
      %p49 = scmp.eq.s32.totalorder %s23, 0
      %p50 = por %p48, %p49
      %s51 = ssub.s32 %s17, %s24
      %s52 = ssub.s32 %s17, %s24
      %s53 = sor.u32 %s51, %s52
      %p54 = scmp.eq.s32.totalorder %s53, 0
      %s56 = sadd.s32 %s55, 1
      %s57 = scalar_select %p54, %s55, %s56
      %p60 = pneg %p54
      %p61 = scmp.eq.s32.totalorder %s17, 1
      %p62 = por %p60, %p61
      %p63 = scmp.ne.s32.totalorder %s55, %s58
      %p64 = scmp.eq.s32.totalorder %s17, 0
      %p65 = por %p63, %p64
      %p66 = scmp.ne.s32.totalorder %s55, %s58
      %p67 = scmp.eq.s32.totalorder %s22, 1
      %p68 = por %p66, %p67
      %p69 = scmp.ne.s32.totalorder %s58, %s59
      %p70 = scmp.eq.s32.totalorder %s22, 0
      %p71 = por %p69, %p70
      %p72 = scmp.ne.s32.totalorder %s58, %s59
      %p73 = scmp.eq.s32.totalorder %s23, 1
      %p74 = por %p72, %p73
      %p76 = scmp.ne.s32.totalorder %s59, %s75
      %p77 = scmp.eq.s32.totalorder %s23, 0
      %p78 = por %p76, %p77
      %s80 = sadd.s32 %s79, 1
      %p83 = scmp.eq.s32.totalorder %s17, 1
      %p84 = scmp.ne.s32.totalorder %s79, %s81
      %p85 = scmp.eq.s32.totalorder %s17, 0
      %p86 = por %p84, %p85
      %p87 = scmp.ne.s32.totalorder %s79, %s81
      %p88 = scmp.eq.s32.totalorder %s22, 1
      %p89 = por %p87, %p88
      %p90 = scmp.ne.s32.totalorder %s81, %s82
      %p91 = scmp.eq.s32.totalorder %s22, 0
      %p92 = por %p90, %p91
      %p93 = scmp.ne.s32.totalorder %s81, %s82
      %p94 = scmp.eq.s32.totalorder %s23, 1
      %p95 = por %p93, %p94
      %p97 = scmp.ne.s32.totalorder %s82, %s96
      %p98 = scmp.eq.s32.totalorder %s23, 0
      %p99 = por %p97, %p98
      %s101 = sadd.s32 %s100, 1
      %p104 = scmp.eq.s32.totalorder %s17, 1
      %p105 = scmp.ne.s32.totalorder %s100, %s102
      %p106 = scmp.eq.s32.totalorder %s17, 0
      %p107 = por %p105, %p106
      %p108 = scmp.ne.s32.totalorder %s100, %s102
      %p109 = scmp.eq.s32.totalorder %s22, 1
      %p110 = por %p108, %p109
      %p111 = scmp.ne.s32.totalorder %s102, %s103
      %p112 = scmp.eq.s32.totalorder %s22, 0
      %p113 = por %p111, %p112
      %p114 = scmp.ne.s32.totalorder %s102, %s103
      %p115 = scmp.eq.s32.totalorder %s23, 1
      %p116 = por %p114, %p115
      %p118 = scmp.ne.s32.totalorder %s103, %s117
      %p119 = scmp.eq.s32.totalorder %s23, 0
      %p120 = por %p118, %p119
      %s122 = sadd.s32 %s121, 1
      %p125 = scmp.eq.s32.totalorder %s17, 1
      %p126 = scmp.ne.s32.totalorder %s121, %s123
      %p127 = scmp.eq.s32.totalorder %s17, 0
      %p128 = por %p126, %p127
      %p129 = scmp.ne.s32.totalorder %s121, %s123
      %p130 = scmp.eq.s32.totalorder %s22, 1
      %p131 = por %p129, %p130
      %p132 = scmp.ne.s32.totalorder %s123, %s124
      %p133 = scmp.eq.s32.totalorder %s22, 0
      %p134 = por %p132, %p133
      %p135 = scmp.ne.s32.totalorder %s123, %s124
      %p136 = scmp.eq.s32.totalorder %s23, 1
      %p137 = por %p135, %p136
      %p139 = scmp.ne.s32.totalorder %s124, %s138
      %p140 = scmp.eq.s32.totalorder %s23, 0
      %p141 = por %p139, %p140
      %s143 = sadd.s32 %s142, 1
      %p146 = scmp.eq.s32.totalorder %s17, 1
      %p147 = scmp.ne.s32.totalorder %s142, %s144
      %p148 = scmp.eq.s32.totalorder %s17, 0
      %p149 = por %p147, %p148
      %p150 = scmp.ne.s32.totalorder %s142, %s144
      %p151 = scmp.eq.s32.totalorder %s22, 1
      %p152 = por %p150, %p151
      %p153 = scmp.ne.s32.totalorder %s144, %s145
      %p154 = scmp.eq.s32.totalorder %s22, 0
      %p155 = por %p153, %p154
      %p156 = scmp.ne.s32.totalorder %s144, %s145
      %p157 = scmp.eq.s32.totalorder %s23, 1
      %p158 = por %p156, %p157
      %p160 = scmp.ne.s32.totalorder %s145, %s159
      %p161 = scmp.eq.s32.totalorder %s23, 0
      %p162 = por %p160, %p161
      %s164 = sadd.s32 %s163, 1
      %p167 = scmp.eq.s32.totalorder %s17, 1
      %p168 = scmp.ne.s32.totalorder %s163, %s165
      %p169 = scmp.eq.s32.totalorder %s17, 0
      %p170 = por %p168, %p169
      %p171 = scmp.ne.s32.totalorder %s163, %s165
      %p172 = scmp.eq.s32.totalorder %s22, 1
      %p173 = por %p171, %p172
      %p174 = scmp.ne.s32.totalorder %s165, %s166
      %p175 = scmp.eq.s32.totalorder %s22, 0
      %p176 = por %p174, %p175
      %p177 = scmp.ne.s32.totalorder %s165, %s166
      %p178 = scmp.eq.s32.totalorder %s23, 1
      %p179 = por %p177, %p178
      %p181 = scmp.ne.s32.totalorder %s166, %s180
      %p182 = scmp.eq.s32.totalorder %s23, 0
      %p183 = por %p181, %p182
      %s185 = sadd.s32 %s184, 1
      %p188 = scmp.eq.s32.totalorder %s17, 1
      %p189 = scmp.ne.s32.totalorder %s184, %s186
      %p190 = scmp.eq.s32.totalorder %s17, 0
      %p191 = por %p189, %p190
      %p192 = scmp.ne.s32.totalorder %s184, %s186
      %p193 = scmp.eq.s32.totalorder %s22, 1
      %p194 = por %p192, %p193
      %p195 = scmp.ne.s32.totalorder %s186, %s187
      %p196 = scmp.eq.s32.totalorder %s22, 0
      %p197 = por %p195, %p196
      %p198 = scmp.ne.s32.totalorder %s186, %s187
      %p199 = scmp.eq.s32.totalorder %s23, 1
      %p200 = por %p198, %p199
      %p202 = scmp.ne.s32.totalorder %s187, %s201
      %p203 = scmp.eq.s32.totalorder %s23, 0
      %p204 = por %p202, %p203
      %s205 = ssub.s32 %s17, %s24
      %s206 = ssub.s32 %s17, %s24
      %s207 = sor.u32 %s205, %s206
      %p208 = scmp.eq.s32.totalorder %s207, 0
      %s210 = sadd.s32 %s209, 1
      %s211 = scalar_select %p208, %s209, %s210
      %p214 = pneg %p208
      %p215 = scmp.eq.s32.totalorder %s17, 1
      %p216 = por %p214, %p215
      %p217 = scmp.ne.s32.totalorder %s209, %s212
      %p218 = scmp.eq.s32.totalorder %s17, 0
      %p219 = por %p217, %p218
      %p220 = scmp.ne.s32.totalorder %s209, %s212
      %p221 = scmp.eq.s32.totalorder %s22, 1
      %p222 = por %p220, %p221
      %p223 = scmp.ne.s32.totalorder %s212, %s213
      %p224 = scmp.eq.s32.totalorder %s22, 0
      %p225 = por %p223, %p224
      %p226 = scmp.ne.s32.totalorder %s212, %s213
      %p227 = scmp.eq.s32.totalorder %s23, 1
      %p228 = por %p226, %p227
      %p230 = scmp.ne.s32.totalorder %s213, %s229
      %p231 = scmp.eq.s32.totalorder %s23, 0
      %p232 = por %p230, %p231
      %s234 = sadd.s32 %s233, 1
      %p237 = scmp.eq.s32.totalorder %s17, 1
      %p238 = scmp.ne.s32.totalorder %s233, %s235
      %p239 = scmp.eq.s32.totalorder %s17, 0
      %p240 = por %p238, %p239
      %p241 = scmp.ne.s32.totalorder %s233, %s235
      %p242 = scmp.eq.s32.totalorder %s22, 1
      %p243 = por %p241, %p242
      %p244 = scmp.ne.s32.totalorder %s235, %s236
      %p245 = scmp.eq.s32.totalorder %s22, 0
      %p246 = por %p244, %p245
      %p247 = scmp.ne.s32.totalorder %s235, %s236
      %p248 = scmp.eq.s32.totalorder %s23, 1
      %p249 = por %p247, %p248
      %p251 = scmp.ne.s32.totalorder %s236, %s250
      %p252 = scmp.eq.s32.totalorder %s23, 0
      %p253 = por %p251, %p252
      %s255 = sadd.s32 %s254, 1
      %p258 = scmp.eq.s32.totalorder %s17, 1
      %p259 = scmp.ne.s32.totalorder %s254, %s256
      %p260 = scmp.eq.s32.totalorder %s17, 0
      %p261 = por %p259, %p260
      %p262 = scmp.ne.s32.totalorder %s254, %s256
      %p263 = scmp.eq.s32.totalorder %s22, 1
      %p264 = por %p262, %p263
      %p265 = scmp.ne.s32.totalorder %s256, %s257
      %p266 = scmp.eq.s32.totalorder %s22, 0
      %p267 = por %p265, %p266
      %p268 = scmp.ne.s32.totalorder %s256, %s257
      %p269 = scmp.eq.s32.totalorder %s23, 1
      %p270 = por %p268, %p269
      %p272 = scmp.ne.s32.totalorder %s257, %s271
      %p273 = scmp.eq.s32.totalorder %s23, 0
      %p274 = por %p272, %p273
      %s275 = ssub.s32 %s17, %s24
      %p276 = scmp.eq.s32.totalorder %s275, 0
      %s278 = sadd.s32 %s277, 1
      %s279 = scalar_select %p276, %s277, %s278
      %p282 = pneg %p276
      %p283 = scmp.eq.s32.totalorder %s17, 1
      %p284 = por %p282, %p283
      %p285 = scmp.ne.s32.totalorder %s277, %s280
      %p286 = scmp.eq.s32.totalorder %s17, 0
      %p287 = por %p285, %p286
      %p288 = scmp.ne.s32.totalorder %s277, %s280
      %p289 = scmp.eq.s32.totalorder %s22, 1
      %p290 = por %p288, %p289
      %p291 = scmp.ne.s32.totalorder %s280, %s281
      %p292 = scmp.eq.s32.totalorder %s22, 0
      %p293 = por %p291, %p292
      %p294 = scmp.ne.s32.totalorder %s280, %s281
      %p295 = scmp.eq.s32.totalorder %s23, 1
      %p296 = por %p294, %p295
      %p298 = scmp.ne.s32.totalorder %s281, %s297
      %p299 = scmp.eq.s32.totalorder %s23, 0
      %p300 = por %p298, %p299
      %p301 = scmp.le.s32.totalorder 1, %s17
      %p302 = scmp.lt.s32.totalorder %s17, 3
      %p303 = pnand %p301, %p302
      %p304 = pneg %p303
      // Predicated region
      $region9: #{tpu_custom_call.1} parent=5 // pred_check
        _
      $region10: #{tpu_custom_call.1} parent=5 // pred_check_branch
        %306 = sbr.rel (%p303) target = $region12
      $region11: #{tpu_custom_call.1} parent=5 // pred_region
        %s307 = ssub.s32 %s17, 1
        // Predicated region
        $region13: #{tpu_custom_call.1} parent=11 // pred_check
          %p308 = pneg %p92
        $region14: #{tpu_custom_call.1} parent=11 // pred_check_branch
          %310 = sbr.rel (%p308) target = $region16
        $region15: #{tpu_custom_call.1} parent=11 // pred_region
          _
        $region16: #{tpu_custom_call.1} parent=11 // pred_fallthru
          _
        // Predicated region
        $region17: #{tpu_custom_call.1} parent=11 // pred_check
          %p311 = pneg %p113
        $region18: #{tpu_custom_call.1} parent=11 // pred_check_branch
          %313 = sbr.rel (%p311) target = $region20
        $region19: #{tpu_custom_call.1} parent=11 // pred_region
          _
        $region20: #{tpu_custom_call.1} parent=11 // pred_fallthru
          _
        // Predicated region
        $region21: #{tpu_custom_call.1} parent=11 // pred_check
          %p314 = pneg %p134
        $region22: #{tpu_custom_call.1} parent=11 // pred_check_branch
          %316 = sbr.rel (%p314) target = $region24
        $region23: #{tpu_custom_call.1} parent=11 // pred_region
          _
        $region24: #{tpu_custom_call.1} parent=11 // pred_fallthru
          _
        // Predicated region
        $region25: #{tpu_custom_call.1} parent=11 // pred_check
          %p317 = pneg %p155
        $region26: #{tpu_custom_call.1} parent=11 // pred_check_branch
          %319 = sbr.rel (%p317) target = $region28
        $region27: #{tpu_custom_call.1} parent=11 // pred_region
          _
        $region28: #{tpu_custom_call.1} parent=11 // pred_fallthru
          _
        // Predicated region
        $region29: #{tpu_custom_call.1} parent=11 // pred_check
          %p320 = pneg %p176
        $region30: #{tpu_custom_call.1} parent=11 // pred_check_branch
          %322 = sbr.rel (%p320) target = $region32
        $region31: #{tpu_custom_call.1} parent=11 // pred_region
          _
        $region32: #{tpu_custom_call.1} parent=11 // pred_fallthru
          _
        // Predicated region
        $region33: #{tpu_custom_call.1} parent=11 // pred_check
          %p323 = pneg %p197
        $region34: #{tpu_custom_call.1} parent=11 // pred_check_branch
          %325 = sbr.rel (%p323) target = $region36
        $region35: #{tpu_custom_call.1} parent=11 // pred_region
          _
        $region36: #{tpu_custom_call.1} parent=11 // pred_fallthru
          _
        // Predicated region
        $region37: #{tpu_custom_call.1} parent=11 // pred_check
          %p326 = pneg %p246
        $region38: #{tpu_custom_call.1} parent=11 // pred_check_branch
          %328 = sbr.rel (%p326) target = $region40
        $region39: #{tpu_custom_call.1} parent=11 // pred_region
          _
        $region40: #{tpu_custom_call.1} parent=11 // pred_fallthru
          _
        // Predicated region
        $region41: #{tpu_custom_call.1} parent=11 // pred_check
          %p329 = pneg %p267
        $region42: #{tpu_custom_call.1} parent=11 // pred_check_branch
          %331 = sbr.rel (%p329) target = $region44
        $region43: #{tpu_custom_call.1} parent=11 // pred_region
          _
        $region44: #{tpu_custom_call.1} parent=11 // pred_fallthru
          _
      $region12: #{tpu_custom_call.1} parent=5 // pred_fallthru
        _
      %p332 = scmp.lt.s32.totalorder %s17, 2
      // Predicated region
      $region45: #{tpu_custom_call.1} parent=5 // pred_check
        %p333 = pneg %p332
      $region46: #{tpu_custom_call.1} parent=5 // pred_check_branch
        %335 = sbr.rel (%p333) target = $region48
      $region47: #{tpu_custom_call.1} parent=5 // pred_region
        // Predicated region
        $region49: #{tpu_custom_call.1} parent=47 // pred_check
          %p336 = pneg %p37
        $region50: #{tpu_custom_call.1} parent=47 // pred_check_branch
          %338 = sbr.rel (%p336) target = $region52
        $region51: #{tpu_custom_call.1} parent=47 // pred_region
          %s339 = smul.u32 16, %s17
          %p340 = scmp.lt.s32.totalorder %s339, 31
          %s341 = scalar_select %p340, %s339, 31
          %s342 = smul.addr %s341, 4
          %s343 = scalar_lea.vmem %s0, %s342
          %s344 = smul.u32 16, %s17
        $region52: #{tpu_custom_call.1} parent=47 // pred_fallthru
          _
        // Predicated region
        $region53: #{tpu_custom_call.1} parent=47 // pred_check
          %p345 = pneg %p65
        $region54: #{tpu_custom_call.1} parent=47 // pred_check_branch
          %347 = sbr.rel (%p345) target = $region56
        $region55: #{tpu_custom_call.1} parent=47 // pred_region
          %s348 = sand.u32 %s55, 1
          %s349 = sand.u32 %s55, 1
          %s350 = smul.addr %s349, 32
          %s351 = scalar_lea.vmem [#allocation2], %s350
          %s352 = smul.u32 4, %s17
          %s353 = smul.addr %s352, 2
          %s354 = sadd.s32 %s17, %s353
          %s355 = smul.addr %s354, 8
          %s356 = scalar_lea.vmem %s1, %s355
          // Predicated region
          $region57: #{tpu_custom_call.1} parent=55 // pred_check
            _
          $region58: #{tpu_custom_call.1} parent=55 // pred_check_branch
            %358 = sbr.rel (0) target = $region60
          $region59: #{tpu_custom_call.1} parent=55 // pred_region
            // Predicated region
            $region61: #{tpu_custom_call.1} parent=59 // pred_check
              _
            $region62: #{tpu_custom_call.1} parent=59 // pred_check_branch
              %360 = sbr.rel (0) target = $region64
            $region63: #{tpu_custom_call.1} parent=59 // pred_region
              // Predicated region
              $region76: #{tpu_custom_call.1} parent=63 // pred_check
                _
              $region77: #{tpu_custom_call.1} parent=63 // pred_check_branch
                %381 = sbr.rel (0) target = $region79
              $region78: #{tpu_custom_call.1} parent=63 // pred_region
                loop: start=0, step=1, limit=1
                $region80: #{tpu_custom_call.1} parent=78 // loop_pre_header
                  _
                $region81: #{tpu_custom_call.1} parent=78 // loop_header
                  %s383 = sphi 0, %s387
                  %p384 = scmp.ge.s32.totalorder %s383, 1
                  %s388 = sphi %s356, %s356
                  %s389 = sphi %s351, %s351
                $region82: #{tpu_custom_call.1} parent=78 // loop_header_branch
                  %386 = sbr.rel (%p384) target = $region86
                $region83: #{tpu_custom_call.1} parent=78 // loop_body
                  %v390 = vld [vmem:[%s388] sm:$0xff]
                  %391 = vst [vmem:[%s389] sm:$0xff] %v390
                  %v392 = vld [vmem:[%s388 + $0x10] sm:$0xff]
                  %393 = vst [vmem:[%s389 + $0x8] sm:$0xff] %v392
                  %v394 = vld [vmem:[%s388 + $0x20] sm:$0xff]
                  %395 = vst [vmem:[%s389 + $0x10] sm:$0xff] %v394
                  %v396 = vld [vmem:[%s388 + $0x30] sm:$0xff]
                  %397 = vst [vmem:[%s389 + $0x18] sm:$0xff] %v396
                $region84: #{tpu_custom_call.1} parent=78 // loop_footer
                  %s387 = sadd.s32 1, %s383
                $region85: #{tpu_custom_call.1} parent=78 // loop_footer_branch
                  %382 = sbr.rel target = $region81
                $region86: #{tpu_custom_call.1} parent=78 // loop_exit
                  _
              $region79: #{tpu_custom_call.1} parent=63 // pred_fallthru
                _
              // Predicated region
              $region87: #{tpu_custom_call.1} parent=63 // pred_check
                _
              $region88: #{tpu_custom_call.1} parent=63 // pred_check_branch
                %399 = sbr.rel target = $region90
              $region89: #{tpu_custom_call.1} parent=63 // pred_region
                _
              $region90: #{tpu_custom_call.1} parent=63 // pred_fallthru
                _
            $region64: #{tpu_custom_call.1} parent=59 // pred_fallthru
              _
            // Predicated region
            $region65: #{tpu_custom_call.1} parent=59 // pred_check
              _
            $region66: #{tpu_custom_call.1} parent=59 // pred_check_branch
              %362 = sbr.rel target = $region68
            $region67: #{tpu_custom_call.1} parent=59 // pred_region
              loop: start=0, step=1, limit=1
              $region69: #{tpu_custom_call.1} parent=67 // loop_pre_header
                _
              $region70: #{tpu_custom_call.1} parent=67 // loop_header
                %s365 = sphi 0, %s369
                %p366 = scmp.ge.s32.totalorder %s365, 1
                %s370 = sphi %s356, %s356
                %s371 = sphi %s351, %s351
              $region71: #{tpu_custom_call.1} parent=67 // loop_header_branch
                %368 = sbr.rel (%p366) target = $region75
              $region72: #{tpu_custom_call.1} parent=67 // loop_body
                %v372 = vld [vmem:[%s370] sm:$0xff]
                %373 = vst [vmem:[%s371] sm:$0xff] %v372
                %v374 = vld [vmem:[%s370 + $0x10] sm:$0xff]
                %375 = vst [vmem:[%s371 + $0x8] sm:$0xff] %v374
                %v376 = vld [vmem:[%s370 + $0x20] sm:$0xff]
                %377 = vst [vmem:[%s371 + $0x10] sm:$0xff] %v376
                %v378 = vld [vmem:[%s370 + $0x30] sm:$0xff]
                %379 = vst [vmem:[%s371 + $0x18] sm:$0xff] %v378
              $region73: #{tpu_custom_call.1} parent=67 // loop_footer
                %s369 = sadd.s32 1, %s365
              $region74: #{tpu_custom_call.1} parent=67 // loop_footer_branch
                %364 = sbr.rel target = $region70
              $region75: #{tpu_custom_call.1} parent=67 // loop_exit
                _
            $region68: #{tpu_custom_call.1} parent=59 // pred_fallthru
              _
          $region60: #{tpu_custom_call.1} parent=55 // pred_fallthru
            _
          %400 = vnop
        $region56: #{tpu_custom_call.1} parent=47 // pred_fallthru
          _
        // Predicated region
        $region91: #{tpu_custom_call.1} parent=47 // pred_check
          %p401 = pneg %p219
        $region92: #{tpu_custom_call.1} parent=47 // pred_check_branch
          %403 = sbr.rel (%p401) target = $region94
        $region93: #{tpu_custom_call.1} parent=47 // pred_region
          %s404 = sand.u32 %s209, 1
          %s405 = sand.u32 %s209, 1
          %s406 = smul.addr %s405, 8
          %s407 = scalar_lea.vmem [#allocation3], %s406
          %s408 = smul.u32 2, %s17
          %s409 = smul.addr %s408, 2
          %s410 = sadd.s32 %s17, %s409
          %s411 = smul.addr %s410, 4
          %s412 = scalar_lea.vmem %s8, %s411
          // Predicated region
          $region95: #{tpu_custom_call.1} parent=93 // pred_check
            _
          $region96: #{tpu_custom_call.1} parent=93 // pred_check_branch
            %414 = sbr.rel (0) target = $region98
          $region97: #{tpu_custom_call.1} parent=93 // pred_region
            // Predicated region
            $region99: #{tpu_custom_call.1} parent=97 // pred_check
              _
            $region100: #{tpu_custom_call.1} parent=97 // pred_check_branch
              %416 = sbr.rel target = $region102
            $region101: #{tpu_custom_call.1} parent=97 // pred_region
              // Predicated region
              $region114: #{tpu_custom_call.1} parent=101 // pred_check
                _
              $region115: #{tpu_custom_call.1} parent=101 // pred_check_branch
                %433 = sbr.rel (0) target = $region117
              $region116: #{tpu_custom_call.1} parent=101 // pred_region
                loop: start=0, step=1, limit=1
                $region118: #{tpu_custom_call.1} parent=116 // loop_pre_header
                  _
                $region119: #{tpu_custom_call.1} parent=116 // loop_header
                  %s435 = sphi 0, %s439
                  %p436 = scmp.ge.s32.totalorder %s435, 1
                  %s440 = sphi %s412, %s412
                  %s441 = sphi %s407, %s407
                $region120: #{tpu_custom_call.1} parent=116 // loop_header_branch
                  %438 = sbr.rel (%p436) target = $region124
                $region121: #{tpu_custom_call.1} parent=116 // loop_body
                  _
                $region122: #{tpu_custom_call.1} parent=116 // loop_footer
                  %s439 = sadd.s32 1, %s435
                $region123: #{tpu_custom_call.1} parent=116 // loop_footer_branch
                  %434 = sbr.rel target = $region119
                $region124: #{tpu_custom_call.1} parent=116 // loop_exit
                  _
                loop: start=0, step=1, limit=1
                $region125: #{tpu_custom_call.1} parent=116 // loop_pre_header
                  _
                $region126: #{tpu_custom_call.1} parent=116 // loop_header
                  %s444 = sphi 0, %s448
                  %p445 = scmp.ge.s32.totalorder %s444, 1
                  %s449 = sphi %s412, %s412
                  %s450 = sphi %s407, %s407
                $region127: #{tpu_custom_call.1} parent=116 // loop_header_branch
                  %447 = sbr.rel (%p445) target = $region131
                $region128: #{tpu_custom_call.1} parent=116 // loop_body
                  %v451 = vld [vmem:[%s449] sm:$0xf]
                  %452 = vst [vmem:[%s450] sm:$0xf] %v451
                  %v453 = vld [vmem:[%s449 + $0x8] sm:$0xf]
                  %454 = vst [vmem:[%s450 + $0x4] sm:$0xf] %v453
                $region129: #{tpu_custom_call.1} parent=116 // loop_footer
                  %s448 = sadd.s32 1, %s444
                $region130: #{tpu_custom_call.1} parent=116 // loop_footer_branch
                  %443 = sbr.rel target = $region126
                $region131: #{tpu_custom_call.1} parent=116 // loop_exit
                  _
              $region117: #{tpu_custom_call.1} parent=101 // pred_fallthru
                _
            $region102: #{tpu_custom_call.1} parent=97 // pred_fallthru
              _
            // Predicated region
            $region103: #{tpu_custom_call.1} parent=97 // pred_check
              _
            $region104: #{tpu_custom_call.1} parent=97 // pred_check_branch
              %418 = sbr.rel (0) target = $region106
            $region105: #{tpu_custom_call.1} parent=97 // pred_region
              loop: start=0, step=1, limit=1
              $region107: #{tpu_custom_call.1} parent=105 // loop_pre_header
                _
              $region108: #{tpu_custom_call.1} parent=105 // loop_header
                %s421 = sphi 0, %s425
                %p422 = scmp.ge.s32.totalorder %s421, 1
                %s426 = sphi %s412, %s412
                %s427 = sphi %s407, %s407
              $region109: #{tpu_custom_call.1} parent=105 // loop_header_branch
                %424 = sbr.rel (%p422) target = $region113
              $region110: #{tpu_custom_call.1} parent=105 // loop_body
                %v428 = vld [vmem:[%s426] sm:$0xf]
                %429 = vst [vmem:[%s427] sm:$0xf] %v428
                %v430 = vld [vmem:[%s426 + $0x8] sm:$0xf]
                %431 = vst [vmem:[%s427 + $0x4] sm:$0xf] %v430
              $region111: #{tpu_custom_call.1} parent=105 // loop_footer
                %s425 = sadd.s32 1, %s421
              $region112: #{tpu_custom_call.1} parent=105 // loop_footer_branch
                %420 = sbr.rel target = $region108
              $region113: #{tpu_custom_call.1} parent=105 // loop_exit
                _
            $region106: #{tpu_custom_call.1} parent=97 // pred_fallthru
              _
          $region98: #{tpu_custom_call.1} parent=93 // pred_fallthru
            _
          %455 = vnop
        $region94: #{tpu_custom_call.1} parent=47 // pred_fallthru
          _
      $region48: #{tpu_custom_call.1} parent=5 // pred_fallthru
        _
      %p456 = scmp.le.s32.totalorder 1, %s17
      %p457 = scmp.lt.s32.totalorder %s17, 3
      %p458 = pnand %p456, %p457
      %p459 = pneg %p458
      // Predicated region
      $region132: #{tpu_custom_call.1} parent=5 // pred_check
        _
      $region133: #{tpu_custom_call.1} parent=5 // pred_check_branch
        %461 = sbr.rel (%p458) target = $region135
      $region134: #{tpu_custom_call.1} parent=5 // pred_region
        %s462 = ssub.s32 %s17, 1
        %s463 = sand.u32 %s58, 1
        %s464 = sand.u32 %s58, 1
        %s465 = smul.addr %s464, 32
        %s466 = scalar_lea.vmem [#allocation2], %s465
        // Predicated region
        $region136: #{tpu_custom_call.1} parent=134 // pred_check
          %p467 = pneg %p71
        $region137: #{tpu_custom_call.1} parent=134 // pred_check_branch
          %469 = sbr.rel (%p467) target = $region139
        $region138: #{tpu_custom_call.1} parent=134 // pred_region
          _
        $region139: #{tpu_custom_call.1} parent=134 // pred_fallthru
          _
        %s470 = sand.u32 %s212, 1
        %s471 = sand.u32 %s212, 1
        %s472 = smul.addr %s471, 8
        %s473 = scalar_lea.vmem [#allocation3], %s472
        // Predicated region
        $region140: #{tpu_custom_call.1} parent=134 // pred_check
          %p474 = pneg %p225
        $region141: #{tpu_custom_call.1} parent=134 // pred_check_branch
          %476 = sbr.rel (%p474) target = $region143
        $region142: #{tpu_custom_call.1} parent=134 // pred_region
          _
        $region143: #{tpu_custom_call.1} parent=134 // pred_fallthru
          _
        %s477 = smul.u32 16, %s22
        %p478 = scmp.lt.s32.totalorder %s477, 31
        %s479 = scalar_select %p478, %s477, 31
        %s480 = smul.addr %s479, 4
        %s481 = scalar_lea.vmem %s0, %s480
        %p482 = pneg %p43
        %p483 = pneg %p40
        %s484 = sand.u32 %s58, 1
        %s485 = sand.u32 %s58, 1
        %s486 = smul.addr %s485, 32
        %s487 = scalar_lea.vmem [#allocation2], %s486
        %p488 = pneg %p71
        %p489 = pneg %p68
        %p490 = pneg %p92
        %p491 = pneg %p89
        %p492 = pneg %p113
        %p493 = pneg %p110
        %p494 = pneg %p134
        %p495 = pneg %p131
        %p496 = pneg %p155
        %p497 = pneg %p152
        %p498 = pneg %p176
        %p499 = pneg %p173
        %p500 = pneg %p197
        %p501 = pneg %p194
        %s502 = sand.u32 %s212, 1
        %s503 = sand.u32 %s212, 1
        %s504 = smul.addr %s503, 8
        %s505 = scalar_lea.vmem [#allocation3], %s504
        %p506 = pneg %p225
        %p507 = pneg %p222
        %p508 = pneg %p246
        %p509 = pneg %p243
        %p510 = pneg %p267
        %p511 = pneg %p264
        %p512 = pneg %p293
        %p513 = pneg %p290
        %s514 = smul.u32 2, %s22
        %p515 = scmp.lt.s32.totalorder %s514, 3
        %s516 = scalar_select %p515, %s514, 3
        %s517 = smul.addr %s516, 8
        %s518 = scalar_lea.vmem %s11, %s517
        %s519 = smul.u32 16, %s22
        %p520 = scmp.lt.s32.totalorder %s519, 31
        %s521 = scalar_select %p520, %s519, 31
        %s522 = smul.addr %s521, 4
        %s523 = scalar_lea.vmem %s0, %s522
        %s524 = smul.u32 16, %s22
        %s525 = smul.u32 4, %s22
        %s526 = smul.u32 2, %s22
        %s527 = smul.u32 2, %s22
        %p528 = scmp.lt.s32.totalorder %s527, 3
        %s529 = scalar_select %p528, %s527, 3
        %s530 = smul.addr %s529, 8
        %s531 = scalar_lea.vmem %s11, %s530
        %s532 = smul.u32 2, %s22
        %v536 = vld [vmem:[%s466] sm:$0xff]
        %v537 = vld [vmem:[%s466 + $0x8] sm:$0xff]
        %v538 = vld [vmem:[%s466 + $0x10] sm:$0xff]
        %v539 = vld [vmem:[%s466 + $0x18] sm:$0xff]
        %v540 = vunpack.c.0.s8 %v536
        %v541 = vunpack.c.1.s8 %v536
        %v542 = vunpack.c.2.s8 %v536
        %v543 = vunpack.c.3.s8 %v536
        %v544 = vunpack.c.0.s8 %v537
        %v545 = vunpack.c.1.s8 %v537
        %v546 = vunpack.c.2.s8 %v537
        %v547 = vunpack.c.3.s8 %v537
        %v548 = vunpack.c.0.s8 %v538
        %v549 = vunpack.c.1.s8 %v538
        %v550 = vunpack.c.2.s8 %v538
        %v551 = vunpack.c.3.s8 %v538
        %v552 = vunpack.c.0.s8 %v539
        %v553 = vunpack.c.1.s8 %v539
        %v554 = vunpack.c.2.s8 %v539
        %v555 = vunpack.c.3.s8 %v539
        %v556 = vcvt.s32.f32 %v540
        %v557 = vcvt.s32.f32 %v541
        %v558 = vcvt.s32.f32 %v542
        %v559 = vcvt.s32.f32 %v543
        %v560 = vcvt.s32.f32 %v544
        %v561 = vcvt.s32.f32 %v545
        %v562 = vcvt.s32.f32 %v546
        %v563 = vcvt.s32.f32 %v547
        %v564 = vcvt.s32.f32 %v548
        %v565 = vcvt.s32.f32 %v549
        %v566 = vcvt.s32.f32 %v550
        %v567 = vcvt.s32.f32 %v551
        %v568 = vcvt.s32.f32 %v552
        %v569 = vcvt.s32.f32 %v553
        %v570 = vcvt.s32.f32 %v554
        %v571 = vcvt.s32.f32 %v555
        %v572 = vsub.f32 %v556, 1.0
        %v573 = vsub.f32 %v557, 1.0
        %v574 = vsub.f32 %v558, 1.0
        %v575 = vsub.f32 %v559, 1.0
        %v576 = vsub.f32 %v560, 1.0
        %v577 = vsub.f32 %v561, 1.0
        %v578 = vsub.f32 %v562, 1.0
        %v579 = vsub.f32 %v563, 1.0
        %v580 = vsub.f32 %v564, 1.0
        %v581 = vsub.f32 %v565, 1.0
        %v582 = vsub.f32 %v566, 1.0
        %v583 = vsub.f32 %v567, 1.0
        %v584 = vsub.f32 %v568, 1.0
        %v585 = vsub.f32 %v569, 1.0
        %v586 = vsub.f32 %v570, 1.0
        %v587 = vsub.f32 %v571, 1.0
        %v588 = vmul.f32 %v572, 1e+30
        %v589 = vmul.f32 %v573, 1e+30
        %v590 = vmul.f32 %v574, 1e+30
        %v591 = vmul.f32 %v575, 1e+30
        %v592 = vmul.f32 %v576, 1e+30
        %v593 = vmul.f32 %v577, 1e+30
        %v594 = vmul.f32 %v578, 1e+30
        %v595 = vmul.f32 %v579, 1e+30
        %v596 = vmul.f32 %v580, 1e+30
        %v597 = vmul.f32 %v581, 1e+30
        %v598 = vmul.f32 %v582, 1e+30
        %v599 = vmul.f32 %v583, 1e+30
        %v600 = vmul.f32 %v584, 1e+30
        %v601 = vmul.f32 %v585, 1e+30
        %v602 = vmul.f32 %v586, 1e+30
        %v603 = vmul.f32 %v587, 1e+30
        %v604 = vld [vmem:[%s523] sm:$0xf]
        %v605 = vld [vmem:[%s523 + $0x4] sm:$0xf]
        %v606 = vld [vmem:[%s523 + $0x8] sm:$0xf]
        %v607 = vld [vmem:[%s523 + $0xc] sm:$0xf]
        %v608 = vld [vmem:[%s523 + $0x10] sm:$0xf]
        %v609 = vld [vmem:[%s523 + $0x14] sm:$0xf]
        %v610 = vld [vmem:[%s523 + $0x18] sm:$0xf]
        %v611 = vld [vmem:[%s523 + $0x1c] sm:$0xf]
        %v612 = vld [vmem:[%s523 + $0x20] sm:$0xf]
        %v613 = vld [vmem:[%s523 + $0x24] sm:$0xf]
        %v614 = vld [vmem:[%s523 + $0x28] sm:$0xf]
        %v615 = vld [vmem:[%s523 + $0x2c] sm:$0xf]
        %v616 = vld [vmem:[%s523 + $0x30] sm:$0xf]
        %v617 = vld [vmem:[%s523 + $0x34] sm:$0xf]
        %v618 = vld [vmem:[%s523 + $0x38] sm:$0xf]
        %v619 = vld [vmem:[%s523 + $0x3c] sm:$0xf]
        %v620 = vld [vmem:[%s2] sm:$0xf]
        %v637 = vunpack.c.l.b16 %v604
        %v638 = vunpack.c.l.b16 %v605
        %v639 = vunpack.c.l.b16 %v606
        %v640 = vunpack.c.l.b16 %v607
        %v641 = vunpack.c.l.b16 %v608
        %v642 = vunpack.c.l.b16 %v609
        %v643 = vunpack.c.l.b16 %v610
        %v644 = vunpack.c.l.b16 %v611
        %v645 = vunpack.c.l.b16 %v612
        %v646 = vunpack.c.l.b16 %v613
        %v647 = vunpack.c.l.b16 %v614
        %v648 = vunpack.c.l.b16 %v615
        %v649 = vunpack.c.l.b16 %v616
        %v650 = vunpack.c.l.b16 %v617
        %v651 = vunpack.c.l.b16 %v618
        %v652 = vunpack.c.l.b16 %v619
        %v653 = vpack.c.b16 %v638, %v637
        %v654 = vpack.c.b16 %v640, %v639
        %v655 = vpack.c.b16 %v642, %v641
        %v656 = vpack.c.b16 %v644, %v643
        %v657 = vpack.c.b16 %v646, %v645
        %v658 = vpack.c.b16 %v648, %v647
        %v659 = vpack.c.b16 %v650, %v649
        %v660 = vpack.c.b16 %v652, %v651
        %vm661 = vcmask 64512
        %v663 = vsel %vm661, %v653, 0
        %v666 = vsel %vm661, %v654, 0
        %v669 = vsel %vm661, %v655, 0
        %v672 = vsel %vm661, %v656, 0
        %v675 = vsel %vm661, %v657, 0
        %v678 = vsel %vm661, %v658, 0
        %v681 = vsel %vm661, %v659, 0
        %v684 = vsel %vm661, %v660, 0
        %vm686 = vcmask 1043456
        %v688 = vsel %vm686, %v620, 0
        %690 = vmatprep.subr.bf16.mxu0 0
        %691 = vmatpush1.bf16.msra.mxu0 %v688
        %692 = vmatprep.subr.bf16.mxu0 0
        %693 = vmatpush1.bf16.msra.mxu0 0
        %694 = vmatprep.subr.bf16.mxu0 0
        %695 = vmatpush1.bf16.msra.mxu0 0
        %696 = vmatprep.subr.bf16.mxu0 0
        %697 = vmatpush1.bf16.msra.mxu0 0
        %698 = vmatprep.subr.bf16.mxu0 0
        %699 = vmatpush1.bf16.msra.mxu0 0
        %700 = vmatprep.subr.bf16.mxu0 0
        %701 = vmatpush1.bf16.msra.mxu0 0
        %702 = vmatprep.subr.bf16.mxu0 0
        %703 = vmatpush1.bf16.msra.mxu0 0
        %704 = vmatprep.subr.bf16.mxu0 0
        %705 = vmatpush1.bf16.msra.mxu0 0
        %706 = vmatprep.subr.bf16.mxu0 0
        %707 = vmatpush1.bf16.msra.mxu0 0
        %708 = vmatprep.subr.bf16.mxu0 0
        %709 = vmatpush1.bf16.msra.mxu0 0
        %710 = vmatprep.subr.bf16.mxu0 0
        %711 = vmatpush1.bf16.msra.mxu0 0
        %712 = vmatprep.subr.bf16.mxu0 0
        %713 = vmatpush1.bf16.msra.mxu0 0
        %714 = vmatprep.subr.bf16.mxu0 0
        %715 = vmatpush1.bf16.msra.mxu0 0
        %716 = vmatprep.subr.bf16.mxu0 0
        %717 = vmatpush1.bf16.msra.mxu0 0
        %718 = vmatprep.subr.bf16.mxu0 0
        %719 = vmatpush1.bf16.msra.mxu0 0
        %720 = vmatprep.subr.bf16.mxu0 0
        %721 = vmatpush1.bf16.msra.mxu0 0
        %722 = vmatprep.mubr.bf16.mxu0 0
        %723 = vmatmul.mubr.bf16.gmra.mrb[0].mxu0 %v663
        %v724 = vpop.f32.mrb[0].mxu0
        %v725 = vadd.f32 0.0, %v724
        %v726 = vpop.f32.mrb[0].mxu0
        %v727 = vpop.f32.mrb[0].mxu0
        %v728 = vadd.f32 0.0, %v727
        %v729 = vpop.f32.mrb[0].mxu0
        %730 = vmatprep.mubr.bf16.mxu0 0
        %731 = vmatmul.mubr.bf16.gmra.mrb[0].mxu0 %v666
        %v732 = vpop.f32.mrb[0].mxu0
        %v733 = vadd.f32 0.0, %v732
        %v734 = vpop.f32.mrb[0].mxu0
        %v735 = vpop.f32.mrb[0].mxu0
        %v736 = vadd.f32 0.0, %v735
        %v737 = vpop.f32.mrb[0].mxu0
        %738 = vmatprep.mubr.bf16.mxu0 0
        %739 = vmatmul.mubr.bf16.gmra.mrb[0].mxu0 %v669
        %v740 = vpop.f32.mrb[0].mxu0
        %v741 = vadd.f32 0.0, %v740
        %v742 = vpop.f32.mrb[0].mxu0
        %v743 = vpop.f32.mrb[0].mxu0
        %v744 = vadd.f32 0.0, %v743
        %v745 = vpop.f32.mrb[0].mxu0
        %746 = vmatprep.mubr.bf16.mxu0 0
        %747 = vmatmul.mubr.bf16.gmra.mrb[0].mxu0 %v672
        %v748 = vpop.f32.mrb[0].mxu0
        %v749 = vadd.f32 0.0, %v748
        %v750 = vpop.f32.mrb[0].mxu0
        %v751 = vpop.f32.mrb[0].mxu0
        %v752 = vadd.f32 0.0, %v751
        %v753 = vpop.f32.mrb[0].mxu0
        %754 = vmatprep.mubr.bf16.mxu0 0
        %755 = vmatmul.mubr.bf16.gmra.mrb[0].mxu0 %v675
        %v756 = vpop.f32.mrb[0].mxu0
        %v757 = vadd.f32 0.0, %v756
        %v758 = vpop.f32.mrb[0].mxu0
        %v759 = vpop.f32.mrb[0].mxu0
        %v760 = vadd.f32 0.0, %v759
        %v761 = vpop.f32.mrb[0].mxu0
        %762 = vmatprep.mubr.bf16.mxu0 0
        %763 = vmatmul.mubr.bf16.gmra.mrb[0].mxu0 %v678
        %v764 = vpop.f32.mrb[0].mxu0
        %v765 = vadd.f32 0.0, %v764
        %v766 = vpop.f32.mrb[0].mxu0
        %v767 = vpop.f32.mrb[0].mxu0
        %v768 = vadd.f32 0.0, %v767
        %v769 = vpop.f32.mrb[0].mxu0
        %770 = vmatprep.mubr.bf16.mxu0 0
        %771 = vmatmul.mubr.bf16.gmra.mrb[0].mxu0 %v681
        %v772 = vpop.f32.mrb[0].mxu0
        %v773 = vadd.f32 0.0, %v772
        %v774 = vpop.f32.mrb[0].mxu0
        %v775 = vpop.f32.mrb[0].mxu0
        %v776 = vadd.f32 0.0, %v775
        %v777 = vpop.f32.mrb[0].mxu0
        %778 = vmatprep.mubr.bf16.mxu0 0
        %779 = vmatmul.mubr.bf16.gmra.mrb[0].mxu0 %v684
        %v780 = vpop.f32.mrb[0].mxu0
        %v781 = vadd.f32 0.0, %v780
        %v782 = vpop.f32.mrb[0].mxu0
        %v783 = vpop.f32.mrb[0].mxu0
        %v784 = vadd.f32 0.0, %v783
        %v785 = vpop.f32.mrb[0].mxu0
        %786 = vdwg.mxu0
        %v787 = vpack.c.bf16 %v728, %v725
        %v788 = vpack.c.bf16 %v736, %v733
        %v789 = vpack.c.bf16 %v744, %v741
        %v790 = vpack.c.bf16 %v752, %v749
        %v791 = vpack.c.bf16 %v760, %v757
        %v792 = vpack.c.bf16 %v768, %v765
        %v793 = vpack.c.bf16 %v776, %v773
        %v794 = vpack.c.bf16 %v784, %v781
        %v795 = vld [vmem:[%s3] sm:$0xf]
        %v796 = vld [vmem:[%s3 + $0x4] sm:$0xf]
        %v797 = vld [vmem:[%s3 + $0x8] sm:$0xf]
        %v798 = vld [vmem:[%s3 + $0xc] sm:$0xf]
        %v799 = vld [vmem:[%s3 + $0x10] sm:$0xf]
        %v800 = vld [vmem:[%s3 + $0x14] sm:$0xf]
        %v801 = vld [vmem:[%s3 + $0x18] sm:$0xf]
        %v802 = vld [vmem:[%s3 + $0x1c] sm:$0xf]
        %v803 = vld [vmem:[%s3 + $0x20] sm:$0xf]
        %v804 = vld [vmem:[%s3 + $0x24] sm:$0xf]
        %v805 = vld [vmem:[%s3 + $0x28] sm:$0xf]
        %v806 = vld [vmem:[%s3 + $0x2c] sm:$0xf]
        %v807 = vld [vmem:[%s3 + $0x30] sm:$0xf]
        %v808 = vld [vmem:[%s3 + $0x34] sm:$0xf]
        %v809 = vld [vmem:[%s3 + $0x38] sm:$0xf]
        %v810 = vld [vmem:[%s3 + $0x3c] sm:$0xf]
        %v827 = vunpack.c.l.b16 %v795
        %v828 = vunpack.c.l.b16 %v796
        %v829 = vunpack.c.l.b16 %v797
        %v830 = vunpack.c.l.b16 %v798
        %v831 = vunpack.c.l.b16 %v799
        %v832 = vunpack.c.l.b16 %v800
        %v833 = vunpack.c.l.b16 %v801
        %v834 = vunpack.c.l.b16 %v802
        %v835 = vunpack.c.l.b16 %v803
        %v836 = vunpack.c.l.b16 %v804
        %v837 = vunpack.c.l.b16 %v805
        %v838 = vunpack.c.l.b16 %v806
        %v839 = vunpack.c.l.b16 %v807
        %v840 = vunpack.c.l.b16 %v808
        %v841 = vunpack.c.l.b16 %v809
        %v842 = vunpack.c.l.b16 %v810
        %v843 = vpack.c.b16 %v828, %v827
        %v844 = vpack.c.b16 %v830, %v829
        %v845 = vpack.c.b16 %v832, %v831
        %v846 = vpack.c.b16 %v834, %v833
        %v847 = vpack.c.b16 %v836, %v835
        %v848 = vpack.c.b16 %v838, %v837
        %v849 = vpack.c.b16 %v840, %v839
        %v850 = vpack.c.b16 %v842, %v841
        %859 = vmatprep.subr.bf16.mxu0 0
        %860 = vmatpush1.bf16.msra.mxu0 %v843
        %861 = vmatprep.subr.bf16.mxu0 0
        %862 = vmatpush1.bf16.msra.mxu0 %v844
        %863 = vmatprep.subr.bf16.mxu0 0
        %864 = vmatpush1.bf16.msra.mxu0 %v845
        %865 = vmatprep.subr.bf16.mxu0 0
        %866 = vmatpush1.bf16.msra.mxu0 %v846
        %867 = vmatprep.subr.bf16.mxu0 0
        %868 = vmatpush1.bf16.msra.mxu0 %v847
        %869 = vmatprep.subr.bf16.mxu0 0
        %870 = vmatpush1.bf16.msra.mxu0 %v848
        %871 = vmatprep.subr.bf16.mxu0 0
        %872 = vmatpush1.bf16.msra.mxu0 %v849
        %873 = vmatprep.subr.bf16.mxu0 0
        %874 = vmatpush1.bf16.msra.mxu0 %v850
        %875 = vmatprep.subr.bf16.mxu0 0
        %876 = vmatpush1.bf16.msra.mxu0 0
        %877 = vmatprep.subr.bf16.mxu0 0
        %878 = vmatpush1.bf16.msra.mxu0 0
        %879 = vmatprep.subr.bf16.mxu0 0
        %880 = vmatpush1.bf16.msra.mxu0 0
        %881 = vmatprep.subr.bf16.mxu0 0
        %882 = vmatpush1.bf16.msra.mxu0 0
        %883 = vmatprep.subr.bf16.mxu0 0
        %884 = vmatpush1.bf16.msra.mxu0 0
        %885 = vmatprep.subr.bf16.mxu0 0
        %886 = vmatpush1.bf16.msra.mxu0 0
        %887 = vmatprep.subr.bf16.mxu0 0
        %888 = vmatpush1.bf16.msra.mxu0 0
        %889 = vmatprep.subr.bf16.mxu0 0
        %890 = vmatpush1.bf16.msra.mxu0 0
        %891 = vmatprep.mubr.bf16.mxu0 0
        %892 = vmatmul.mubr.bf16.gmra.mrb[0].mxu0 %v787
        %v893 = vpop.f32.mrb[0].mxu0
        %v894 = vadd.f32 0.0, %v893
        %v895 = vpop.f32.mrb[0].mxu0
        %v896 = vpop.f32.mrb[0].mxu0
        %v897 = vadd.f32 0.0, %v896
        %v898 = vpop.f32.mrb[0].mxu0
        %899 = vmatprep.mubr.bf16.mxu0 0
        %900 = vmatmul.mubr.bf16.gmra.mrb[0].mxu0 %v788
        %v901 = vpop.f32.mrb[0].mxu0
        %v902 = vadd.f32 0.0, %v901
        %v903 = vpop.f32.mrb[0].mxu0
        %v904 = vpop.f32.mrb[0].mxu0
        %v905 = vadd.f32 0.0, %v904
        %v906 = vpop.f32.mrb[0].mxu0
        %907 = vmatprep.mubr.bf16.mxu0 0
        %908 = vmatmul.mubr.bf16.gmra.mrb[0].mxu0 %v789
        %v909 = vpop.f32.mrb[0].mxu0
        %v910 = vadd.f32 0.0, %v909
        %v911 = vpop.f32.mrb[0].mxu0
        %v912 = vpop.f32.mrb[0].mxu0
        %v913 = vadd.f32 0.0, %v912
        %v914 = vpop.f32.mrb[0].mxu0
        %915 = vmatprep.mubr.bf16.mxu0 0
        %916 = vmatmul.mubr.bf16.gmra.mrb[0].mxu0 %v790
        %v917 = vpop.f32.mrb[0].mxu0
        %v918 = vadd.f32 0.0, %v917
        %v919 = vpop.f32.mrb[0].mxu0
        %v920 = vpop.f32.mrb[0].mxu0
        %v921 = vadd.f32 0.0, %v920
        %v922 = vpop.f32.mrb[0].mxu0
        %923 = vmatprep.mubr.bf16.mxu0 0
        %924 = vmatmul.mubr.bf16.gmra.mrb[0].mxu0 %v791
        %v925 = vpop.f32.mrb[0].mxu0
        %v926 = vadd.f32 0.0, %v925
        %v927 = vpop.f32.mrb[0].mxu0
        %v928 = vpop.f32.mrb[0].mxu0
        %v929 = vadd.f32 0.0, %v928
        %v930 = vpop.f32.mrb[0].mxu0
        %931 = vmatprep.mubr.bf16.mxu0 0
        %932 = vmatmul.mubr.bf16.gmra.mrb[0].mxu0 %v792
        %v933 = vpop.f32.mrb[0].mxu0
        %v934 = vadd.f32 0.0, %v933
        %v935 = vpop.f32.mrb[0].mxu0
        %v936 = vpop.f32.mrb[0].mxu0
        %v937 = vadd.f32 0.0, %v936
        %v938 = vpop.f32.mrb[0].mxu0
        %939 = vmatprep.mubr.bf16.mxu0 0
        %940 = vmatmul.mubr.bf16.gmra.mrb[0].mxu0 %v793
        %v941 = vpop.f32.mrb[0].mxu0
        %v942 = vadd.f32 0.0, %v941
        %v943 = vpop.f32.mrb[0].mxu0
        %v944 = vpop.f32.mrb[0].mxu0
        %v945 = vadd.f32 0.0, %v944
        %v946 = vpop.f32.mrb[0].mxu0
        %947 = vmatprep.mubr.bf16.mxu0 0
        %948 = vmatmul.mubr.bf16.gmra.mrb[0].mxu0 %v794
        %v949 = vpop.f32.mrb[0].mxu0
        %v950 = vadd.f32 0.0, %v949
        %v951 = vpop.f32.mrb[0].mxu0
        %v952 = vpop.f32.mrb[0].mxu0
        %v953 = vadd.f32 0.0, %v952
        %v954 = vpop.f32.mrb[0].mxu0
        %955 = vdwg.mxu0
        %956 = vxpose.xlu0.b32.start [1/16] %v894, 128
        %957 = vxpose.xlu0.b32.cont [2/16] %v897, 128
        %958 = vxpose.xlu0.b32.cont [3/16] %v902, 128
        %959 = vxpose.xlu0.b32.cont [4/16] %v905, 128
        %960 = vxpose.xlu0.b32.cont [5/16] %v910, 128
        %961 = vxpose.xlu0.b32.cont [6/16] %v913, 128
        %962 = vxpose.xlu0.b32.cont [7/16] %v918, 128
        %963 = vxpose.xlu0.b32.cont [8/16] %v921, 128
        %964 = vxpose.xlu0.b32.cont [9/16] %v926, 128
        %965 = vxpose.xlu0.b32.cont [10/16] %v929, 128
        %966 = vxpose.xlu0.b32.cont [11/16] %v934, 128
        %967 = vxpose.xlu0.b32.cont [12/16] %v937, 128
        %968 = vxpose.xlu0.b32.cont [13/16] %v942, 128
        %969 = vxpose.xlu0.b32.cont [14/16] %v945, 128
        %970 = vxpose.xlu0.b32.cont [15/16] %v950, 128
        %971 = vxpose.xlu0.b32.end [16/16] %v953, 128
        %v972 = vpop.trf.xlu0
        %v973 = vpop.trf.xlu0
        %v974 = vpop.trf.xlu0
        %v975 = vpop.trf.xlu0
        %v976 = vpop.trf.xlu0
        %v977 = vpop.trf.xlu0
        %v978 = vpop.trf.xlu0
        %v979 = vpop.trf.xlu0
        %v980 = vpop.trf.xlu0
        %v981 = vpop.trf.xlu0
        %v982 = vpop.trf.xlu0
        %v983 = vpop.trf.xlu0
        %v984 = vpop.trf.xlu0
        %v985 = vpop.trf.xlu0
        %v986 = vpop.trf.xlu0
        %v987 = vpop.trf.xlu0
        %v988 = vlaneseq
        %v989 = vand.u32 %v988, 127
        %vm990 = vcmp.ge.s32.totalorder %v989, 0
        %vm991 = vcmp.lt.s32.totalorder %v989, 64
        %vm992 = vmand %vm990, %vm991
        %v993 = vsel %vm992, 1, 0
        %vm994 = vcmp.eq.s32.totalorder %v993, 1
        %vm995 = vmpackc.low %vm994, %vm994
        %v996 = vsel %vm995, 65537, 0
        %v997 = vlaneseq
        %v998 = vshrl.u32 %v997, 7
        %v999 = vsub.s32 0, %v998
        %v1000 = vrot.slane %v996, %v999
        %vm1001 = vcmp.ne.s16.totalorder %v1000, 0
        %v1002 = vsel %vm1001, %v787, 0
        %v1003 = vsel %vm1001, %v788, 0
        %v1004 = vsel %vm1001, %v789, 0
        %v1005 = vsel %vm1001, %v790, 0
        %v1006 = vsel %vm1001, %v791, 0
        %v1007 = vsel %vm1001, %v792, 0
        %v1008 = vsel %vm1001, %v793, 0
        %v1009 = vsel %vm1001, %v794, 0
        %1011 = vset.pattern.permute.xlu0 2
        %1012 = vperm.xlu0 %1011, %v894
        %v1013 = vpop.permute.xlu0 %1012
        %1016 = vset.pattern.permute.xlu0 2
        %1017 = vperm.xlu0 %1016, %v897
        %v1018 = vpop.permute.xlu0 %1017
        %1021 = vset.pattern.permute.xlu0 2
        %1022 = vperm.xlu0 %1021, %v902
        %v1023 = vpop.permute.xlu0 %1022
        %1026 = vset.pattern.permute.xlu0 2
        %1027 = vperm.xlu0 %1026, %v905
        %v1028 = vpop.permute.xlu0 %1027
        %1031 = vset.pattern.permute.xlu0 2
        %1032 = vperm.xlu0 %1031, %v910
        %v1033 = vpop.permute.xlu0 %1032
        %1036 = vset.pattern.permute.xlu0 2
        %1037 = vperm.xlu0 %1036, %v913
        %v1038 = vpop.permute.xlu0 %1037
        %1041 = vset.pattern.permute.xlu0 2
        %1042 = vperm.xlu0 %1041, %v918
        %v1043 = vpop.permute.xlu0 %1042
        %1046 = vset.pattern.permute.xlu0 2
        %1047 = vperm.xlu0 %1046, %v921
        %v1048 = vpop.permute.xlu0 %1047
        %1051 = vset.pattern.permute.xlu0 2
        %1052 = vperm.xlu0 %1051, %v926
        %v1053 = vpop.permute.xlu0 %1052
        %1056 = vset.pattern.permute.xlu0 2
        %1057 = vperm.xlu0 %1056, %v929
        %v1058 = vpop.permute.xlu0 %1057
        %1061 = vset.pattern.permute.xlu0 2
        %1062 = vperm.xlu0 %1061, %v934
        %v1063 = vpop.permute.xlu0 %1062
        %1066 = vset.pattern.permute.xlu0 2
        %1067 = vperm.xlu0 %1066, %v937
        %v1068 = vpop.permute.xlu0 %1067
        %1071 = vset.pattern.permute.xlu0 2
        %1072 = vperm.xlu0 %1071, %v942
        %v1073 = vpop.permute.xlu0 %1072
        %1076 = vset.pattern.permute.xlu0 2
        %1077 = vperm.xlu0 %1076, %v945
        %v1078 = vpop.permute.xlu0 %1077
        %1081 = vset.pattern.permute.xlu0 2
        %1082 = vperm.xlu0 %1081, %v950
        %v1083 = vpop.permute.xlu0 %1082
        %1086 = vset.pattern.permute.xlu0 2
        %1087 = vperm.xlu0 %1086, %v953
        %v1088 = vpop.permute.xlu0 %1087
        %v1090 = vlaneseq
        %v1091 = vshrl.u32 %v1090, 7
        %v1092 = vsub.s32 0, %v1091
        %v1093 = vrot.slane %v972, %v1092
        %v1094 = vadd.f32 %v1013, %v1093
        %v1095 = vadd.f32 %v1018, %v1093
        %v1096 = vadd.f32 %v1023, %v1093
        %v1097 = vadd.f32 %v1028, %v1093
        %v1098 = vadd.f32 %v1033, %v1093
        %v1099 = vadd.f32 %v1038, %v1093
        %v1100 = vadd.f32 %v1043, %v1093
        %v1101 = vadd.f32 %v1048, %v1093
        %v1102 = vadd.f32 %v1053, %v1093
        %v1103 = vadd.f32 %v1058, %v1093
        %v1104 = vadd.f32 %v1063, %v1093
        %v1105 = vadd.f32 %v1068, %v1093
        %v1106 = vadd.f32 %v1073, %v1093
        %v1107 = vadd.f32 %v1078, %v1093
        %v1108 = vadd.f32 %v1083, %v1093
        %v1109 = vadd.f32 %v1088, %v1093
        %v1110 = vmul.f32 %v1094, 0.2
        %v1111 = vmul.f32 %v1095, 0.2
        %v1112 = vmul.f32 %v1096, 0.2
        %v1113 = vmul.f32 %v1097, 0.2
        %v1114 = vmul.f32 %v1098, 0.2
        %v1115 = vmul.f32 %v1099, 0.2
        %v1116 = vmul.f32 %v1100, 0.2
        %v1117 = vmul.f32 %v1101, 0.2
        %v1118 = vmul.f32 %v1102, 0.2
        %v1119 = vmul.f32 %v1103, 0.2
        %v1120 = vmul.f32 %v1104, 0.2
        %v1121 = vmul.f32 %v1105, 0.2
        %v1122 = vmul.f32 %v1106, 0.2
        %v1123 = vmul.f32 %v1107, 0.2
        %v1124 = vmul.f32 %v1108, 0.2
        %v1125 = vmul.f32 %v1109, 0.2
        %v1126 = vmax.f32 %v1094, %v1110
        %v1127 = vmax.f32 %v1095, %v1111
        %v1128 = vmax.f32 %v1096, %v1112
        %v1129 = vmax.f32 %v1097, %v1113
        %v1130 = vmax.f32 %v1098, %v1114
        %v1131 = vmax.f32 %v1099, %v1115
        %v1132 = vmax.f32 %v1100, %v1116
        %v1133 = vmax.f32 %v1101, %v1117
        %v1134 = vmax.f32 %v1102, %v1118
        %v1135 = vmax.f32 %v1103, %v1119
        %v1136 = vmax.f32 %v1104, %v1120
        %v1137 = vmax.f32 %v1105, %v1121
        %v1138 = vmax.f32 %v1106, %v1122
        %v1139 = vmax.f32 %v1107, %v1123
        %v1140 = vmax.f32 %v1108, %v1124
        %v1141 = vmax.f32 %v1109, %v1125
        %v1142 = vadd.f32 %v1126, %v588
        %v1143 = vadd.f32 %v1127, %v589
        %v1144 = vadd.f32 %v1128, %v590
        %v1145 = vadd.f32 %v1129, %v591
        %v1146 = vadd.f32 %v1130, %v592
        %v1147 = vadd.f32 %v1131, %v593
        %v1148 = vadd.f32 %v1132, %v594
        %v1149 = vadd.f32 %v1133, %v595
        %v1150 = vadd.f32 %v1134, %v596
        %v1151 = vadd.f32 %v1135, %v597
        %v1152 = vadd.f32 %v1136, %v598
        %v1153 = vadd.f32 %v1137, %v599
        %v1154 = vadd.f32 %v1138, %v600
        %v1155 = vadd.f32 %v1139, %v601
        %v1156 = vadd.f32 %v1140, %v602
        %v1157 = vadd.f32 %v1141, %v603
        %1158 = vmax.xlane.f32.xlu0 %v1142
        %v1159 = vpop.xlane.xlu0 %1158
        %1160 = vmax.xlane.f32.xlu0 %v1143
        %v1161 = vpop.xlane.xlu0 %1160
        %1162 = vmax.xlane.f32.xlu0 %v1144
        %v1163 = vpop.xlane.xlu0 %1162
        %1164 = vmax.xlane.f32.xlu0 %v1145
        %v1165 = vpop.xlane.xlu0 %1164
        %1166 = vmax.xlane.f32.xlu0 %v1146
        %v1167 = vpop.xlane.xlu0 %1166
        %1168 = vmax.xlane.f32.xlu0 %v1147
        %v1169 = vpop.xlane.xlu0 %1168
        %1170 = vmax.xlane.f32.xlu0 %v1148
        %v1171 = vpop.xlane.xlu0 %1170
        %1172 = vmax.xlane.f32.xlu0 %v1149
        %v1173 = vpop.xlane.xlu0 %1172
        %1174 = vmax.xlane.f32.xlu0 %v1150
        %v1175 = vpop.xlane.xlu0 %1174
        %1176 = vmax.xlane.f32.xlu0 %v1151
        %v1177 = vpop.xlane.xlu0 %1176
        %1178 = vmax.xlane.f32.xlu0 %v1152
        %v1179 = vpop.xlane.xlu0 %1178
        %1180 = vmax.xlane.f32.xlu0 %v1153
        %v1181 = vpop.xlane.xlu0 %1180
        %1182 = vmax.xlane.f32.xlu0 %v1154
        %v1183 = vpop.xlane.xlu0 %1182
        %1184 = vmax.xlane.f32.xlu0 %v1155
        %v1185 = vpop.xlane.xlu0 %1184
        %1186 = vmax.xlane.f32.xlu0 %v1156
        %v1187 = vpop.xlane.xlu0 %1186
        %1188 = vmax.xlane.f32.xlu0 %v1157
        %v1189 = vpop.xlane.xlu0 %1188
        %v1190 = vsub.f32 %v1142, %v1159
        %v1191 = vsub.f32 %v1143, %v1161
        %v1192 = vsub.f32 %v1144, %v1163
        %v1193 = vsub.f32 %v1145, %v1165
        %v1194 = vsub.f32 %v1146, %v1167
        %v1195 = vsub.f32 %v1147, %v1169
        %v1196 = vsub.f32 %v1148, %v1171
        %v1197 = vsub.f32 %v1149, %v1173
        %v1198 = vsub.f32 %v1150, %v1175
        %v1199 = vsub.f32 %v1151, %v1177
        %v1200 = vsub.f32 %v1152, %v1179
        %v1201 = vsub.f32 %v1153, %v1181
        %v1202 = vsub.f32 %v1154, %v1183
        %v1203 = vsub.f32 %v1155, %v1185
        %v1204 = vsub.f32 %v1156, %v1187
        %v1205 = vsub.f32 %v1157, %v1189
        %v1206 = vmul.f32 %v1190, 1.442695
        %v1207 = vpow.pop %v1206
        %v1208 = vmul.f32 %v1191, 1.442695
        %v1209 = vpow.pop %v1208
        %v1210 = vmul.f32 %v1192, 1.442695
        %v1211 = vpow.pop %v1210
        %v1212 = vmul.f32 %v1193, 1.442695
        %v1213 = vpow.pop %v1212
        %v1214 = vmul.f32 %v1194, 1.442695
        %v1215 = vpow.pop %v1214
        %v1216 = vmul.f32 %v1195, 1.442695
        %v1217 = vpow.pop %v1216
        %v1218 = vmul.f32 %v1196, 1.442695
        %v1219 = vpow.pop %v1218
        %v1220 = vmul.f32 %v1197, 1.442695
        %v1221 = vpow.pop %v1220
        %v1222 = vmul.f32 %v1198, 1.442695
        %v1223 = vpow.pop %v1222
        %v1224 = vmul.f32 %v1199, 1.442695
        %v1225 = vpow.pop %v1224
        %v1226 = vmul.f32 %v1200, 1.442695
        %v1227 = vpow.pop %v1226
        %v1228 = vmul.f32 %v1201, 1.442695
        %v1229 = vpow.pop %v1228
        %v1230 = vmul.f32 %v1202, 1.442695
        %v1231 = vpow.pop %v1230
        %v1232 = vmul.f32 %v1203, 1.442695
        %v1233 = vpow.pop %v1232
        %v1234 = vmul.f32 %v1204, 1.442695
        %v1235 = vpow.pop %v1234
        %v1236 = vmul.f32 %v1205, 1.442695
        %v1237 = vpow.pop %v1236
        %1238 = vadd.xlane.f32.xlu0 %v1207
        %v1239 = vpop.xlane.xlu0 %1238
        %1240 = vadd.xlane.f32.xlu0 %v1209
        %v1241 = vpop.xlane.xlu0 %1240
        %1242 = vadd.xlane.f32.xlu0 %v1211
        %v1243 = vpop.xlane.xlu0 %1242
        %1244 = vadd.xlane.f32.xlu0 %v1213
        %v1245 = vpop.xlane.xlu0 %1244
        %1246 = vadd.xlane.f32.xlu0 %v1215
        %v1247 = vpop.xlane.xlu0 %1246
        %1248 = vadd.xlane.f32.xlu0 %v1217
        %v1249 = vpop.xlane.xlu0 %1248
        %1250 = vadd.xlane.f32.xlu0 %v1219
        %v1251 = vpop.xlane.xlu0 %1250
        %1252 = vadd.xlane.f32.xlu0 %v1221
        %v1253 = vpop.xlane.xlu0 %1252
        %1254 = vadd.xlane.f32.xlu0 %v1223
        %v1255 = vpop.xlane.xlu0 %1254
        %1256 = vadd.xlane.f32.xlu0 %v1225
        %v1257 = vpop.xlane.xlu0 %1256
        %1258 = vadd.xlane.f32.xlu0 %v1227
        %v1259 = vpop.xlane.xlu0 %1258
        %1260 = vadd.xlane.f32.xlu0 %v1229
        %v1261 = vpop.xlane.xlu0 %1260
        %1262 = vadd.xlane.f32.xlu0 %v1231
        %v1263 = vpop.xlane.xlu0 %1262
        %1264 = vadd.xlane.f32.xlu0 %v1233
        %v1265 = vpop.xlane.xlu0 %1264
        %1266 = vadd.xlane.f32.xlu0 %v1235
        %v1267 = vpop.xlane.xlu0 %1266
        %1268 = vadd.xlane.f32.xlu0 %v1237
        %v1269 = vpop.xlane.xlu0 %1268
        %v1270 = vmax.f32 %v1239, 1e-20
        %v1271 = vmax.f32 %v1241, 1e-20
        %v1272 = vmax.f32 %v1243, 1e-20
        %v1273 = vmax.f32 %v1245, 1e-20
        %v1274 = vmax.f32 %v1247, 1e-20
        %v1275 = vmax.f32 %v1249, 1e-20
        %v1276 = vmax.f32 %v1251, 1e-20
        %v1277 = vmax.f32 %v1253, 1e-20
        %v1278 = vmax.f32 %v1255, 1e-20
        %v1279 = vmax.f32 %v1257, 1e-20
        %v1280 = vmax.f32 %v1259, 1e-20
        %v1281 = vmax.f32 %v1261, 1e-20
        %v1282 = vmax.f32 %v1263, 1e-20
        %v1283 = vmax.f32 %v1265, 1e-20
        %v1284 = vmax.f32 %v1267, 1e-20
        %v1285 = vmax.f32 %v1269, 1e-20
        %v1286 = vpack.c.bf16 %v1209, %v1207
        %v1287 = vpack.c.bf16 %v1213, %v1211
        %v1288 = vpack.c.bf16 %v1217, %v1215
        %v1289 = vpack.c.bf16 %v1221, %v1219
        %v1290 = vpack.c.bf16 %v1225, %v1223
        %v1291 = vpack.c.bf16 %v1229, %v1227
        %v1292 = vpack.c.bf16 %v1233, %v1231
        %v1293 = vpack.c.bf16 %v1237, %v1235
        %1294 = vmatprep.subr.bf16.mxu0 0
        %1295 = vmatpush1.bf16.msra.mxu0 %v1002
        %1296 = vmatprep.subr.bf16.mxu0 0
        %1297 = vmatpush1.bf16.msra.mxu0 %v1003
        %1298 = vmatprep.subr.bf16.mxu0 0
        %1299 = vmatpush1.bf16.msra.mxu0 %v1004
        %1300 = vmatprep.subr.bf16.mxu0 0
        %1301 = vmatpush1.bf16.msra.mxu0 %v1005
        %1302 = vmatprep.subr.bf16.mxu0 0
        %1303 = vmatpush1.bf16.msra.mxu0 %v1006
        %1304 = vmatprep.subr.bf16.mxu0 0
        %1305 = vmatpush1.bf16.msra.mxu0 %v1007
        %1306 = vmatprep.subr.bf16.mxu0 0
        %1307 = vmatpush1.bf16.msra.mxu0 %v1008
        %1308 = vmatprep.subr.bf16.mxu0 0
        %1309 = vmatpush1.bf16.msra.mxu0 %v1009
        %1310 = vmatprep.subr.bf16.mxu0 0
        %1311 = vmatpush1.bf16.msra.mxu0 0
        %1312 = vmatprep.subr.bf16.mxu0 0
        %1313 = vmatpush1.bf16.msra.mxu0 0
        %1314 = vmatprep.subr.bf16.mxu0 0
        %1315 = vmatpush1.bf16.msra.mxu0 0
        %1316 = vmatprep.subr.bf16.mxu0 0
        %1317 = vmatpush1.bf16.msra.mxu0 0
        %1318 = vmatprep.subr.bf16.mxu0 0
        %1319 = vmatpush1.bf16.msra.mxu0 0
        %1320 = vmatprep.subr.bf16.mxu0 0
        %1321 = vmatpush1.bf16.msra.mxu0 0
        %1322 = vmatprep.subr.bf16.mxu0 0
        %1323 = vmatpush1.bf16.msra.mxu0 0
        %1324 = vmatprep.subr.bf16.mxu0 0
        %1325 = vmatpush1.bf16.msra.mxu0 0
        %1326 = vmatprep.mubr.bf16.mxu0 0
        %1327 = vmatmul.mubr.bf16.gmra.mrb[0].mxu0 %v1286
        %v1328 = vpop.f32.mrb[0].mxu0
        %v1329 = vadd.f32 0.0, %v1328
        %v1330 = vpop.f32.mrb[0].mxu0
        %v1331 = vpop.f32.mrb[0].mxu0
        %v1332 = vadd.f32 0.0, %v1331
        %v1333 = vpop.f32.mrb[0].mxu0
        %1334 = vmatprep.mubr.bf16.mxu0 0
        %1335 = vmatmul.mubr.bf16.gmra.mrb[0].mxu0 %v1287
        %v1336 = vpop.f32.mrb[0].mxu0
        %v1337 = vadd.f32 0.0, %v1336
        %v1338 = vpop.f32.mrb[0].mxu0
        %v1339 = vpop.f32.mrb[0].mxu0
        %v1340 = vadd.f32 0.0, %v1339
        %v1341 = vpop.f32.mrb[0].mxu0
        %1342 = vmatprep.mubr.bf16.mxu0 0
        %1343 = vmatmul.mubr.bf16.gmra.mrb[0].mxu0 %v1288
        %v1344 = vpop.f32.mrb[0].mxu0
        %v1345 = vadd.f32 0.0, %v1344
        %v1346 = vpop.f32.mrb[0].mxu0
        %v1347 = vpop.f32.mrb[0].mxu0
        %v1348 = vadd.f32 0.0, %v1347
        %v1349 = vpop.f32.mrb[0].mxu0
        %1350 = vmatprep.mubr.bf16.mxu0 0
        %1351 = vmatmul.mubr.bf16.gmra.mrb[0].mxu0 %v1289
        %v1352 = vpop.f32.mrb[0].mxu0
        %v1353 = vadd.f32 0.0, %v1352
        %v1354 = vpop.f32.mrb[0].mxu0
        %v1355 = vpop.f32.mrb[0].mxu0
        %v1356 = vadd.f32 0.0, %v1355
        %v1357 = vpop.f32.mrb[0].mxu0
        %1358 = vmatprep.mubr.bf16.mxu0 0
        %1359 = vmatmul.mubr.bf16.gmra.mrb[0].mxu0 %v1290
        %v1360 = vpop.f32.mrb[0].mxu0
        %v1361 = vadd.f32 0.0, %v1360
        %v1362 = vpop.f32.mrb[0].mxu0
        %v1363 = vpop.f32.mrb[0].mxu0
        %v1364 = vadd.f32 0.0, %v1363
        %v1365 = vpop.f32.mrb[0].mxu0
        %1366 = vmatprep.mubr.bf16.mxu0 0
        %1367 = vmatmul.mubr.bf16.gmra.mrb[0].mxu0 %v1291
        %v1368 = vpop.f32.mrb[0].mxu0
        %v1369 = vadd.f32 0.0, %v1368
        %v1370 = vpop.f32.mrb[0].mxu0
        %v1371 = vpop.f32.mrb[0].mxu0
        %v1372 = vadd.f32 0.0, %v1371
        %v1373 = vpop.f32.mrb[0].mxu0
        %1374 = vmatprep.mubr.bf16.mxu0 0
        %1375 = vmatmul.mubr.bf16.gmra.mrb[0].mxu0 %v1292
        %v1376 = vpop.f32.mrb[0].mxu0
        %v1377 = vadd.f32 0.0, %v1376
        %v1378 = vpop.f32.mrb[0].mxu0
        %v1379 = vpop.f32.mrb[0].mxu0
        %v1380 = vadd.f32 0.0, %v1379
        %v1381 = vpop.f32.mrb[0].mxu0
        %1382 = vmatprep.mubr.bf16.mxu0 0
        %1383 = vmatmul.mubr.bf16.gmra.mrb[0].mxu0 %v1293
        %v1384 = vpop.f32.mrb[0].mxu0
        %v1385 = vadd.f32 0.0, %v1384
        %v1386 = vpop.f32.mrb[0].mxu0
        %v1387 = vpop.f32.mrb[0].mxu0
        %v1388 = vadd.f32 0.0, %v1387
        %v1389 = vpop.f32.mrb[0].mxu0
        %1390 = vdwg.mxu0
        %v1391 = vrcp.pop %v1270
        %v1392 = vrcp.pop %v1271
        %v1393 = vrcp.pop %v1272
        %v1394 = vrcp.pop %v1273
        %v1395 = vrcp.pop %v1274
        %v1396 = vrcp.pop %v1275
        %v1397 = vrcp.pop %v1276
        %v1398 = vrcp.pop %v1277
        %v1399 = vrcp.pop %v1278
        %v1400 = vrcp.pop %v1279
        %v1401 = vrcp.pop %v1280
        %v1402 = vrcp.pop %v1281
        %v1403 = vrcp.pop %v1282
        %v1404 = vrcp.pop %v1283
        %v1405 = vrcp.pop %v1284
        %v1406 = vrcp.pop %v1285
        %v1407 = vmul.f32 %v1329, %v1391
        %v1408 = vmul.f32 %v1332, %v1392
        %v1409 = vmul.f32 %v1337, %v1393
        %v1410 = vmul.f32 %v1340, %v1394
        %v1411 = vmul.f32 %v1345, %v1395
        %v1412 = vmul.f32 %v1348, %v1396
        %v1413 = vmul.f32 %v1353, %v1397
        %v1414 = vmul.f32 %v1356, %v1398
        %v1415 = vmul.f32 %v1361, %v1399
        %v1416 = vmul.f32 %v1364, %v1400
        %v1417 = vmul.f32 %v1369, %v1401
        %v1418 = vmul.f32 %v1372, %v1402
        %v1419 = vmul.f32 %v1377, %v1403
        %v1420 = vmul.f32 %v1380, %v1404
        %v1421 = vmul.f32 %v1385, %v1405
        %v1422 = vmul.f32 %v1388, %v1406
        %vm1423 = vcmp.ge.s32.totalorder %v989, 64
        %vm1424 = vcmp.lt.s32.totalorder %v989, 128
        %vm1425 = vmand %vm1423, %vm1424
        %v1426 = vsel %vm1425, 1, 0
        %vm1427 = vcmp.eq.s32.totalorder %v1426, 1
        %vm1428 = vmpackc.low %vm1427, %vm1427
        %v1429 = vsel %vm1428, 65537, 0
        %v1430 = vlaneseq
        %v1431 = vshrl.u32 %v1430, 7
        %v1432 = vsub.s32 0, %v1431
        %v1433 = vrot.slane %v1429, %v1432
        %vm1434 = vcmp.ne.s16.totalorder %v1433, 0
        %v1435 = vsel %vm1434, %v787, 0
        %v1436 = vsel %vm1434, %v788, 0
        %v1437 = vsel %vm1434, %v789, 0
        %v1438 = vsel %vm1434, %v790, 0
        %v1439 = vsel %vm1434, %v791, 0
        %v1440 = vsel %vm1434, %v792, 0
        %v1441 = vsel %vm1434, %v793, 0
        %v1442 = vsel %vm1434, %v794, 0
        %1443 = vset.pattern.permute.xlu0 3
        %1444 = vperm.xlu0 %1443, %v894
        %v1445 = vpop.permute.xlu0 %1444
        %1447 = vset.pattern.permute.xlu0 3
        %1448 = vperm.xlu0 %1447, %v897
        %v1449 = vpop.permute.xlu0 %1448
        %1451 = vset.pattern.permute.xlu0 3
        %1452 = vperm.xlu0 %1451, %v902
        %v1453 = vpop.permute.xlu0 %1452
        %1455 = vset.pattern.permute.xlu0 3
        %1456 = vperm.xlu0 %1455, %v905
        %v1457 = vpop.permute.xlu0 %1456
        %1459 = vset.pattern.permute.xlu0 3
        %1460 = vperm.xlu0 %1459, %v910
        %v1461 = vpop.permute.xlu0 %1460
        %1463 = vset.pattern.permute.xlu0 3
        %1464 = vperm.xlu0 %1463, %v913
        %v1465 = vpop.permute.xlu0 %1464
        %1467 = vset.pattern.permute.xlu0 3
        %1468 = vperm.xlu0 %1467, %v918
        %v1469 = vpop.permute.xlu0 %1468
        %1471 = vset.pattern.permute.xlu0 3
        %1472 = vperm.xlu0 %1471, %v921
        %v1473 = vpop.permute.xlu0 %1472
        %1475 = vset.pattern.permute.xlu0 3
        %1476 = vperm.xlu0 %1475, %v926
        %v1477 = vpop.permute.xlu0 %1476
        %1479 = vset.pattern.permute.xlu0 3
        %1480 = vperm.xlu0 %1479, %v929
        %v1481 = vpop.permute.xlu0 %1480
        %1483 = vset.pattern.permute.xlu0 3
        %1484 = vperm.xlu0 %1483, %v934
        %v1485 = vpop.permute.xlu0 %1484
        %1487 = vset.pattern.permute.xlu0 3
        %1488 = vperm.xlu0 %1487, %v937
        %v1489 = vpop.permute.xlu0 %1488
        %1491 = vset.pattern.permute.xlu0 3
        %1492 = vperm.xlu0 %1491, %v942
        %v1493 = vpop.permute.xlu0 %1492
        %1495 = vset.pattern.permute.xlu0 3
        %1496 = vperm.xlu0 %1495, %v945
        %v1497 = vpop.permute.xlu0 %1496
        %1499 = vset.pattern.permute.xlu0 3
        %1500 = vperm.xlu0 %1499, %v950
        %v1501 = vpop.permute.xlu0 %1500
        %1503 = vset.pattern.permute.xlu0 3
        %1504 = vperm.xlu0 %1503, %v953
        %v1505 = vpop.permute.xlu0 %1504
        %v1507 = vlaneseq
        %v1508 = vshrl.u32 %v1507, 7
        %v1509 = vsub.s32 1, %v1508
        %v1510 = vrot.slane %v972, %v1509
        %v1511 = vadd.f32 %v1445, %v1510
        %v1512 = vadd.f32 %v1449, %v1510
        %v1513 = vadd.f32 %v1453, %v1510
        %v1514 = vadd.f32 %v1457, %v1510
        %v1515 = vadd.f32 %v1461, %v1510
        %v1516 = vadd.f32 %v1465, %v1510
        %v1517 = vadd.f32 %v1469, %v1510
        %v1518 = vadd.f32 %v1473, %v1510
        %v1519 = vadd.f32 %v1477, %v1510
        %v1520 = vadd.f32 %v1481, %v1510
        %v1521 = vadd.f32 %v1485, %v1510
        %v1522 = vadd.f32 %v1489, %v1510
        %v1523 = vadd.f32 %v1493, %v1510
        %v1524 = vadd.f32 %v1497, %v1510
        %v1525 = vadd.f32 %v1501, %v1510
        %v1526 = vadd.f32 %v1505, %v1510
        %v1527 = vmul.f32 %v1511, 0.2
        %v1528 = vmul.f32 %v1512, 0.2
        %v1529 = vmul.f32 %v1513, 0.2
        %v1530 = vmul.f32 %v1514, 0.2
        %v1531 = vmul.f32 %v1515, 0.2
        %v1532 = vmul.f32 %v1516, 0.2
        %v1533 = vmul.f32 %v1517, 0.2
        %v1534 = vmul.f32 %v1518, 0.2
        %v1535 = vmul.f32 %v1519, 0.2
        %v1536 = vmul.f32 %v1520, 0.2
        %v1537 = vmul.f32 %v1521, 0.2
        %v1538 = vmul.f32 %v1522, 0.2
        %v1539 = vmul.f32 %v1523, 0.2
        %v1540 = vmul.f32 %v1524, 0.2
        %v1541 = vmul.f32 %v1525, 0.2
        %v1542 = vmul.f32 %v1526, 0.2
        %v1543 = vmax.f32 %v1511, %v1527
        %v1544 = vmax.f32 %v1512, %v1528
        %v1545 = vmax.f32 %v1513, %v1529
        %v1546 = vmax.f32 %v1514, %v1530
        %v1547 = vmax.f32 %v1515, %v1531
        %v1548 = vmax.f32 %v1516, %v1532
        %v1549 = vmax.f32 %v1517, %v1533
        %v1550 = vmax.f32 %v1518, %v1534
        %v1551 = vmax.f32 %v1519, %v1535
        %v1552 = vmax.f32 %v1520, %v1536
        %v1553 = vmax.f32 %v1521, %v1537
        %v1554 = vmax.f32 %v1522, %v1538
        %v1555 = vmax.f32 %v1523, %v1539
        %v1556 = vmax.f32 %v1524, %v1540
        %v1557 = vmax.f32 %v1525, %v1541
        %v1558 = vmax.f32 %v1526, %v1542
        %v1559 = vadd.f32 %v1543, %v588
        %v1560 = vadd.f32 %v1544, %v589
        %v1561 = vadd.f32 %v1545, %v590
        %v1562 = vadd.f32 %v1546, %v591
        %v1563 = vadd.f32 %v1547, %v592
        %v1564 = vadd.f32 %v1548, %v593
        %v1565 = vadd.f32 %v1549, %v594
        %v1566 = vadd.f32 %v1550, %v595
        %v1567 = vadd.f32 %v1551, %v596
        %v1568 = vadd.f32 %v1552, %v597
        %v1569 = vadd.f32 %v1553, %v598
        %v1570 = vadd.f32 %v1554, %v599
        %v1571 = vadd.f32 %v1555, %v600
        %v1572 = vadd.f32 %v1556, %v601
        %v1573 = vadd.f32 %v1557, %v602
        %v1574 = vadd.f32 %v1558, %v603
        %1575 = vmax.xlane.f32.xlu0 %v1559
        %v1576 = vpop.xlane.xlu0 %1575
        %1577 = vmax.xlane.f32.xlu0 %v1560
        %v1578 = vpop.xlane.xlu0 %1577
        %1579 = vmax.xlane.f32.xlu0 %v1561
        %v1580 = vpop.xlane.xlu0 %1579
        %1581 = vmax.xlane.f32.xlu0 %v1562
        %v1582 = vpop.xlane.xlu0 %1581
        %1583 = vmax.xlane.f32.xlu0 %v1563
        %v1584 = vpop.xlane.xlu0 %1583
        %1585 = vmax.xlane.f32.xlu0 %v1564
        %v1586 = vpop.xlane.xlu0 %1585
        %1587 = vmax.xlane.f32.xlu0 %v1565
        %v1588 = vpop.xlane.xlu0 %1587
        %1589 = vmax.xlane.f32.xlu0 %v1566
        %v1590 = vpop.xlane.xlu0 %1589
        %1591 = vmax.xlane.f32.xlu0 %v1567
        %v1592 = vpop.xlane.xlu0 %1591
        %1593 = vmax.xlane.f32.xlu0 %v1568
        %v1594 = vpop.xlane.xlu0 %1593
        %1595 = vmax.xlane.f32.xlu0 %v1569
        %v1596 = vpop.xlane.xlu0 %1595
        %1597 = vmax.xlane.f32.xlu0 %v1570
        %v1598 = vpop.xlane.xlu0 %1597
        %1599 = vmax.xlane.f32.xlu0 %v1571
        %v1600 = vpop.xlane.xlu0 %1599
        %1601 = vmax.xlane.f32.xlu0 %v1572
        %v1602 = vpop.xlane.xlu0 %1601
        %1603 = vmax.xlane.f32.xlu0 %v1573
        %v1604 = vpop.xlane.xlu0 %1603
        %1605 = vmax.xlane.f32.xlu0 %v1574
        %v1606 = vpop.xlane.xlu0 %1605
        %v1607 = vsub.f32 %v1559, %v1576
        %v1608 = vsub.f32 %v1560, %v1578
        %v1609 = vsub.f32 %v1561, %v1580
        %v1610 = vsub.f32 %v1562, %v1582
        %v1611 = vsub.f32 %v1563, %v1584
        %v1612 = vsub.f32 %v1564, %v1586
        %v1613 = vsub.f32 %v1565, %v1588
        %v1614 = vsub.f32 %v1566, %v1590
        %v1615 = vsub.f32 %v1567, %v1592
        %v1616 = vsub.f32 %v1568, %v1594
        %v1617 = vsub.f32 %v1569, %v1596
        %v1618 = vsub.f32 %v1570, %v1598
        %v1619 = vsub.f32 %v1571, %v1600
        %v1620 = vsub.f32 %v1572, %v1602
        %v1621 = vsub.f32 %v1573, %v1604
        %v1622 = vsub.f32 %v1574, %v1606
        %v1623 = vmul.f32 %v1607, 1.442695
        %v1624 = vpow.pop %v1623
        %v1625 = vmul.f32 %v1608, 1.442695
        %v1626 = vpow.pop %v1625
        %v1627 = vmul.f32 %v1609, 1.442695
        %v1628 = vpow.pop %v1627
        %v1629 = vmul.f32 %v1610, 1.442695
        %v1630 = vpow.pop %v1629
        %v1631 = vmul.f32 %v1611, 1.442695
        %v1632 = vpow.pop %v1631
        %v1633 = vmul.f32 %v1612, 1.442695
        %v1634 = vpow.pop %v1633
        %v1635 = vmul.f32 %v1613, 1.442695
        %v1636 = vpow.pop %v1635
        %v1637 = vmul.f32 %v1614, 1.442695
        %v1638 = vpow.pop %v1637
        %v1639 = vmul.f32 %v1615, 1.442695
        %v1640 = vpow.pop %v1639
        %v1641 = vmul.f32 %v1616, 1.442695
        %v1642 = vpow.pop %v1641
        %v1643 = vmul.f32 %v1617, 1.442695
        %v1644 = vpow.pop %v1643
        %v1645 = vmul.f32 %v1618, 1.442695
        %v1646 = vpow.pop %v1645
        %v1647 = vmul.f32 %v1619, 1.442695
        %v1648 = vpow.pop %v1647
        %v1649 = vmul.f32 %v1620, 1.442695
        %v1650 = vpow.pop %v1649
        %v1651 = vmul.f32 %v1621, 1.442695
        %v1652 = vpow.pop %v1651
        %v1653 = vmul.f32 %v1622, 1.442695
        %v1654 = vpow.pop %v1653
        %1655 = vadd.xlane.f32.xlu0 %v1624
        %v1656 = vpop.xlane.xlu0 %1655
        %1657 = vadd.xlane.f32.xlu0 %v1626
        %v1658 = vpop.xlane.xlu0 %1657
        %1659 = vadd.xlane.f32.xlu0 %v1628
        %v1660 = vpop.xlane.xlu0 %1659
        %1661 = vadd.xlane.f32.xlu0 %v1630
        %v1662 = vpop.xlane.xlu0 %1661
        %1663 = vadd.xlane.f32.xlu0 %v1632
        %v1664 = vpop.xlane.xlu0 %1663
        %1665 = vadd.xlane.f32.xlu0 %v1634
        %v1666 = vpop.xlane.xlu0 %1665
        %1667 = vadd.xlane.f32.xlu0 %v1636
        %v1668 = vpop.xlane.xlu0 %1667
        %1669 = vadd.xlane.f32.xlu0 %v1638
        %v1670 = vpop.xlane.xlu0 %1669
        %1671 = vadd.xlane.f32.xlu0 %v1640
        %v1672 = vpop.xlane.xlu0 %1671
        %1673 = vadd.xlane.f32.xlu0 %v1642
        %v1674 = vpop.xlane.xlu0 %1673
        %1675 = vadd.xlane.f32.xlu0 %v1644
        %v1676 = vpop.xlane.xlu0 %1675
        %1677 = vadd.xlane.f32.xlu0 %v1646
        %v1678 = vpop.xlane.xlu0 %1677
        %1679 = vadd.xlane.f32.xlu0 %v1648
        %v1680 = vpop.xlane.xlu0 %1679
        %1681 = vadd.xlane.f32.xlu0 %v1650
        %v1682 = vpop.xlane.xlu0 %1681
        %1683 = vadd.xlane.f32.xlu0 %v1652
        %v1684 = vpop.xlane.xlu0 %1683
        %1685 = vadd.xlane.f32.xlu0 %v1654
        %v1686 = vpop.xlane.xlu0 %1685
        %v1687 = vmax.f32 %v1656, 1e-20
        %v1688 = vmax.f32 %v1658, 1e-20
        %v1689 = vmax.f32 %v1660, 1e-20
        %v1690 = vmax.f32 %v1662, 1e-20
        %v1691 = vmax.f32 %v1664, 1e-20
        %v1692 = vmax.f32 %v1666, 1e-20
        %v1693 = vmax.f32 %v1668, 1e-20
        %v1694 = vmax.f32 %v1670, 1e-20
        %v1695 = vmax.f32 %v1672, 1e-20
        %v1696 = vmax.f32 %v1674, 1e-20
        %v1697 = vmax.f32 %v1676, 1e-20
        %v1698 = vmax.f32 %v1678, 1e-20
        %v1699 = vmax.f32 %v1680, 1e-20
        %v1700 = vmax.f32 %v1682, 1e-20
        %v1701 = vmax.f32 %v1684, 1e-20
        %v1702 = vmax.f32 %v1686, 1e-20
        %v1703 = vpack.c.bf16 %v1626, %v1624
        %v1704 = vpack.c.bf16 %v1630, %v1628
        %v1705 = vpack.c.bf16 %v1634, %v1632
        %v1706 = vpack.c.bf16 %v1638, %v1636
        %v1707 = vpack.c.bf16 %v1642, %v1640
        %v1708 = vpack.c.bf16 %v1646, %v1644
        %v1709 = vpack.c.bf16 %v1650, %v1648
        %v1710 = vpack.c.bf16 %v1654, %v1652
        %1711 = vmatprep.subr.bf16.mxu0 0
        %1712 = vmatpush1.bf16.msra.mxu0 %v1435
        %1713 = vmatprep.subr.bf16.mxu0 0
        %1714 = vmatpush1.bf16.msra.mxu0 %v1436
        %1715 = vmatprep.subr.bf16.mxu0 0
        %1716 = vmatpush1.bf16.msra.mxu0 %v1437
        %1717 = vmatprep.subr.bf16.mxu0 0
        %1718 = vmatpush1.bf16.msra.mxu0 %v1438
        %1719 = vmatprep.subr.bf16.mxu0 0
        %1720 = vmatpush1.bf16.msra.mxu0 %v1439
        %1721 = vmatprep.subr.bf16.mxu0 0
        %1722 = vmatpush1.bf16.msra.mxu0 %v1440
        %1723 = vmatprep.subr.bf16.mxu0 0
        %1724 = vmatpush1.bf16.msra.mxu0 %v1441
        %1725 = vmatprep.subr.bf16.mxu0 0
        %1726 = vmatpush1.bf16.msra.mxu0 %v1442
        %1727 = vmatprep.subr.bf16.mxu0 0
        %1728 = vmatpush1.bf16.msra.mxu0 0
        %1729 = vmatprep.subr.bf16.mxu0 0
        %1730 = vmatpush1.bf16.msra.mxu0 0
        %1731 = vmatprep.subr.bf16.mxu0 0
        %1732 = vmatpush1.bf16.msra.mxu0 0
        %1733 = vmatprep.subr.bf16.mxu0 0
        %1734 = vmatpush1.bf16.msra.mxu0 0
        %1735 = vmatprep.subr.bf16.mxu0 0
        %1736 = vmatpush1.bf16.msra.mxu0 0
        %1737 = vmatprep.subr.bf16.mxu0 0
        %1738 = vmatpush1.bf16.msra.mxu0 0
        %1739 = vmatprep.subr.bf16.mxu0 0
        %1740 = vmatpush1.bf16.msra.mxu0 0
        %1741 = vmatprep.subr.bf16.mxu0 0
        %1742 = vmatpush1.bf16.msra.mxu0 0
        %1743 = vmatprep.mubr.bf16.mxu0 0
        %1744 = vmatmul.mubr.bf16.gmra.mrb[0].mxu0 %v1703
        %v1745 = vpop.f32.mrb[0].mxu0
        %v1746 = vadd.f32 0.0, %v1745
        %v1747 = vpop.f32.mrb[0].mxu0
        %v1748 = vpop.f32.mrb[0].mxu0
        %v1749 = vadd.f32 0.0, %v1748
        %v1750 = vpop.f32.mrb[0].mxu0
        %1751 = vmatprep.mubr.bf16.mxu0 0
        %1752 = vmatmul.mubr.bf16.gmra.mrb[0].mxu0 %v1704
        %v1753 = vpop.f32.mrb[0].mxu0
        %v1754 = vadd.f32 0.0, %v1753
        %v1755 = vpop.f32.mrb[0].mxu0
        %v1756 = vpop.f32.mrb[0].mxu0
        %v1757 = vadd.f32 0.0, %v1756
        %v1758 = vpop.f32.mrb[0].mxu0
        %1759 = vmatprep.mubr.bf16.mxu0 0
        %1760 = vmatmul.mubr.bf16.gmra.mrb[0].mxu0 %v1705
        %v1761 = vpop.f32.mrb[0].mxu0
        %v1762 = vadd.f32 0.0, %v1761
        %v1763 = vpop.f32.mrb[0].mxu0
        %v1764 = vpop.f32.mrb[0].mxu0
        %v1765 = vadd.f32 0.0, %v1764
        %v1766 = vpop.f32.mrb[0].mxu0
        %1767 = vmatprep.mubr.bf16.mxu0 0
        %1768 = vmatmul.mubr.bf16.gmra.mrb[0].mxu0 %v1706
        %v1769 = vpop.f32.mrb[0].mxu0
        %v1770 = vadd.f32 0.0, %v1769
        %v1771 = vpop.f32.mrb[0].mxu0
        %v1772 = vpop.f32.mrb[0].mxu0
        %v1773 = vadd.f32 0.0, %v1772
        %v1774 = vpop.f32.mrb[0].mxu0
        %1775 = vmatprep.mubr.bf16.mxu0 0
        %1776 = vmatmul.mubr.bf16.gmra.mrb[0].mxu0 %v1707
        %v1777 = vpop.f32.mrb[0].mxu0
        %v1778 = vadd.f32 0.0, %v1777
        %v1779 = vpop.f32.mrb[0].mxu0
        %v1780 = vpop.f32.mrb[0].mxu0
        %v1781 = vadd.f32 0.0, %v1780
        %v1782 = vpop.f32.mrb[0].mxu0
        %1783 = vmatprep.mubr.bf16.mxu0 0
        %1784 = vmatmul.mubr.bf16.gmra.mrb[0].mxu0 %v1708
        %v1785 = vpop.f32.mrb[0].mxu0
        %v1786 = vadd.f32 0.0, %v1785
        %v1787 = vpop.f32.mrb[0].mxu0
        %v1788 = vpop.f32.mrb[0].mxu0
        %v1789 = vadd.f32 0.0, %v1788
        %v1790 = vpop.f32.mrb[0].mxu0
        %1791 = vmatprep.mubr.bf16.mxu0 0
        %1792 = vmatmul.mubr.bf16.gmra.mrb[0].mxu0 %v1709
        %v1793 = vpop.f32.mrb[0].mxu0
        %v1794 = vadd.f32 0.0, %v1793
        %v1795 = vpop.f32.mrb[0].mxu0
        %v1796 = vpop.f32.mrb[0].mxu0
        %v1797 = vadd.f32 0.0, %v1796
        %v1798 = vpop.f32.mrb[0].mxu0
        %1799 = vmatprep.mubr.bf16.mxu0 0
        %1800 = vmatmul.mubr.bf16.gmra.mrb[0].mxu0 %v1710
        %v1801 = vpop.f32.mrb[0].mxu0
        %v1802 = vadd.f32 0.0, %v1801
        %v1803 = vpop.f32.mrb[0].mxu0
        %v1804 = vpop.f32.mrb[0].mxu0
        %v1805 = vadd.f32 0.0, %v1804
        %v1806 = vpop.f32.mrb[0].mxu0
        %1807 = vdwg.mxu0
        %v1808 = vrcp.pop %v1687
        %v1809 = vrcp.pop %v1688
        %v1810 = vrcp.pop %v1689
        %v1811 = vrcp.pop %v1690
        %v1812 = vrcp.pop %v1691
        %v1813 = vrcp.pop %v1692
        %v1814 = vrcp.pop %v1693
        %v1815 = vrcp.pop %v1694
        %v1816 = vrcp.pop %v1695
        %v1817 = vrcp.pop %v1696
        %v1818 = vrcp.pop %v1697
        %v1819 = vrcp.pop %v1698
        %v1820 = vrcp.pop %v1699
        %v1821 = vrcp.pop %v1700
        %v1822 = vrcp.pop %v1701
        %v1823 = vrcp.pop %v1702
        %v1824 = vmul.f32 %v1746, %v1808
        %v1825 = vmul.f32 %v1749, %v1809
        %v1826 = vmul.f32 %v1754, %v1810
        %v1827 = vmul.f32 %v1757, %v1811
        %v1828 = vmul.f32 %v1762, %v1812
        %v1829 = vmul.f32 %v1765, %v1813
        %v1830 = vmul.f32 %v1770, %v1814
        %v1831 = vmul.f32 %v1773, %v1815
        %v1832 = vmul.f32 %v1778, %v1816
        %v1833 = vmul.f32 %v1781, %v1817
        %v1834 = vmul.f32 %v1786, %v1818
        %v1835 = vmul.f32 %v1789, %v1819
        %v1836 = vmul.f32 %v1794, %v1820
        %v1837 = vmul.f32 %v1797, %v1821
        %v1838 = vmul.f32 %v1802, %v1822
        %v1839 = vmul.f32 %v1805, %v1823
        %v1840 = vadd.f32 %v1407, %v1824
        %v1841 = vadd.f32 %v1408, %v1825
        %v1842 = vadd.f32 %v1409, %v1826
        %v1843 = vadd.f32 %v1410, %v1827
        %v1844 = vadd.f32 %v1411, %v1828
        %v1845 = vadd.f32 %v1412, %v1829
        %v1846 = vadd.f32 %v1413, %v1830
        %v1847 = vadd.f32 %v1414, %v1831
        %v1848 = vadd.f32 %v1415, %v1832
        %v1849 = vadd.f32 %v1416, %v1833
        %v1850 = vadd.f32 %v1417, %v1834
        %v1851 = vadd.f32 %v1418, %v1835
        %v1852 = vadd.f32 %v1419, %v1836
        %v1853 = vadd.f32 %v1420, %v1837
        %v1854 = vadd.f32 %v1421, %v1838
        %v1855 = vadd.f32 %v1422, %v1839
        %v1856 = vld [vmem:[%s4] sm:$0x1]
        %v1858 = vlaneseq
        %v1859 = vshrl.u32 %v1858, 7
        %v1860 = vsub.s32 0, %v1859
        %v1861 = vrot.slane %v1856, %v1860
        %v1863 = vadd.f32 %v1840, %v1861
        %v1864 = vadd.f32 %v1841, %v1861
        %v1865 = vadd.f32 %v1842, %v1861
        %v1866 = vadd.f32 %v1843, %v1861
        %v1867 = vadd.f32 %v1844, %v1861
        %v1868 = vadd.f32 %v1845, %v1861
        %v1869 = vadd.f32 %v1846, %v1861
        %v1870 = vadd.f32 %v1847, %v1861
        %v1871 = vadd.f32 %v1848, %v1861
        %v1872 = vadd.f32 %v1849, %v1861
        %v1873 = vadd.f32 %v1850, %v1861
        %v1874 = vadd.f32 %v1851, %v1861
        %v1875 = vadd.f32 %v1852, %v1861
        %v1876 = vadd.f32 %v1853, %v1861
        %v1877 = vadd.f32 %v1854, %v1861
        %v1878 = vadd.f32 %v1855, %v1861
        %vm1879 = vcmp.gt.f32.partialorder %v1863, 0.0
        %vm1880 = vcmp.gt.f32.partialorder %v1864, 0.0
        %vm1881 = vcmp.gt.f32.partialorder %v1865, 0.0
        %vm1882 = vcmp.gt.f32.partialorder %v1866, 0.0
        %vm1883 = vcmp.gt.f32.partialorder %v1867, 0.0
        %vm1884 = vcmp.gt.f32.partialorder %v1868, 0.0
        %vm1885 = vcmp.gt.f32.partialorder %v1869, 0.0
        %vm1886 = vcmp.gt.f32.partialorder %v1870, 0.0
        %vm1887 = vcmp.gt.f32.partialorder %v1871, 0.0
        %vm1888 = vcmp.gt.f32.partialorder %v1872, 0.0
        %vm1889 = vcmp.gt.f32.partialorder %v1873, 0.0
        %vm1890 = vcmp.gt.f32.partialorder %v1874, 0.0
        %vm1891 = vcmp.gt.f32.partialorder %v1875, 0.0
        %vm1892 = vcmp.gt.f32.partialorder %v1876, 0.0
        %vm1893 = vcmp.gt.f32.partialorder %v1877, 0.0
        %vm1894 = vcmp.gt.f32.partialorder %v1878, 0.0
        %v1895 = vmin.f32 %v1863, 0.0
        %v1896 = vmin.f32 %v1864, 0.0
        %v1897 = vmin.f32 %v1865, 0.0
        %v1898 = vmin.f32 %v1866, 0.0
        %v1899 = vmin.f32 %v1867, 0.0
        %v1900 = vmin.f32 %v1868, 0.0
        %v1901 = vmin.f32 %v1869, 0.0
        %v1902 = vmin.f32 %v1870, 0.0
        %v1903 = vmin.f32 %v1871, 0.0
        %v1904 = vmin.f32 %v1872, 0.0
        %v1905 = vmin.f32 %v1873, 0.0
        %v1906 = vmin.f32 %v1874, 0.0
        %v1907 = vmin.f32 %v1875, 0.0
        %v1908 = vmin.f32 %v1876, 0.0
        %v1909 = vmin.f32 %v1877, 0.0
        %v1910 = vmin.f32 %v1878, 0.0
        %v1911 = vmul.f32 %v1895, 1.442695
        %v1912 = vpow.pop %v1911
        %v1913 = vmul.f32 %v1896, 1.442695
        %v1914 = vpow.pop %v1913
        %v1915 = vmul.f32 %v1897, 1.442695
        %v1916 = vpow.pop %v1915
        %v1917 = vmul.f32 %v1898, 1.442695
        %v1918 = vpow.pop %v1917
        %v1919 = vmul.f32 %v1899, 1.442695
        %v1920 = vpow.pop %v1919
        %v1921 = vmul.f32 %v1900, 1.442695
        %v1922 = vpow.pop %v1921
        %v1923 = vmul.f32 %v1901, 1.442695
        %v1924 = vpow.pop %v1923
        %v1925 = vmul.f32 %v1902, 1.442695
        %v1926 = vpow.pop %v1925
        %v1927 = vmul.f32 %v1903, 1.442695
        %v1928 = vpow.pop %v1927
        %v1929 = vmul.f32 %v1904, 1.442695
        %v1930 = vpow.pop %v1929
        %v1931 = vmul.f32 %v1905, 1.442695
        %v1932 = vpow.pop %v1931
        %v1933 = vmul.f32 %v1906, 1.442695
        %v1934 = vpow.pop %v1933
        %v1935 = vmul.f32 %v1907, 1.442695
        %v1936 = vpow.pop %v1935
        %v1937 = vmul.f32 %v1908, 1.442695
        %v1938 = vpow.pop %v1937
        %v1939 = vmul.f32 %v1909, 1.442695
        %v1940 = vpow.pop %v1939
        %v1941 = vmul.f32 %v1910, 1.442695
        %v1942 = vpow.pop %v1941
        %v1943 = vsub.f32 %v1912, 1.0
        %v1944 = vsub.f32 %v1914, 1.0
        %v1945 = vsub.f32 %v1916, 1.0
        %v1946 = vsub.f32 %v1918, 1.0
        %v1947 = vsub.f32 %v1920, 1.0
        %v1948 = vsub.f32 %v1922, 1.0
        %v1949 = vsub.f32 %v1924, 1.0
        %v1950 = vsub.f32 %v1926, 1.0
        %v1951 = vsub.f32 %v1928, 1.0
        %v1952 = vsub.f32 %v1930, 1.0
        %v1953 = vsub.f32 %v1932, 1.0
        %v1954 = vsub.f32 %v1934, 1.0
        %v1955 = vsub.f32 %v1936, 1.0
        %v1956 = vsub.f32 %v1938, 1.0
        %v1957 = vsub.f32 %v1940, 1.0
        %v1958 = vsub.f32 %v1942, 1.0
        %v1959 = vsel %vm1879, %v1863, %v1943
        %v1960 = vsel %vm1880, %v1864, %v1944
        %v1961 = vsel %vm1881, %v1865, %v1945
        %v1962 = vsel %vm1882, %v1866, %v1946
        %v1963 = vsel %vm1883, %v1867, %v1947
        %v1964 = vsel %vm1884, %v1868, %v1948
        %v1965 = vsel %vm1885, %v1869, %v1949
        %v1966 = vsel %vm1886, %v1870, %v1950
        %v1967 = vsel %vm1887, %v1871, %v1951
        %v1968 = vsel %vm1888, %v1872, %v1952
        %v1969 = vsel %vm1889, %v1873, %v1953
        %v1970 = vsel %vm1890, %v1874, %v1954
        %v1971 = vsel %vm1891, %v1875, %v1955
        %v1972 = vsel %vm1892, %v1876, %v1956
        %v1973 = vsel %vm1893, %v1877, %v1957
        %v1974 = vsel %vm1894, %v1878, %v1958
        %v1975 = vpack.c.bf16 %v1960, %v1959
        %v1976 = vpack.c.bf16 %v1962, %v1961
        %v1977 = vpack.c.bf16 %v1964, %v1963
        %v1978 = vpack.c.bf16 %v1966, %v1965
        %v1979 = vpack.c.bf16 %v1968, %v1967
        %v1980 = vpack.c.bf16 %v1970, %v1969
        %v1981 = vpack.c.bf16 %v1972, %v1971
        %v1982 = vpack.c.bf16 %v1974, %v1973
        %v1983 = vld [vmem:[%s5] sm:$0xf]
        %v1984 = vld [vmem:[%s5 + $0x4] sm:$0xf]
        %v1985 = vld [vmem:[%s5 + $0x8] sm:$0xf]
        %v1986 = vld [vmem:[%s5 + $0xc] sm:$0xf]
        %v1987 = vld [vmem:[%s5 + $0x10] sm:$0xf]
        %v1988 = vld [vmem:[%s5 + $0x14] sm:$0xf]
        %v1989 = vld [vmem:[%s5 + $0x18] sm:$0xf]
        %v1990 = vld [vmem:[%s5 + $0x1c] sm:$0xf]
        %v1991 = vld [vmem:[%s5 + $0x20] sm:$0xf]
        %v1992 = vld [vmem:[%s5 + $0x24] sm:$0xf]
        %v1993 = vld [vmem:[%s5 + $0x28] sm:$0xf]
        %v1994 = vld [vmem:[%s5 + $0x2c] sm:$0xf]
        %v1995 = vld [vmem:[%s5 + $0x30] sm:$0xf]
        %v1996 = vld [vmem:[%s5 + $0x34] sm:$0xf]
        %v1997 = vld [vmem:[%s5 + $0x38] sm:$0xf]
        %v1998 = vld [vmem:[%s5 + $0x3c] sm:$0xf]
        %v2015 = vunpack.c.l.b16 %v1983
        %v2016 = vunpack.c.l.b16 %v1984
        %v2017 = vunpack.c.l.b16 %v1985
        %v2018 = vunpack.c.l.b16 %v1986
        %v2019 = vunpack.c.l.b16 %v1987
        %v2020 = vunpack.c.l.b16 %v1988
        %v2021 = vunpack.c.l.b16 %v1989
        %v2022 = vunpack.c.l.b16 %v1990
        %v2023 = vunpack.c.l.b16 %v1991
        %v2024 = vunpack.c.l.b16 %v1992
        %v2025 = vunpack.c.l.b16 %v1993
        %v2026 = vunpack.c.l.b16 %v1994
        %v2027 = vunpack.c.l.b16 %v1995
        %v2028 = vunpack.c.l.b16 %v1996
        %v2029 = vunpack.c.l.b16 %v1997
        %v2030 = vunpack.c.l.b16 %v1998
        %v2031 = vpack.c.b16 %v2016, %v2015
        %v2032 = vpack.c.b16 %v2018, %v2017
        %v2033 = vpack.c.b16 %v2020, %v2019
        %v2034 = vpack.c.b16 %v2022, %v2021
        %v2035 = vpack.c.b16 %v2024, %v2023
        %v2036 = vpack.c.b16 %v2026, %v2025
        %v2037 = vpack.c.b16 %v2028, %v2027
        %v2038 = vpack.c.b16 %v2030, %v2029
        %2047 = vmatprep.subr.bf16.mxu0 0
        %2048 = vmatpush1.bf16.msra.mxu0 %v2031
        %2049 = vmatprep.subr.bf16.mxu0 0
        %2050 = vmatpush1.bf16.msra.mxu0 %v2032
        %2051 = vmatprep.subr.bf16.mxu0 0
        %2052 = vmatpush1.bf16.msra.mxu0 %v2033
        %2053 = vmatprep.subr.bf16.mxu0 0
        %2054 = vmatpush1.bf16.msra.mxu0 %v2034
        %2055 = vmatprep.subr.bf16.mxu0 0
        %2056 = vmatpush1.bf16.msra.mxu0 %v2035
        %2057 = vmatprep.subr.bf16.mxu0 0
        %2058 = vmatpush1.bf16.msra.mxu0 %v2036
        %2059 = vmatprep.subr.bf16.mxu0 0
        %2060 = vmatpush1.bf16.msra.mxu0 %v2037
        %2061 = vmatprep.subr.bf16.mxu0 0
        %2062 = vmatpush1.bf16.msra.mxu0 %v2038
        %2063 = vmatprep.subr.bf16.mxu0 0
        %2064 = vmatpush1.bf16.msra.mxu0 0
        %2065 = vmatprep.subr.bf16.mxu0 0
        %2066 = vmatpush1.bf16.msra.mxu0 0
        %2067 = vmatprep.subr.bf16.mxu0 0
        %2068 = vmatpush1.bf16.msra.mxu0 0
        %2069 = vmatprep.subr.bf16.mxu0 0
        %2070 = vmatpush1.bf16.msra.mxu0 0
        %2071 = vmatprep.subr.bf16.mxu0 0
        %2072 = vmatpush1.bf16.msra.mxu0 0
        %2073 = vmatprep.subr.bf16.mxu0 0
        %2074 = vmatpush1.bf16.msra.mxu0 0
        %2075 = vmatprep.subr.bf16.mxu0 0
        %2076 = vmatpush1.bf16.msra.mxu0 0
        %2077 = vmatprep.subr.bf16.mxu0 0
        %2078 = vmatpush1.bf16.msra.mxu0 0
        %2079 = vmatprep.mubr.bf16.mxu0 0
        %2080 = vmatmul.mubr.bf16.gmra.mrb[0].mxu0 %v1975
        %v2081 = vpop.f32.mrb[0].mxu0
        %v2082 = vadd.f32 0.0, %v2081
        %v2083 = vpop.f32.mrb[0].mxu0
        %v2084 = vpop.f32.mrb[0].mxu0
        %v2085 = vadd.f32 0.0, %v2084
        %v2086 = vpop.f32.mrb[0].mxu0
        %2087 = vmatprep.mubr.bf16.mxu0 0
        %2088 = vmatmul.mubr.bf16.gmra.mrb[0].mxu0 %v1976
        %v2089 = vpop.f32.mrb[0].mxu0
        %v2090 = vadd.f32 0.0, %v2089
        %v2091 = vpop.f32.mrb[0].mxu0
        %v2092 = vpop.f32.mrb[0].mxu0
        %v2093 = vadd.f32 0.0, %v2092
        %v2094 = vpop.f32.mrb[0].mxu0
        %2095 = vmatprep.mubr.bf16.mxu0 0
        %2096 = vmatmul.mubr.bf16.gmra.mrb[0].mxu0 %v1977
        %v2097 = vpop.f32.mrb[0].mxu0
        %v2098 = vadd.f32 0.0, %v2097
        %v2099 = vpop.f32.mrb[0].mxu0
        %v2100 = vpop.f32.mrb[0].mxu0
        %v2101 = vadd.f32 0.0, %v2100
        %v2102 = vpop.f32.mrb[0].mxu0
        %2103 = vmatprep.mubr.bf16.mxu0 0
        %2104 = vmatmul.mubr.bf16.gmra.mrb[0].mxu0 %v1978
        %v2105 = vpop.f32.mrb[0].mxu0
        %v2106 = vadd.f32 0.0, %v2105
        %v2107 = vpop.f32.mrb[0].mxu0
        %v2108 = vpop.f32.mrb[0].mxu0
        %v2109 = vadd.f32 0.0, %v2108
        %v2110 = vpop.f32.mrb[0].mxu0
        %2111 = vmatprep.mubr.bf16.mxu0 0
        %2112 = vmatmul.mubr.bf16.gmra.mrb[0].mxu0 %v1979
        %v2113 = vpop.f32.mrb[0].mxu0
        %v2114 = vadd.f32 0.0, %v2113
        %v2115 = vpop.f32.mrb[0].mxu0
        %v2116 = vpop.f32.mrb[0].mxu0
        %v2117 = vadd.f32 0.0, %v2116
        %v2118 = vpop.f32.mrb[0].mxu0
        %2119 = vmatprep.mubr.bf16.mxu0 0
        %2120 = vmatmul.mubr.bf16.gmra.mrb[0].mxu0 %v1980
        %v2121 = vpop.f32.mrb[0].mxu0
        %v2122 = vadd.f32 0.0, %v2121
        %v2123 = vpop.f32.mrb[0].mxu0
        %v2124 = vpop.f32.mrb[0].mxu0
        %v2125 = vadd.f32 0.0, %v2124
        %v2126 = vpop.f32.mrb[0].mxu0
        %2127 = vmatprep.mubr.bf16.mxu0 0
        %2128 = vmatmul.mubr.bf16.gmra.mrb[0].mxu0 %v1981
        %v2129 = vpop.f32.mrb[0].mxu0
        %v2130 = vadd.f32 0.0, %v2129
        %v2131 = vpop.f32.mrb[0].mxu0
        %v2132 = vpop.f32.mrb[0].mxu0
        %v2133 = vadd.f32 0.0, %v2132
        %v2134 = vpop.f32.mrb[0].mxu0
        %2135 = vmatprep.mubr.bf16.mxu0 0
        %2136 = vmatmul.mubr.bf16.gmra.mrb[0].mxu0 %v1982
        %v2137 = vpop.f32.mrb[0].mxu0
        %v2138 = vadd.f32 0.0, %v2137
        %v2139 = vpop.f32.mrb[0].mxu0
        %v2140 = vpop.f32.mrb[0].mxu0
        %v2141 = vadd.f32 0.0, %v2140
        %v2142 = vpop.f32.mrb[0].mxu0
        %2143 = vdwg.mxu0
        %v2144 = vpack.c.bf16 %v2085, %v2082
        %v2145 = vpack.c.bf16 %v2093, %v2090
        %v2146 = vpack.c.bf16 %v2101, %v2098
        %v2147 = vpack.c.bf16 %v2109, %v2106
        %v2148 = vpack.c.bf16 %v2117, %v2114
        %v2149 = vpack.c.bf16 %v2125, %v2122
        %v2150 = vpack.c.bf16 %v2133, %v2130
        %v2151 = vpack.c.bf16 %v2141, %v2138
        %v2152 = vld [vmem:[%s6] sm:$0xf]
        %v2153 = vld [vmem:[%s6 + $0x4] sm:$0xf]
        %v2154 = vld [vmem:[%s6 + $0x8] sm:$0xf]
        %v2155 = vld [vmem:[%s6 + $0xc] sm:$0xf]
        %v2156 = vld [vmem:[%s6 + $0x10] sm:$0xf]
        %v2157 = vld [vmem:[%s6 + $0x14] sm:$0xf]
        %v2158 = vld [vmem:[%s6 + $0x18] sm:$0xf]
        %v2159 = vld [vmem:[%s6 + $0x1c] sm:$0xf]
        %v2168 = vunpack.c.l.b16 %v2152
        %v2169 = vunpack.c.l.b16 %v2153
        %v2170 = vunpack.c.l.b16 %v2154
        %v2171 = vunpack.c.l.b16 %v2155
        %v2172 = vunpack.c.l.b16 %v2156
        %v2173 = vunpack.c.l.b16 %v2157
        %v2174 = vunpack.c.l.b16 %v2158
        %v2175 = vunpack.c.l.b16 %v2159
        %v2176 = vpack.c.b16 %v2169, %v2168
        %v2177 = vpack.c.b16 %v2171, %v2170
        %v2178 = vpack.c.b16 %v2173, %v2172
        %v2179 = vpack.c.b16 %v2175, %v2174
        %vm2184 = vcmask 523264
        %v2186 = vsel %vm2184, %v2144, 0
        %v2189 = vsel %vm2184, %v2145, 0
        %v2192 = vsel %vm2184, %v2146, 0
        %v2195 = vsel %vm2184, %v2147, 0
        %v2198 = vsel %vm2184, %v2148, 0
        %v2201 = vsel %vm2184, %v2149, 0
        %v2204 = vsel %vm2184, %v2150, 0
        %v2207 = vsel %vm2184, %v2151, 0
        %2209 = vmatprep.subr.bf16.mxu0 0
        %2210 = vmatpush1.bf16.msra.mxu0 %v2176
        %2211 = vmatprep.subr.bf16.mxu0 0
        %2212 = vmatpush1.bf16.msra.mxu0 %v2177
        %2213 = vmatprep.subr.bf16.mxu0 0
        %2214 = vmatpush1.bf16.msra.mxu0 %v2178
        %2215 = vmatprep.subr.bf16.mxu0 0
        %2216 = vmatpush1.bf16.msra.mxu0 %v2179
        %2217 = vmatprep.subr.bf16.mxu0 0
        %2218 = vmatpush1.bf16.msra.mxu0 0
        %2219 = vmatprep.subr.bf16.mxu0 0
        %2220 = vmatpush1.bf16.msra.mxu0 0
        %2221 = vmatprep.subr.bf16.mxu0 0
        %2222 = vmatpush1.bf16.msra.mxu0 0
        %2223 = vmatprep.subr.bf16.mxu0 0
        %2224 = vmatpush1.bf16.msra.mxu0 0
        %2225 = vmatprep.subr.bf16.mxu0 0
        %2226 = vmatpush1.bf16.msra.mxu0 0
        %2227 = vmatprep.subr.bf16.mxu0 0
        %2228 = vmatpush1.bf16.msra.mxu0 0
        %2229 = vmatprep.subr.bf16.mxu0 0
        %2230 = vmatpush1.bf16.msra.mxu0 0
        %2231 = vmatprep.subr.bf16.mxu0 0
        %2232 = vmatpush1.bf16.msra.mxu0 0
        %2233 = vmatprep.subr.bf16.mxu0 0
        %2234 = vmatpush1.bf16.msra.mxu0 0
        %2235 = vmatprep.subr.bf16.mxu0 0
        %2236 = vmatpush1.bf16.msra.mxu0 0
        %2237 = vmatprep.subr.bf16.mxu0 0
        %2238 = vmatpush1.bf16.msra.mxu0 0
        %2239 = vmatprep.subr.bf16.mxu0 0
        %2240 = vmatpush1.bf16.msra.mxu0 0
        %2241 = vmatprep.mubr.bf16.mxu0 0
        %2242 = vmatmul.mubr.bf16.gmra.mrb[0].mxu0 %v2186
        %v2243 = vpop.f32.mrb[0].mxu0
        %v2244 = vadd.f32 0.0, %v2243
        %v2245 = vpop.f32.mrb[0].mxu0
        %v2246 = vpop.f32.mrb[0].mxu0
        %v2247 = vadd.f32 0.0, %v2246
        %v2248 = vpop.f32.mrb[0].mxu0
        %2249 = vmatprep.mubr.bf16.mxu0 0
        %2250 = vmatmul.mubr.bf16.gmra.mrb[0].mxu0 %v2189
        %v2251 = vpop.f32.mrb[0].mxu0
        %v2252 = vadd.f32 0.0, %v2251
        %v2253 = vpop.f32.mrb[0].mxu0
        %v2254 = vpop.f32.mrb[0].mxu0
        %v2255 = vadd.f32 0.0, %v2254
        %v2256 = vpop.f32.mrb[0].mxu0
        %2257 = vmatprep.mubr.bf16.mxu0 0
        %2258 = vmatmul.mubr.bf16.gmra.mrb[0].mxu0 %v2192
        %v2259 = vpop.f32.mrb[0].mxu0
        %v2260 = vadd.f32 0.0, %v2259
        %v2261 = vpop.f32.mrb[0].mxu0
        %v2262 = vpop.f32.mrb[0].mxu0
        %v2263 = vadd.f32 0.0, %v2262
        %v2264 = vpop.f32.mrb[0].mxu0
        %2265 = vmatprep.mubr.bf16.mxu0 0
        %2266 = vmatmul.mubr.bf16.gmra.mrb[0].mxu0 %v2195
        %v2267 = vpop.f32.mrb[0].mxu0
        %v2268 = vadd.f32 0.0, %v2267
        %v2269 = vpop.f32.mrb[0].mxu0
        %v2270 = vpop.f32.mrb[0].mxu0
        %v2271 = vadd.f32 0.0, %v2270
        %v2272 = vpop.f32.mrb[0].mxu0
        %2273 = vmatprep.mubr.bf16.mxu0 0
        %2274 = vmatmul.mubr.bf16.gmra.mrb[0].mxu0 %v2198
        %v2275 = vpop.f32.mrb[0].mxu0
        %v2276 = vadd.f32 0.0, %v2275
        %v2277 = vpop.f32.mrb[0].mxu0
        %v2278 = vpop.f32.mrb[0].mxu0
        %v2279 = vadd.f32 0.0, %v2278
        %v2280 = vpop.f32.mrb[0].mxu0
        %2281 = vmatprep.mubr.bf16.mxu0 0
        %2282 = vmatmul.mubr.bf16.gmra.mrb[0].mxu0 %v2201
        %v2283 = vpop.f32.mrb[0].mxu0
        %v2284 = vadd.f32 0.0, %v2283
        %v2285 = vpop.f32.mrb[0].mxu0
        %v2286 = vpop.f32.mrb[0].mxu0
        %v2287 = vadd.f32 0.0, %v2286
        %v2288 = vpop.f32.mrb[0].mxu0
        %2289 = vmatprep.mubr.bf16.mxu0 0
        %2290 = vmatmul.mubr.bf16.gmra.mrb[0].mxu0 %v2204
        %v2291 = vpop.f32.mrb[0].mxu0
        %v2292 = vadd.f32 0.0, %v2291
        %v2293 = vpop.f32.mrb[0].mxu0
        %v2294 = vpop.f32.mrb[0].mxu0
        %v2295 = vadd.f32 0.0, %v2294
        %v2296 = vpop.f32.mrb[0].mxu0
        %2297 = vmatprep.mubr.bf16.mxu0 0
        %2298 = vmatmul.mubr.bf16.gmra.mrb[0].mxu0 %v2207
        %v2299 = vpop.f32.mrb[0].mxu0
        %v2300 = vadd.f32 0.0, %v2299
        %v2301 = vpop.f32.mrb[0].mxu0
        %v2302 = vpop.f32.mrb[0].mxu0
        %v2303 = vadd.f32 0.0, %v2302
        %v2304 = vpop.f32.mrb[0].mxu0
        %2305 = vdwg.mxu0
        %2306 = vxpose.xlu0.b32.start [1/16] %v2244, 128
        %2307 = vxpose.xlu0.b32.cont [2/16] %v2247, 128
        %2308 = vxpose.xlu0.b32.cont [3/16] %v2252, 128
        %2309 = vxpose.xlu0.b32.cont [4/16] %v2255, 128
        %2310 = vxpose.xlu0.b32.cont [5/16] %v2260, 128
        %2311 = vxpose.xlu0.b32.cont [6/16] %v2263, 128
        %2312 = vxpose.xlu0.b32.cont [7/16] %v2268, 128
        %2313 = vxpose.xlu0.b32.cont [8/16] %v2271, 128
        %2314 = vxpose.xlu0.b32.cont [9/16] %v2276, 128
        %2315 = vxpose.xlu0.b32.cont [10/16] %v2279, 128
        %2316 = vxpose.xlu0.b32.cont [11/16] %v2284, 128
        %2317 = vxpose.xlu0.b32.cont [12/16] %v2287, 128
        %2318 = vxpose.xlu0.b32.cont [13/16] %v2292, 128
        %2319 = vxpose.xlu0.b32.cont [14/16] %v2295, 128
        %2320 = vxpose.xlu0.b32.cont [15/16] %v2300, 128
        %2321 = vxpose.xlu0.b32.end [16/16] %v2303, 128
        %v2322 = vpop.trf.xlu0
        %v2323 = vpop.trf.xlu0
        %v2324 = vpop.trf.xlu0
        %v2325 = vpop.trf.xlu0
        %v2326 = vpop.trf.xlu0
        %v2327 = vpop.trf.xlu0
        %v2328 = vpop.trf.xlu0
        %v2329 = vpop.trf.xlu0
        %v2330 = vpop.trf.xlu0
        %v2331 = vpop.trf.xlu0
        %v2332 = vpop.trf.xlu0
        %v2333 = vpop.trf.xlu0
        %v2334 = vpop.trf.xlu0
        %v2335 = vpop.trf.xlu0
        %v2336 = vpop.trf.xlu0
        %v2337 = vpop.trf.xlu0
        %2339 = vset.pattern.permute.xlu0 1
        %2340 = vperm.xlu0 %2339, %v2244
        %v2341 = vpop.permute.xlu0 %2340
        %2344 = vset.pattern.permute.xlu0 1
        %2345 = vperm.xlu0 %2344, %v2247
        %v2346 = vpop.permute.xlu0 %2345
        %2349 = vset.pattern.permute.xlu0 1
        %2350 = vperm.xlu0 %2349, %v2252
        %v2351 = vpop.permute.xlu0 %2350
        %2354 = vset.pattern.permute.xlu0 1
        %2355 = vperm.xlu0 %2354, %v2255
        %v2356 = vpop.permute.xlu0 %2355
        %2359 = vset.pattern.permute.xlu0 1
        %2360 = vperm.xlu0 %2359, %v2260
        %v2361 = vpop.permute.xlu0 %2360
        %2364 = vset.pattern.permute.xlu0 1
        %2365 = vperm.xlu0 %2364, %v2263
        %v2366 = vpop.permute.xlu0 %2365
        %2369 = vset.pattern.permute.xlu0 1
        %2370 = vperm.xlu0 %2369, %v2268
        %v2371 = vpop.permute.xlu0 %2370
        %2374 = vset.pattern.permute.xlu0 1
        %2375 = vperm.xlu0 %2374, %v2271
        %v2376 = vpop.permute.xlu0 %2375
        %2379 = vset.pattern.permute.xlu0 1
        %2380 = vperm.xlu0 %2379, %v2276
        %v2381 = vpop.permute.xlu0 %2380
        %2384 = vset.pattern.permute.xlu0 1
        %2385 = vperm.xlu0 %2384, %v2279
        %v2386 = vpop.permute.xlu0 %2385
        %2389 = vset.pattern.permute.xlu0 1
        %2390 = vperm.xlu0 %2389, %v2284
        %v2391 = vpop.permute.xlu0 %2390
        %2394 = vset.pattern.permute.xlu0 1
        %2395 = vperm.xlu0 %2394, %v2287
        %v2396 = vpop.permute.xlu0 %2395
        %2399 = vset.pattern.permute.xlu0 1
        %2400 = vperm.xlu0 %2399, %v2292
        %v2401 = vpop.permute.xlu0 %2400
        %2404 = vset.pattern.permute.xlu0 1
        %2405 = vperm.xlu0 %2404, %v2295
        %v2406 = vpop.permute.xlu0 %2405
        %2409 = vset.pattern.permute.xlu0 1
        %2410 = vperm.xlu0 %2409, %v2300
        %v2411 = vpop.permute.xlu0 %2410
        %2414 = vset.pattern.permute.xlu0 1
        %2415 = vperm.xlu0 %2414, %v2303
        %v2416 = vpop.permute.xlu0 %2415
        %v2418 = vlaneseq
        %v2419 = vshrl.u32 %v2418, 7
        %v2420 = vsub.s32 0, %v2419
        %v2421 = vrot.slane %v2322, %v2420
        %v2422 = vadd.f32 %v2341, %v2421
        %v2423 = vadd.f32 %v2346, %v2421
        %v2424 = vadd.f32 %v2351, %v2421
        %v2425 = vadd.f32 %v2356, %v2421
        %v2426 = vadd.f32 %v2361, %v2421
        %v2427 = vadd.f32 %v2366, %v2421
        %v2428 = vadd.f32 %v2371, %v2421
        %v2429 = vadd.f32 %v2376, %v2421
        %v2430 = vadd.f32 %v2381, %v2421
        %v2431 = vadd.f32 %v2386, %v2421
        %v2432 = vadd.f32 %v2391, %v2421
        %v2433 = vadd.f32 %v2396, %v2421
        %v2434 = vadd.f32 %v2401, %v2421
        %v2435 = vadd.f32 %v2406, %v2421
        %v2436 = vadd.f32 %v2411, %v2421
        %v2437 = vadd.f32 %v2416, %v2421
        %v2438 = vmul.f32 %v2422, 0.2
        %v2439 = vmul.f32 %v2423, 0.2
        %v2440 = vmul.f32 %v2424, 0.2
        %v2441 = vmul.f32 %v2425, 0.2
        %v2442 = vmul.f32 %v2426, 0.2
        %v2443 = vmul.f32 %v2427, 0.2
        %v2444 = vmul.f32 %v2428, 0.2
        %v2445 = vmul.f32 %v2429, 0.2
        %v2446 = vmul.f32 %v2430, 0.2
        %v2447 = vmul.f32 %v2431, 0.2
        %v2448 = vmul.f32 %v2432, 0.2
        %v2449 = vmul.f32 %v2433, 0.2
        %v2450 = vmul.f32 %v2434, 0.2
        %v2451 = vmul.f32 %v2435, 0.2
        %v2452 = vmul.f32 %v2436, 0.2
        %v2453 = vmul.f32 %v2437, 0.2
        %v2454 = vmax.f32 %v2422, %v2438
        %v2455 = vmax.f32 %v2423, %v2439
        %v2456 = vmax.f32 %v2424, %v2440
        %v2457 = vmax.f32 %v2425, %v2441
        %v2458 = vmax.f32 %v2426, %v2442
        %v2459 = vmax.f32 %v2427, %v2443
        %v2460 = vmax.f32 %v2428, %v2444
        %v2461 = vmax.f32 %v2429, %v2445
        %v2462 = vmax.f32 %v2430, %v2446
        %v2463 = vmax.f32 %v2431, %v2447
        %v2464 = vmax.f32 %v2432, %v2448
        %v2465 = vmax.f32 %v2433, %v2449
        %v2466 = vmax.f32 %v2434, %v2450
        %v2467 = vmax.f32 %v2435, %v2451
        %v2468 = vmax.f32 %v2436, %v2452
        %v2469 = vmax.f32 %v2437, %v2453
        %v2470 = vadd.f32 %v2454, %v588
        %v2471 = vadd.f32 %v2455, %v589
        %v2472 = vadd.f32 %v2456, %v590
        %v2473 = vadd.f32 %v2457, %v591
        %v2474 = vadd.f32 %v2458, %v592
        %v2475 = vadd.f32 %v2459, %v593
        %v2476 = vadd.f32 %v2460, %v594
        %v2477 = vadd.f32 %v2461, %v595
        %v2478 = vadd.f32 %v2462, %v596
        %v2479 = vadd.f32 %v2463, %v597
        %v2480 = vadd.f32 %v2464, %v598
        %v2481 = vadd.f32 %v2465, %v599
        %v2482 = vadd.f32 %v2466, %v600
        %v2483 = vadd.f32 %v2467, %v601
        %v2484 = vadd.f32 %v2468, %v602
        %v2485 = vadd.f32 %v2469, %v603
        %2486 = vmax.xlane.f32.xlu0 %v2470
        %v2487 = vpop.xlane.xlu0 %2486
        %2488 = vmax.xlane.f32.xlu0 %v2471
        %v2489 = vpop.xlane.xlu0 %2488
        %2490 = vmax.xlane.f32.xlu0 %v2472
        %v2491 = vpop.xlane.xlu0 %2490
        %2492 = vmax.xlane.f32.xlu0 %v2473
        %v2493 = vpop.xlane.xlu0 %2492
        %2494 = vmax.xlane.f32.xlu0 %v2474
        %v2495 = vpop.xlane.xlu0 %2494
        %2496 = vmax.xlane.f32.xlu0 %v2475
        %v2497 = vpop.xlane.xlu0 %2496
        %2498 = vmax.xlane.f32.xlu0 %v2476
        %v2499 = vpop.xlane.xlu0 %2498
        %2500 = vmax.xlane.f32.xlu0 %v2477
        %v2501 = vpop.xlane.xlu0 %2500
        %2502 = vmax.xlane.f32.xlu0 %v2478
        %v2503 = vpop.xlane.xlu0 %2502
        %2504 = vmax.xlane.f32.xlu0 %v2479
        %v2505 = vpop.xlane.xlu0 %2504
        %2506 = vmax.xlane.f32.xlu0 %v2480
        %v2507 = vpop.xlane.xlu0 %2506
        %2508 = vmax.xlane.f32.xlu0 %v2481
        %v2509 = vpop.xlane.xlu0 %2508
        %2510 = vmax.xlane.f32.xlu0 %v2482
        %v2511 = vpop.xlane.xlu0 %2510
        %2512 = vmax.xlane.f32.xlu0 %v2483
        %v2513 = vpop.xlane.xlu0 %2512
        %2514 = vmax.xlane.f32.xlu0 %v2484
        %v2515 = vpop.xlane.xlu0 %2514
        %2516 = vmax.xlane.f32.xlu0 %v2485
        %v2517 = vpop.xlane.xlu0 %2516
        %v2518 = vsub.f32 %v2470, %v2487
        %v2519 = vsub.f32 %v2471, %v2489
        %v2520 = vsub.f32 %v2472, %v2491
        %v2521 = vsub.f32 %v2473, %v2493
        %v2522 = vsub.f32 %v2474, %v2495
        %v2523 = vsub.f32 %v2475, %v2497
        %v2524 = vsub.f32 %v2476, %v2499
        %v2525 = vsub.f32 %v2477, %v2501
        %v2526 = vsub.f32 %v2478, %v2503
        %v2527 = vsub.f32 %v2479, %v2505
        %v2528 = vsub.f32 %v2480, %v2507
        %v2529 = vsub.f32 %v2481, %v2509
        %v2530 = vsub.f32 %v2482, %v2511
        %v2531 = vsub.f32 %v2483, %v2513
        %v2532 = vsub.f32 %v2484, %v2515
        %v2533 = vsub.f32 %v2485, %v2517
        %v2534 = vmul.f32 %v2518, 1.442695
        %v2535 = vpow.pop %v2534
        %v2536 = vmul.f32 %v2519, 1.442695
        %v2537 = vpow.pop %v2536
        %v2538 = vmul.f32 %v2520, 1.442695
        %v2539 = vpow.pop %v2538
        %v2540 = vmul.f32 %v2521, 1.442695
        %v2541 = vpow.pop %v2540
        %v2542 = vmul.f32 %v2522, 1.442695
        %v2543 = vpow.pop %v2542
        %v2544 = vmul.f32 %v2523, 1.442695
        %v2545 = vpow.pop %v2544
        %v2546 = vmul.f32 %v2524, 1.442695
        %v2547 = vpow.pop %v2546
        %v2548 = vmul.f32 %v2525, 1.442695
        %v2549 = vpow.pop %v2548
        %v2550 = vmul.f32 %v2526, 1.442695
        %v2551 = vpow.pop %v2550
        %v2552 = vmul.f32 %v2527, 1.442695
        %v2553 = vpow.pop %v2552
        %v2554 = vmul.f32 %v2528, 1.442695
        %v2555 = vpow.pop %v2554
        %v2556 = vmul.f32 %v2529, 1.442695
        %v2557 = vpow.pop %v2556
        %v2558 = vmul.f32 %v2530, 1.442695
        %v2559 = vpow.pop %v2558
        %v2560 = vmul.f32 %v2531, 1.442695
        %v2561 = vpow.pop %v2560
        %v2562 = vmul.f32 %v2532, 1.442695
        %v2563 = vpow.pop %v2562
        %v2564 = vmul.f32 %v2533, 1.442695
        %v2565 = vpow.pop %v2564
        %2566 = vadd.xlane.f32.xlu0 %v2535
        %v2567 = vpop.xlane.xlu0 %2566
        %2568 = vadd.xlane.f32.xlu0 %v2537
        %v2569 = vpop.xlane.xlu0 %2568
        %2570 = vadd.xlane.f32.xlu0 %v2539
        %v2571 = vpop.xlane.xlu0 %2570
        %2572 = vadd.xlane.f32.xlu0 %v2541
        %v2573 = vpop.xlane.xlu0 %2572
        %2574 = vadd.xlane.f32.xlu0 %v2543
        %v2575 = vpop.xlane.xlu0 %2574
        %2576 = vadd.xlane.f32.xlu0 %v2545
        %v2577 = vpop.xlane.xlu0 %2576
        %2578 = vadd.xlane.f32.xlu0 %v2547
        %v2579 = vpop.xlane.xlu0 %2578
        %2580 = vadd.xlane.f32.xlu0 %v2549
        %v2581 = vpop.xlane.xlu0 %2580
        %2582 = vadd.xlane.f32.xlu0 %v2551
        %v2583 = vpop.xlane.xlu0 %2582
        %2584 = vadd.xlane.f32.xlu0 %v2553
        %v2585 = vpop.xlane.xlu0 %2584
        %2586 = vadd.xlane.f32.xlu0 %v2555
        %v2587 = vpop.xlane.xlu0 %2586
        %2588 = vadd.xlane.f32.xlu0 %v2557
        %v2589 = vpop.xlane.xlu0 %2588
        %2590 = vadd.xlane.f32.xlu0 %v2559
        %v2591 = vpop.xlane.xlu0 %2590
        %2592 = vadd.xlane.f32.xlu0 %v2561
        %v2593 = vpop.xlane.xlu0 %2592
        %2594 = vadd.xlane.f32.xlu0 %v2563
        %v2595 = vpop.xlane.xlu0 %2594
        %2596 = vadd.xlane.f32.xlu0 %v2565
        %v2597 = vpop.xlane.xlu0 %2596
        %v2598 = vmax.f32 %v2567, 1e-20
        %v2599 = vmax.f32 %v2569, 1e-20
        %v2600 = vmax.f32 %v2571, 1e-20
        %v2601 = vmax.f32 %v2573, 1e-20
        %v2602 = vmax.f32 %v2575, 1e-20
        %v2603 = vmax.f32 %v2577, 1e-20
        %v2604 = vmax.f32 %v2579, 1e-20
        %v2605 = vmax.f32 %v2581, 1e-20
        %v2606 = vmax.f32 %v2583, 1e-20
        %v2607 = vmax.f32 %v2585, 1e-20
        %v2608 = vmax.f32 %v2587, 1e-20
        %v2609 = vmax.f32 %v2589, 1e-20
        %v2610 = vmax.f32 %v2591, 1e-20
        %v2611 = vmax.f32 %v2593, 1e-20
        %v2612 = vmax.f32 %v2595, 1e-20
        %v2613 = vmax.f32 %v2597, 1e-20
        %v2614 = vpack.c.bf16 %v2537, %v2535
        %v2615 = vpack.c.bf16 %v2541, %v2539
        %v2616 = vpack.c.bf16 %v2545, %v2543
        %v2617 = vpack.c.bf16 %v2549, %v2547
        %v2618 = vpack.c.bf16 %v2553, %v2551
        %v2619 = vpack.c.bf16 %v2557, %v2555
        %v2620 = vpack.c.bf16 %v2561, %v2559
        %v2621 = vpack.c.bf16 %v2565, %v2563
        %2622 = vmatprep.subr.bf16.mxu0 0
        %2623 = vmatpush1.bf16.msra.mxu0 %v2144
        %2624 = vmatprep.subr.bf16.mxu0 0
        %2625 = vmatpush1.bf16.msra.mxu0 %v2145
        %2626 = vmatprep.subr.bf16.mxu0 0
        %2627 = vmatpush1.bf16.msra.mxu0 %v2146
        %2628 = vmatprep.subr.bf16.mxu0 0
        %2629 = vmatpush1.bf16.msra.mxu0 %v2147
        %2630 = vmatprep.subr.bf16.mxu0 0
        %2631 = vmatpush1.bf16.msra.mxu0 %v2148
        %2632 = vmatprep.subr.bf16.mxu0 0
        %2633 = vmatpush1.bf16.msra.mxu0 %v2149
        %2634 = vmatprep.subr.bf16.mxu0 0
        %2635 = vmatpush1.bf16.msra.mxu0 %v2150
        %2636 = vmatprep.subr.bf16.mxu0 0
        %2637 = vmatpush1.bf16.msra.mxu0 %v2151
        %2638 = vmatprep.subr.bf16.mxu0 0
        %2639 = vmatpush1.bf16.msra.mxu0 0
        %2640 = vmatprep.subr.bf16.mxu0 0
        %2641 = vmatpush1.bf16.msra.mxu0 0
        %2642 = vmatprep.subr.bf16.mxu0 0
        %2643 = vmatpush1.bf16.msra.mxu0 0
        %2644 = vmatprep.subr.bf16.mxu0 0
        %2645 = vmatpush1.bf16.msra.mxu0 0
        %2646 = vmatprep.subr.bf16.mxu0 0
        %2647 = vmatpush1.bf16.msra.mxu0 0
        %2648 = vmatprep.subr.bf16.mxu0 0
        %2649 = vmatpush1.bf16.msra.mxu0 0
        %2650 = vmatprep.subr.bf16.mxu0 0
        %2651 = vmatpush1.bf16.msra.mxu0 0
        %2652 = vmatprep.subr.bf16.mxu0 0
        %2653 = vmatpush1.bf16.msra.mxu0 0
        %2654 = vmatprep.mubr.bf16.mxu0 0
        %2655 = vmatmul.mubr.bf16.gmra.mrb[0].mxu0 %v2614
        %v2656 = vpop.f32.mrb[0].mxu0
        %v2657 = vadd.f32 0.0, %v2656
        %v2658 = vpop.f32.mrb[0].mxu0
        %v2659 = vpop.f32.mrb[0].mxu0
        %v2660 = vadd.f32 0.0, %v2659
        %v2661 = vpop.f32.mrb[0].mxu0
        %2662 = vmatprep.mubr.bf16.mxu0 0
        %2663 = vmatmul.mubr.bf16.gmra.mrb[0].mxu0 %v2615
        %v2664 = vpop.f32.mrb[0].mxu0
        %v2665 = vadd.f32 0.0, %v2664
        %v2666 = vpop.f32.mrb[0].mxu0
        %v2667 = vpop.f32.mrb[0].mxu0
        %v2668 = vadd.f32 0.0, %v2667
        %v2669 = vpop.f32.mrb[0].mxu0
        %2670 = vmatprep.mubr.bf16.mxu0 0
        %2671 = vmatmul.mubr.bf16.gmra.mrb[0].mxu0 %v2616
        %v2672 = vpop.f32.mrb[0].mxu0
        %v2673 = vadd.f32 0.0, %v2672
        %v2674 = vpop.f32.mrb[0].mxu0
        %v2675 = vpop.f32.mrb[0].mxu0
        %v2676 = vadd.f32 0.0, %v2675
        %v2677 = vpop.f32.mrb[0].mxu0
        %2678 = vmatprep.mubr.bf16.mxu0 0
        %2679 = vmatmul.mubr.bf16.gmra.mrb[0].mxu0 %v2617
        %v2680 = vpop.f32.mrb[0].mxu0
        %v2681 = vadd.f32 0.0, %v2680
        %v2682 = vpop.f32.mrb[0].mxu0
        %v2683 = vpop.f32.mrb[0].mxu0
        %v2684 = vadd.f32 0.0, %v2683
        %v2685 = vpop.f32.mrb[0].mxu0
        %2686 = vmatprep.mubr.bf16.mxu0 0
        %2687 = vmatmul.mubr.bf16.gmra.mrb[0].mxu0 %v2618
        %v2688 = vpop.f32.mrb[0].mxu0
        %v2689 = vadd.f32 0.0, %v2688
        %v2690 = vpop.f32.mrb[0].mxu0
        %v2691 = vpop.f32.mrb[0].mxu0
        %v2692 = vadd.f32 0.0, %v2691
        %v2693 = vpop.f32.mrb[0].mxu0
        %2694 = vmatprep.mubr.bf16.mxu0 0
        %2695 = vmatmul.mubr.bf16.gmra.mrb[0].mxu0 %v2619
        %v2696 = vpop.f32.mrb[0].mxu0
        %v2697 = vadd.f32 0.0, %v2696
        %v2698 = vpop.f32.mrb[0].mxu0
        %v2699 = vpop.f32.mrb[0].mxu0
        %v2700 = vadd.f32 0.0, %v2699
        %v2701 = vpop.f32.mrb[0].mxu0
        %2702 = vmatprep.mubr.bf16.mxu0 0
        %2703 = vmatmul.mubr.bf16.gmra.mrb[0].mxu0 %v2620
        %v2704 = vpop.f32.mrb[0].mxu0
        %v2705 = vadd.f32 0.0, %v2704
        %v2706 = vpop.f32.mrb[0].mxu0
        %v2707 = vpop.f32.mrb[0].mxu0
        %v2708 = vadd.f32 0.0, %v2707
        %v2709 = vpop.f32.mrb[0].mxu0
        %2710 = vmatprep.mubr.bf16.mxu0 0
        %2711 = vmatmul.mubr.bf16.gmra.mrb[0].mxu0 %v2621
        %v2712 = vpop.f32.mrb[0].mxu0
        %v2713 = vadd.f32 0.0, %v2712
        %v2714 = vpop.f32.mrb[0].mxu0
        %v2715 = vpop.f32.mrb[0].mxu0
        %v2716 = vadd.f32 0.0, %v2715
        %v2717 = vpop.f32.mrb[0].mxu0
        %2718 = vdwg.mxu0
        %v2719 = vrcp.pop %v2598
        %v2720 = vrcp.pop %v2599
        %v2721 = vrcp.pop %v2600
        %v2722 = vrcp.pop %v2601
        %v2723 = vrcp.pop %v2602
        %v2724 = vrcp.pop %v2603
        %v2725 = vrcp.pop %v2604
        %v2726 = vrcp.pop %v2605
        %v2727 = vrcp.pop %v2606
        %v2728 = vrcp.pop %v2607
        %v2729 = vrcp.pop %v2608
        %v2730 = vrcp.pop %v2609
        %v2731 = vrcp.pop %v2610
        %v2732 = vrcp.pop %v2611
        %v2733 = vrcp.pop %v2612
        %v2734 = vrcp.pop %v2613
        %v2735 = vmul.f32 %v2657, %v2719
        %v2736 = vmul.f32 %v2660, %v2720
        %v2737 = vmul.f32 %v2665, %v2721
        %v2738 = vmul.f32 %v2668, %v2722
        %v2739 = vmul.f32 %v2673, %v2723
        %v2740 = vmul.f32 %v2676, %v2724
        %v2741 = vmul.f32 %v2681, %v2725
        %v2742 = vmul.f32 %v2684, %v2726
        %v2743 = vmul.f32 %v2689, %v2727
        %v2744 = vmul.f32 %v2692, %v2728
        %v2745 = vmul.f32 %v2697, %v2729
        %v2746 = vmul.f32 %v2700, %v2730
        %v2747 = vmul.f32 %v2705, %v2731
        %v2748 = vmul.f32 %v2708, %v2732
        %v2749 = vmul.f32 %v2713, %v2733
        %v2750 = vmul.f32 %v2716, %v2734
        %v2751 = vld [vmem:[%s7] sm:$0x1]
        %v2753 = vlaneseq
        %v2754 = vshrl.u32 %v2753, 7
        %v2755 = vsub.s32 0, %v2754
        %v2756 = vrot.slane %v2751, %v2755
        %v2758 = vadd.f32 %v2735, %v2756
        %v2759 = vadd.f32 %v2736, %v2756
        %v2760 = vadd.f32 %v2737, %v2756
        %v2761 = vadd.f32 %v2738, %v2756
        %v2762 = vadd.f32 %v2739, %v2756
        %v2763 = vadd.f32 %v2740, %v2756
        %v2764 = vadd.f32 %v2741, %v2756
        %v2765 = vadd.f32 %v2742, %v2756
        %v2766 = vadd.f32 %v2743, %v2756
        %v2767 = vadd.f32 %v2744, %v2756
        %v2768 = vadd.f32 %v2745, %v2756
        %v2769 = vadd.f32 %v2746, %v2756
        %v2770 = vadd.f32 %v2747, %v2756
        %v2771 = vadd.f32 %v2748, %v2756
        %v2772 = vadd.f32 %v2749, %v2756
        %v2773 = vadd.f32 %v2750, %v2756
        %vm2774 = vcmp.gt.f32.partialorder %v2758, 0.0
        %vm2775 = vcmp.gt.f32.partialorder %v2759, 0.0
        %vm2776 = vcmp.gt.f32.partialorder %v2760, 0.0
        %vm2777 = vcmp.gt.f32.partialorder %v2761, 0.0
        %vm2778 = vcmp.gt.f32.partialorder %v2762, 0.0
        %vm2779 = vcmp.gt.f32.partialorder %v2763, 0.0
        %vm2780 = vcmp.gt.f32.partialorder %v2764, 0.0
        %vm2781 = vcmp.gt.f32.partialorder %v2765, 0.0
        %vm2782 = vcmp.gt.f32.partialorder %v2766, 0.0
        %vm2783 = vcmp.gt.f32.partialorder %v2767, 0.0
        %vm2784 = vcmp.gt.f32.partialorder %v2768, 0.0
        %vm2785 = vcmp.gt.f32.partialorder %v2769, 0.0
        %vm2786 = vcmp.gt.f32.partialorder %v2770, 0.0
        %vm2787 = vcmp.gt.f32.partialorder %v2771, 0.0
        %vm2788 = vcmp.gt.f32.partialorder %v2772, 0.0
        %vm2789 = vcmp.gt.f32.partialorder %v2773, 0.0
        %v2790 = vmin.f32 %v2758, 0.0
        %v2791 = vmin.f32 %v2759, 0.0
        %v2792 = vmin.f32 %v2760, 0.0
        %v2793 = vmin.f32 %v2761, 0.0
        %v2794 = vmin.f32 %v2762, 0.0
        %v2795 = vmin.f32 %v2763, 0.0
        %v2796 = vmin.f32 %v2764, 0.0
        %v2797 = vmin.f32 %v2765, 0.0
        %v2798 = vmin.f32 %v2766, 0.0
        %v2799 = vmin.f32 %v2767, 0.0
        %v2800 = vmin.f32 %v2768, 0.0
        %v2801 = vmin.f32 %v2769, 0.0
        %v2802 = vmin.f32 %v2770, 0.0
        %v2803 = vmin.f32 %v2771, 0.0
        %v2804 = vmin.f32 %v2772, 0.0
        %v2805 = vmin.f32 %v2773, 0.0
        %v2806 = vmul.f32 %v2790, 1.442695
        %v2807 = vpow.pop %v2806
        %v2808 = vmul.f32 %v2791, 1.442695
        %v2809 = vpow.pop %v2808
        %v2810 = vmul.f32 %v2792, 1.442695
        %v2811 = vpow.pop %v2810
        %v2812 = vmul.f32 %v2793, 1.442695
        %v2813 = vpow.pop %v2812
        %v2814 = vmul.f32 %v2794, 1.442695
        %v2815 = vpow.pop %v2814
        %v2816 = vmul.f32 %v2795, 1.442695
        %v2817 = vpow.pop %v2816
        %v2818 = vmul.f32 %v2796, 1.442695
        %v2819 = vpow.pop %v2818
        %v2820 = vmul.f32 %v2797, 1.442695
        %v2821 = vpow.pop %v2820
        %v2822 = vmul.f32 %v2798, 1.442695
        %v2823 = vpow.pop %v2822
        %v2824 = vmul.f32 %v2799, 1.442695
        %v2825 = vpow.pop %v2824
        %v2826 = vmul.f32 %v2800, 1.442695
        %v2827 = vpow.pop %v2826
        %v2828 = vmul.f32 %v2801, 1.442695
        %v2829 = vpow.pop %v2828
        %v2830 = vmul.f32 %v2802, 1.442695
        %v2831 = vpow.pop %v2830
        %v2832 = vmul.f32 %v2803, 1.442695
        %v2833 = vpow.pop %v2832
        %v2834 = vmul.f32 %v2804, 1.442695
        %v2835 = vpow.pop %v2834
        %v2836 = vmul.f32 %v2805, 1.442695
        %v2837 = vpow.pop %v2836
        %v2838 = vsub.f32 %v2807, 1.0
        %v2839 = vsub.f32 %v2809, 1.0
        %v2840 = vsub.f32 %v2811, 1.0
        %v2841 = vsub.f32 %v2813, 1.0
        %v2842 = vsub.f32 %v2815, 1.0
        %v2843 = vsub.f32 %v2817, 1.0
        %v2844 = vsub.f32 %v2819, 1.0
        %v2845 = vsub.f32 %v2821, 1.0
        %v2846 = vsub.f32 %v2823, 1.0
        %v2847 = vsub.f32 %v2825, 1.0
        %v2848 = vsub.f32 %v2827, 1.0
        %v2849 = vsub.f32 %v2829, 1.0
        %v2850 = vsub.f32 %v2831, 1.0
        %v2851 = vsub.f32 %v2833, 1.0
        %v2852 = vsub.f32 %v2835, 1.0
        %v2853 = vsub.f32 %v2837, 1.0
        %v2854 = vsel %vm2774, %v2758, %v2838
        %v2855 = vsel %vm2775, %v2759, %v2839
        %v2856 = vsel %vm2776, %v2760, %v2840
        %v2857 = vsel %vm2777, %v2761, %v2841
        %v2858 = vsel %vm2778, %v2762, %v2842
        %v2859 = vsel %vm2779, %v2763, %v2843
        %v2860 = vsel %vm2780, %v2764, %v2844
        %v2861 = vsel %vm2781, %v2765, %v2845
        %v2862 = vsel %vm2782, %v2766, %v2846
        %v2863 = vsel %vm2783, %v2767, %v2847
        %v2864 = vsel %vm2784, %v2768, %v2848
        %v2865 = vsel %vm2785, %v2769, %v2849
        %v2866 = vsel %vm2786, %v2770, %v2850
        %v2867 = vsel %vm2787, %v2771, %v2851
        %v2868 = vsel %vm2788, %v2772, %v2852
        %v2869 = vsel %vm2789, %v2773, %v2853
        %v2870 = vld [vmem:[%s473] sm:$0xf]
        %v2871 = vld [vmem:[%s473 + $0x4] sm:$0xf]
        %v2872 = vpack.c.bf16 %v2855, %v2854
        %v2873 = vpack.c.bf16 %v2857, %v2856
        %v2874 = vpack.c.bf16 %v2859, %v2858
        %v2875 = vpack.c.bf16 %v2861, %v2860
        %v2876 = vpack.c.bf16 %v2863, %v2862
        %v2877 = vpack.c.bf16 %v2865, %v2864
        %v2878 = vpack.c.bf16 %v2867, %v2866
        %v2879 = vpack.c.bf16 %v2869, %v2868
        %v2882 = vunpack.c.l.b16 %v2870
        %v2883 = vunpack.c.l.b16 %v2871
        %v2884 = vpack.c.b16 %v2883, %v2882
        %2886 = vmatprep.subr.bf16.mxu0 0
        %2887 = vmatpush1.bf16.msra.mxu0 %v2872
        %2888 = vmatprep.subr.bf16.mxu0 0
        %2889 = vmatpush1.bf16.msra.mxu0 %v2873
        %2890 = vmatprep.subr.bf16.mxu0 0
        %2891 = vmatpush1.bf16.msra.mxu0 %v2874
        %2892 = vmatprep.subr.bf16.mxu0 0
        %2893 = vmatpush1.bf16.msra.mxu0 %v2875
        %2894 = vmatprep.subr.bf16.mxu0 0
        %2895 = vmatpush1.bf16.msra.mxu0 %v2876
        %2896 = vmatprep.subr.bf16.mxu0 0
        %2897 = vmatpush1.bf16.msra.mxu0 %v2877
        %2898 = vmatprep.subr.bf16.mxu0 0
        %2899 = vmatpush1.bf16.msra.mxu0 %v2878
        %2900 = vmatprep.subr.bf16.mxu0 0
        %2901 = vmatpush1.bf16.msra.mxu0 %v2879
        %2902 = vmatprep.subr.bf16.mxu0 0
        %2903 = vmatpush1.bf16.msra.mxu0 0
        %2904 = vmatprep.subr.bf16.mxu0 0
        %2905 = vmatpush1.bf16.msra.mxu0 0
        %2906 = vmatprep.subr.bf16.mxu0 0
        %2907 = vmatpush1.bf16.msra.mxu0 0
        %2908 = vmatprep.subr.bf16.mxu0 0
        %2909 = vmatpush1.bf16.msra.mxu0 0
        %2910 = vmatprep.subr.bf16.mxu0 0
        %2911 = vmatpush1.bf16.msra.mxu0 0
        %2912 = vmatprep.subr.bf16.mxu0 0
        %2913 = vmatpush1.bf16.msra.mxu0 0
        %2914 = vmatprep.subr.bf16.mxu0 0
        %2915 = vmatpush1.bf16.msra.mxu0 0
        %2916 = vmatprep.subr.bf16.mxu0 0
        %2917 = vmatpush1.bf16.msra.mxu0 0
        %2918 = vmatprep.mubr.bf16.mxu0 0
        %2919 = vmatmul.mubr.bf16.gmra.mrb[0].mxu0 %v2884
        %v2920 = vpop.f32.mrb[0].mxu0
        %v2921 = vadd.f32 0.0, %v2920
        %v2922 = vpop.f32.mrb[0].mxu0
        %v2923 = vpop.f32.mrb[0].mxu0
        %v2924 = vadd.f32 0.0, %v2923
        %v2925 = vpop.f32.mrb[0].mxu0
        %2926 = vdwg.mxu0
        %v2927 = vpack.c.bf16 %v2924, %v2921
        %v2928 = vld [vmem:[%s9] sm:$0xf]
        %v2929 = vld [vmem:[%s9 + $0x4] sm:$0xf]
        %v2930 = vld [vmem:[%s9 + $0x8] sm:$0xf]
        %v2931 = vld [vmem:[%s9 + $0xc] sm:$0xf]
        %v2932 = vld [vmem:[%s9 + $0x10] sm:$0xf]
        %v2933 = vld [vmem:[%s9 + $0x14] sm:$0xf]
        %v2934 = vld [vmem:[%s9 + $0x18] sm:$0xf]
        %v2935 = vld [vmem:[%s9 + $0x1c] sm:$0xf]
        %v2936 = vld [vmem:[%s10] sm:$0x1]
        %v2938 = vlaneseq
        %v2939 = vshrl.u32 %v2938, 7
        %v2940 = vsub.s32 0, %v2939
        %v2941 = vrot.slane %v2936, %v2940
        %v2951 = vunpack.c.l.b16 %v2928
        %v2952 = vunpack.c.l.b16 %v2929
        %v2953 = vunpack.c.l.b16 %v2930
        %v2954 = vunpack.c.l.b16 %v2931
        %v2955 = vunpack.c.l.b16 %v2932
        %v2956 = vunpack.c.l.b16 %v2933
        %v2957 = vunpack.c.l.b16 %v2934
        %v2958 = vunpack.c.l.b16 %v2935
        %v2959 = vpack.c.b16 %v2952, %v2951
        %v2960 = vpack.c.b16 %v2954, %v2953
        %v2961 = vpack.c.b16 %v2956, %v2955
        %v2962 = vpack.c.b16 %v2958, %v2957
        %v2968 = vsel %vm2184, %v2927, 0
        %2970 = vmatprep.subr.bf16.mxu0 0
        %2971 = vmatpush1.bf16.msra.mxu0 %v2959
        %2972 = vmatprep.subr.bf16.mxu0 0
        %2973 = vmatpush1.bf16.msra.mxu0 %v2960
        %2974 = vmatprep.subr.bf16.mxu0 0
        %2975 = vmatpush1.bf16.msra.mxu0 %v2961
        %2976 = vmatprep.subr.bf16.mxu0 0
        %2977 = vmatpush1.bf16.msra.mxu0 %v2962
        %2978 = vmatprep.subr.bf16.mxu0 0
        %2979 = vmatpush1.bf16.msra.mxu0 0
        %2980 = vmatprep.subr.bf16.mxu0 0
        %2981 = vmatpush1.bf16.msra.mxu0 0
        %2982 = vmatprep.subr.bf16.mxu0 0
        %2983 = vmatpush1.bf16.msra.mxu0 0
        %2984 = vmatprep.subr.bf16.mxu0 0
        %2985 = vmatpush1.bf16.msra.mxu0 0
        %2986 = vmatprep.subr.bf16.mxu0 0
        %2987 = vmatpush1.bf16.msra.mxu0 0
        %2988 = vmatprep.subr.bf16.mxu0 0
        %2989 = vmatpush1.bf16.msra.mxu0 0
        %2990 = vmatprep.subr.bf16.mxu0 0
        %2991 = vmatpush1.bf16.msra.mxu0 0
        %2992 = vmatprep.subr.bf16.mxu0 0
        %2993 = vmatpush1.bf16.msra.mxu0 0
        %2994 = vmatprep.subr.bf16.mxu0 0
        %2995 = vmatpush1.bf16.msra.mxu0 0
        %2996 = vmatprep.subr.bf16.mxu0 0
        %2997 = vmatpush1.bf16.msra.mxu0 0
        %2998 = vmatprep.subr.bf16.mxu0 0
        %2999 = vmatpush1.bf16.msra.mxu0 0
        %3000 = vmatprep.subr.bf16.mxu0 0
        %3001 = vmatpush1.bf16.msra.mxu0 0
        %3002 = vmatprep.mubr.bf16.mxu0 0
        %3003 = vmatmul.mubr.bf16.gmra.mrb[0].mxu0 %v2968
        %v3004 = vpop.f32.mrb[0].mxu0
        %v3005 = vadd.f32 %v2941, %v3004
        %v3006 = vpop.f32.mrb[0].mxu0
        %v3007 = vpop.f32.mrb[0].mxu0
        %v3008 = vadd.f32 %v2941, %v3007
        %v3009 = vpop.f32.mrb[0].mxu0
        %3010 = vdwg.mxu0
        %vm3011 = vcmask 15360
        %3012 = vst.msk [vmem:[%s531] sm:$0xff] %vm3011, %v3005
        %3013 = vst.msk [vmem:[%s531 + $0x8] sm:$0xff] %vm3011, %v3008
        %s3014 = smul.u32 2, %s22
        %p3015 = scmp.lt.s32.totalorder %s3014, 3
        %s3016 = scalar_select %p3015, %s3014, 3
        %s3017 = smul.addr %s3016, 8
        %s3018 = scalar_lea.vmem %s11, %s3017
        // Predicated region
        $region144: #{tpu_custom_call.1} parent=134 // pred_check
          %p3019 = pneg %p290
        $region145: #{tpu_custom_call.1} parent=134 // pred_check_branch
          %3021 = sbr.rel (%p3019) target = $region147
        $region146: #{tpu_custom_call.1} parent=134 // pred_region
          %s3022 = smul.u32 2, %s22
        $region147: #{tpu_custom_call.1} parent=134 // pred_fallthru
          _
      $region135: #{tpu_custom_call.1} parent=5 // pred_fallthru
        _
      %p3023 = scmp.le.s32.totalorder 2, %s17
      // Predicated region
      $region148: #{tpu_custom_call.1} parent=5 // pred_check
        %p3024 = pneg %p3023
      $region149: #{tpu_custom_call.1} parent=5 // pred_check_branch
        %3026 = sbr.rel (%p3024) target = $region151
      $region150: #{tpu_custom_call.1} parent=5 // pred_region
        %s3027 = ssub.s32 %s17, 2
        // Predicated region
        $region152: #{tpu_custom_call.1} parent=150 // pred_check
          %p3028 = pneg %p296
        $region153: #{tpu_custom_call.1} parent=150 // pred_check_branch
          %3030 = sbr.rel (%p3028) target = $region155
        $region154: #{tpu_custom_call.1} parent=150 // pred_region
          %s3031 = smul.u32 2, %s23
          %p3032 = scmp.lt.s32.totalorder %s3031, 3
          %s3033 = scalar_select %p3032, %s3031, 3
          %s3034 = smul.addr %s3033, 8
          %s3035 = scalar_lea.vmem %s11, %s3034
        $region155: #{tpu_custom_call.1} parent=150 // pred_fallthru
          _
      $region151: #{tpu_custom_call.1} parent=5 // pred_fallthru
        _
    $region6: #{tpu_custom_call.1} parent=1 // loop_footer
      %s21 = sadd.s32 1, %s17
    $region7: #{tpu_custom_call.1} parent=1 // loop_footer_branch
      %16 = sbr.rel target = $region3
    $region8: #{tpu_custom_call.1} parent=1 // loop_exit
      _

</llo_original>
